<compile_context>
chip_gen: v7x
topology: tpu7x:2x2x1
jax: 0.10.0
libtpu: 0.0.40
codegen_flags: <defaults>
</compile_context>

<pallas_src>
import functools

import jax
import jax.numpy as jnp
from jax import lax
from jax.experimental import pallas as pl
from jax.experimental.pallas import tpu as pltpu

_LANE = 128


# ----------------------------------------------------------------------------
# Kernels
# ----------------------------------------------------------------------------
def _transform_kernel(x_ref, w_ref, dinv_ref, t_ref):
    """t = (x @ W) * dinv   (rows pre-scaled for the normalized aggregate)."""
    t = jnp.dot(x_ref[...], w_ref[...], preferred_element_type=jnp.float32)
    t_ref[...] = (t * dinv_ref[...]).astype(t_ref.dtype)


def _agg_fused_kernel(a_ref, t_ref, dinv_ref, b_ref, we_ref, be_ref,
                      out_ref, acc_ref, *, tile_k, epilogue):
    """K-tiled  acc += A_block @ t_slice  with a fused finalize epilogue.

    finalize: h = relu(dinv * acc + b)            (GCNConv + ReLU; eval-mode
                                                   dropout after it = identity)
      epilogue == "transform":  out = (h @ We) * dinv   (next layer's XW*dinv)
      epilogue == "linear":     out = h @ We + be       (final Linear)
    """
    kk = pl.program_id(1)

    @pl.when(kk == 0)
    def _():
        acc_ref[...] = jnp.zeros_like(acc_ref)

    ks = pl.multiple_of(kk * tile_k, tile_k)
    acc_ref[...] += jnp.dot(a_ref[...], t_ref[pl.ds(ks, tile_k), :],
                            preferred_element_type=jnp.float32)

    @pl.when(kk == pl.num_programs(1) - 1)
    def _():
        h = jnp.maximum(dinv_ref[...] * acc_ref[...] + b_ref[...], 0.0)
        e = jnp.dot(h.astype(we_ref.dtype), we_ref[...],
                    preferred_element_type=jnp.float32)
        if epilogue == "transform":
            out_ref[...] = (e * dinv_ref[...]).astype(out_ref.dtype)
        else:  # "linear"
            out_ref[...] = (e + be_ref[...]).astype(out_ref.dtype)


# ----------------------------------------------------------------------------
# pallas_call wrappers
# ----------------------------------------------------------------------------
def _transform(x, w, dinv, tile_m):
    n_pad, cp = x.shape
    hp = w.shape[1]
    return pl.pallas_call(
        _transform_kernel,
        out_shape=jax.ShapeDtypeStruct((n_pad, hp), jnp.bfloat16),
        grid_spec=pltpu.PrefetchScalarGridSpec(
            num_scalar_prefetch=0,
            grid=(n_pad // tile_m,),
            in_specs=[pl.BlockSpec((tile_m, cp), lambda i: (i, 0)),
                      pl.BlockSpec((cp, hp), lambda i: (0, 0)),
                      pl.BlockSpec((tile_m, 1), lambda i: (i, 0))],
            out_specs=pl.BlockSpec((tile_m, hp), lambda i: (i, 0))),
        compiler_params=pltpu.CompilerParams(
            dimension_semantics=("parallel",),
            vmem_limit_bytes=32 * 1024 * 1024),
    )(x, w, dinv)


def _aggregate_fused(a, t, dinv, b, we, be, *, tile_m, tile_k, epilogue,
                     out_dtype):
    n_pad = a.shape[0]
    hp = t.shape[1]
    ep = we.shape[1]

    kernel = functools.partial(_agg_fused_kernel, tile_k=tile_k,
                               epilogue=epilogue)

    # VMEM budget: double-buffered A blocks + resident t (counted 2x to be
    # conservative) + f32 accumulator + double-buffered out block + residents.
    vmem_bytes = (2 * tile_m * tile_k * 2
                  + 2 * n_pad * hp * 2
                  + tile_m * hp * 4
                  + 2 * tile_m * ep * 2
                  + 2 * (hp * ep * 2 + (hp + ep + tile_m) * 4))
    # Cap at 64 MiB so the same config also respects v7x's physical VMEM.
    vmem_limit = min(max(vmem_bytes + (8 << 20), 32 << 20), 64 << 20)

    return pl.pallas_call(
        kernel,
        out_shape=jax.ShapeDtypeStruct((n_pad, ep), out_dtype),
        grid_spec=pltpu.PrefetchScalarGridSpec(
            num_scalar_prefetch=0,
            grid=(n_pad // tile_m, n_pad // tile_k),
            in_specs=[pl.BlockSpec((tile_m, tile_k), lambda i, k: (i, k)),
                      pl.BlockSpec((n_pad, hp), lambda i, k: (0, 0)),   # t resident
                      pl.BlockSpec((tile_m, 1), lambda i, k: (i, 0)),
                      pl.BlockSpec((1, hp), lambda i, k: (0, 0)),
                      pl.BlockSpec((hp, ep), lambda i, k: (0, 0)),      # We resident
                      pl.BlockSpec((1, ep), lambda i, k: (0, 0))],
            out_specs=pl.BlockSpec((tile_m, ep), lambda i, k: (i, 0)),
            scratch_shapes=[pltpu.VMEM((tile_m, hp), jnp.float32)]),
        compiler_params=pltpu.CompilerParams(
            dimension_semantics=("parallel", "arbitrary"),
            vmem_limit_bytes=vmem_limit),
    )(a, t, dinv, b, we, be)


# ----------------------------------------------------------------------------
# Forward pass
# ----------------------------------------------------------------------------
@functools.partial(jax.jit, static_argnames=("tile_m", "tile_k"))
def elliptic_gnn_forward(x, edge_index, params, *, tile_m=512, tile_k=512):
    """x: (N, Cin) f32 node features; edge_index: (2, E) int32 (src, dst)."""
    n, cin = x.shape
    hid = params["w1"].shape[1]
    out_ch = params["w3"].shape[1]

    # ---- tiling / padding geometry (all static Python ints) ------------------
    unit = max(tile_m, tile_k, _LANE)
    n_pad = unit * pl.cdiv(n, unit)
    # Keep >= 2 row programs when possible so v7x's two TensorCores both work.
    while tile_m > _LANE and n_pad // tile_m < 2:
        tile_m //= 2
    tile_k = min(tile_k, n_pad)
    assert n_pad % tile_m == 0 and n_pad % tile_k == 0

    cp = _LANE * pl.cdiv(cin, _LANE)
    hp = _LANE * pl.cdiv(hid, _LANE)
    op = _LANE * pl.cdiv(out_ch, _LANE)

    # ---- graph preprocessing: build A directly at padded size ----------------
    src, dst = edge_index[0], edge_index[1]
    off_diag = (src != dst).astype(jnp.float32)
    idx = jnp.arange(n)
    # Duplicate off-diagonal edges are counted multiple times (matches PyG's
    # scatter-add message passing); self-loops collapse to a single weight-1
    # diagonal entry (add_remaining_self_loops convention used before).
    a = (jnp.zeros((n_pad, n_pad), jnp.float32)
         .at[dst, src].add(off_diag)
         .at[idx, idx].add(1.0))
    deg = jnp.sum(a, axis=1)                                  # f32 degree
    dinv = jnp.where(deg > 0.0, lax.rsqrt(deg), 0.0)          # D^{-1/2}, f32
    a_p = a.astype(jnp.bfloat16)                              # single cast pass
    dinv_p = dinv[:, None]                                    # (n_pad, 1) f32

    # ---- pad weights / features to lane-dense shapes --------------------------
    x_p = jnp.zeros((n_pad, cp), jnp.bfloat16).at[:n, :cin].set(
        x.astype(jnp.bfloat16))
    w1 = jnp.zeros((cp, hp), jnp.bfloat16).at[:cin, :hid].set(
        params["w1"].astype(jnp.bfloat16))
    w2 = jnp.zeros((hp, hp), jnp.bfloat16).at[:hid, :hid].set(
        params["w2"].astype(jnp.bfloat16))
    w3 = jnp.zeros((hp, op), jnp.bfloat16).at[:hid, :out_ch].set(
        params["w3"].astype(jnp.bfloat16))
    b1 = jnp.zeros((1, hp), jnp.float32).at[0, :hid].set(params["b1"])
    b2 = jnp.zeros((1, hp), jnp.float32).at[0, :hid].set(params["b2"])
    b3 = jnp.zeros((1, op), jnp.float32).at[0, :out_ch].set(params["b3"])
    zero_be = jnp.zeros((1, hp), jnp.float32)                 # unused in "transform"

    # ---- layer 1 transform: t1 = (X W1) * dinv --------------------------------
    t1 = _transform(x_p, w1, dinv_p, tile_m)
    # ---- layer 1 aggregate fused with layer-2 transform -----------------------
    #   h1 = relu(dinv * (A t1) + b1)    (dropout eval -> identity)
    #   t2 = (h1 W2) * dinv
    t2 = _aggregate_fused(a_p, t1, dinv_p, b1, w2, zero_be,
                          tile_m=tile_m, tile_k=tile_k,
                          epilogue="transform", out_dtype=jnp.bfloat16)
    # ---- layer 2 aggregate fused with the final Linear ------------------------
    #   h2 = relu(dinv * (A t2) + b2)    (dropout eval -> identity)
    #   out = h2 W3 + b3
    out = _aggregate_fused(a_p, t2, dinv_p, b2, w3, b3,
                           tile_m=tile_m, tile_k=tile_k,
                           epilogue="linear", out_dtype=jnp.bfloat16)
    return out[:n, :out_ch].astype(jnp.float32)


# ----------------------------------------------------------------------------
# Parameters & reference
# ----------------------------------------------------------------------------
def init_params(key, in_channels, hidden_channels, out_channels):
    """Weights stored pre-transposed as (in, out) so kernels do x @ W (== x @ W^T
    in torch)."""
    k1, k2, k3 = jax.random.split(key, 3)

    def glorot(k, fan_in, fan_out):
        s = jnp.sqrt(6.0 / (fan_in + fan_out))
        return jax.random.uniform(k, (fan_in, fan_out), jnp.float32, -s, s)

    return {
        "w1": glorot(k1, in_channels, hidden_channels),
        "b1": jnp.zeros((hidden_channels,), jnp.float32),
        "w2": glorot(k2, hidden_channels, hidden_channels),
        "b2": jnp.zeros((hidden_channels,), jnp.float32),
        "w3": glorot(k3, hidden_channels, out_channels),
        "b3": jnp.zeros((out_channels,), jnp.float32),
    }


def _reference_forward(x, edge_index, params):
    """Pure-JAX f32 reference of the same forward (for a sanity check)."""
    n = x.shape[0]
    src, dst = edge_index[0], edge_index[1]
    off_diag = (src != dst).astype(jnp.float32)
    a = jnp.zeros((n, n), jnp.float32).at[dst, src].add(off_diag)
    a = a + jnp.eye(n, dtype=jnp.float32)
    deg = a.sum(axis=1)
    dinv = jnp.where(deg > 0.0, 1.0 / jnp.sqrt(deg), 0.0)
    a_n = dinv[:, None] * a * dinv[None, :]
    h = jnp.maximum(a_n @ (x @ params["w1"]) + params["b1"], 0.0)
    h = jnp.maximum(a_n @ (h @ params["w2"]) + params["b2"], 0.0)
    return h @ params["w3"] + params["b3"]


# ----------------------------------------------------------------------------
# Demo
# ----------------------------------------------------------------------------
if __name__ == "__main__":
    N, IN_CH, HID, OUT_CH, E = 200, 8, 32, 2, 400

    key = jax.random.PRNGKey(0)
    kx, ke, kp = jax.random.split(key, 3)

    x = jax.random.normal(kx, (N, IN_CH), jnp.float32)

    # Random undirected edge list (both directions included); may contain
    # duplicates and self-loops — both handled to match the kernel's convention.
    e_raw = jax.random.randint(ke, (2, E), 0, N, jnp.int32)
    edge_index = jnp.concatenate(
        [e_raw, jnp.stack([e_raw[1], e_raw[0]])], axis=1)  # (2, 2E)

    params = init_params(kp, IN_CH, HID, OUT_CH)

    out = elliptic_gnn_forward(x, edge_index, params, tile_m=512, tile_k=512)
    out = jax.block_until_ready(out)
    assert out.shape == (N, OUT_CH)

    ref = _reference_forward(x, edge_index, params)
    max_err = float(jnp.max(jnp.abs(out - ref)))
    assert max_err < 0.25, f"kernel/reference mismatch: max abs err {max_err}"

    print("KERNEL_OK")
</pallas_src>

<mosaic_0001>
module attributes {stable_mosaic.version = 11 : i64} {
  func.func private @main(%arg0: i32) attributes {dimension_semantics = [#tpu.dimension_semantics<core_parallel>], iteration_bounds = array<i64: 2>, tpu.core_type = #tpu.core_type<sc_scalar_subcore>, window_params = []} {
    return
  }
}

module attributes {stable_mosaic.version = 11 : i64} {
  func.func private @main(%arg0: i32) attributes {dimension_semantics = [#tpu.dimension_semantics<core_parallel>], iteration_bounds = array<i64: 2>, tpu.core_type = #tpu.core_type<sc_scalar_subcore>, window_params = []} {
    return
  }
}

module attributes {stable_mosaic.version = 11 : i64} {
  func.func @_transform_kernel(%arg0: i32, %arg1: memref<256x128xbf16, #tpu.memory_space<vmem>>, %arg2: memref<128x128xbf16, #tpu.memory_space<vmem>>, %arg3: memref<256x1xf32, #tpu.memory_space<vmem>>, %arg4: memref<256x128xbf16, #tpu.memory_space<vmem>>) attributes {dimension_semantics = [#tpu.dimension_semantics<parallel>], iteration_bounds = array<i64: 2>, scalar_prefetch = 0 : i64, scratch_operands = 0 : i64, tpu.core_type = #tpu.core_type<tc>, window_params = [{transform_indices = @transform_0, window_bounds = array<i64: 256, 128>}, {pipeline_mode = #tpu.pipeline_mode<synchronous>, transform_indices = @transform_1, window_bounds = array<i64: 128, 128>}, {transform_indices = @transform_2, window_bounds = array<i64: 256, 1>}, {transform_indices = @transform_3, window_bounds = array<i64: 256, 128>}]} {
    %c0 = arith.constant 0 : index
    %c0_0 = arith.constant 0 : index
    %0 = vector.load %arg1[%c0, %c0_0] : memref<256x128xbf16, #tpu.memory_space<vmem>>, vector<256x128xbf16>
    %c0_1 = arith.constant 0 : index
    %c0_2 = arith.constant 0 : index
    %1 = vector.load %arg2[%c0_1, %c0_2] : memref<128x128xbf16, #tpu.memory_space<vmem>>, vector<128x128xbf16>
    %cst = arith.constant dense<0.000000e+00> : vector<256x128xf32>
    %2 = tpu.matmul %0, %1, %cst {dimension_numbers = #tpu.dot_dimension_numbers<[1], [0], [0], [1], [0, 0, 1, 1], [], []>} : vector<256x128xbf16>, vector<128x128xbf16>, vector<256x128xf32> -> vector<256x128xf32>
    %c0_3 = arith.constant 0 : index
    %c0_4 = arith.constant 0 : index
    %3 = vector.load %arg3[%c0_3, %c0_4] : memref<256x1xf32, #tpu.memory_space<vmem>>, vector<256x1xf32>
    %4 = vector.broadcast %3 : vector<256x1xf32> to vector<256x128xf32>
    %5 = arith.mulf %2, %4 : vector<256x128xf32>
    %6 = arith.truncf %5 : vector<256x128xf32> to vector<256x128xbf16>
    %c0_5 = arith.constant 0 : index
    %c0_6 = arith.constant 0 : index
    %7 = vector.load %arg4[%c0_5, %c0_6] : memref<256x128xbf16, #tpu.memory_space<vmem>>, vector<256x128xbf16>
    tpu.vector_store %arg4[%c0_5, %c0_6], %6 {strides = array<i32>} : memref<256x128xbf16, #tpu.memory_space<vmem>>, vector<256x128xbf16>,
    return
  }
  func.func @transform_0(%arg0: i32) -> (i32, i32) {
    %c0_i32 = arith.constant 0 : i32
    %c0_i32_0 = arith.constant 0 : i32
    return %arg0, %c0_i32 : i32, i32
  }
  func.func @transform_1(%arg0: i32) -> (i32, i32) {
    %c0_i32 = arith.constant 0 : i32
    %c0_i32_0 = arith.constant 0 : i32
    %c0_i32_1 = arith.constant 0 : i32
    return %c0_i32, %c0_i32_0 : i32, i32
  }
  func.func @transform_2(%arg0: i32) -> (i32, i32) {
    %c0_i32 = arith.constant 0 : i32
    %c0_i32_0 = arith.constant 0 : i32
    return %arg0, %c0_i32 : i32, i32
  }
  func.func @transform_3(%arg0: i32) -> (i32, i32) {
    %c0_i32 = arith.constant 0 : i32
    %c0_i32_0 = arith.constant 0 : i32
    return %arg0, %c0_i32 : i32, i32
  }
}

module attributes {stable_mosaic.version = 11 : i64} {
  func.func @_agg_fused_kernel(%arg0: i32, %arg1: i32, %arg2: memref<256x512xbf16, #tpu.memory_space<vmem>>, %arg3: memref<512x128xbf16, #tpu.memory_space<vmem>>, %arg4: memref<256x1xf32, #tpu.memory_space<vmem>>, %arg5: memref<1x128xf32, #tpu.memory_space<vmem>>, %arg6: memref<128x128xbf16, #tpu.memory_space<vmem>>, %arg7: memref<1x128xf32, #tpu.memory_space<vmem>>, %arg8: memref<256x128xbf16, #tpu.memory_space<vmem>>, %arg9: memref<256x128xf32, #tpu.memory_space<vmem>>) attributes {dimension_semantics = [#tpu.dimension_semantics<parallel>, #tpu.dimension_semantics<arbitrary>], iteration_bounds = array<i64: 2, 1>, scalar_prefetch = 0 : i64, scratch_operands = 1 : i64, tpu.core_type = #tpu.core_type<tc>, window_params = [{transform_indices = @transform_0, window_bounds = array<i64: 256, 512>}, {pipeline_mode = #tpu.pipeline_mode<synchronous>, transform_indices = @transform_1, window_bounds = array<i64: 512, 128>}, {transform_indices = @transform_2, window_bounds = array<i64: 256, 1>}, {pipeline_mode = #tpu.pipeline_mode<synchronous>, transform_indices = @transform_3, window_bounds = array<i64: 1, 128>}, {pipeline_mode = #tpu.pipeline_mode<synchronous>, transform_indices = @transform_4, window_bounds = array<i64: 128, 128>}, {pipeline_mode = #tpu.pipeline_mode<synchronous>, transform_indices = @transform_5, window_bounds = array<i64: 1, 128>}, {transform_indices = @transform_6, window_bounds = array<i64: 256, 128>}]} {
    %c0_i32 = arith.constant 0 : i32
    %0 = arith.cmpi eq, %arg1, %c0_i32 : i32
    %1 = arith.extui %0 : i1 to i32
    %c0_i32_0 = arith.constant 0 : i32
    %2 = arith.cmpi ne, %1, %c0_i32_0 : i32
    scf.if %2 {
      %cst_9 = arith.constant 0.000000e+00 : f32
      %15 = vector.broadcast %cst_9 : f32 to vector<256x128xf32>
      %c0_10 = arith.constant 0 : index
      %c0_11 = arith.constant 0 : index
      %16 = vector.load %arg9[%c0_10, %c0_11] : memref<256x128xf32, #tpu.memory_space<vmem>>, vector<256x128xf32>
      tpu.vector_store %arg9[%c0_10, %c0_11], %15 {strides = array<i32>} : memref<256x128xf32, #tpu.memory_space<vmem>>, vector<256x128xf32>,
    } else {
    }
    %c512_i32 = arith.constant 512 : i32
    %3 = arith.muli %arg1, %c512_i32 : i32
    %4 = tpu.assume_multiple %3, 512 : i32
    %c0 = arith.constant 0 : index
    %c0_1 = arith.constant 0 : index
    %5 = vector.load %arg9[%c0, %c0_1] : memref<256x128xf32, #tpu.memory_space<vmem>>, vector<256x128xf32>
    %c0_2 = arith.constant 0 : index
    %c0_3 = arith.constant 0 : index
    %6 = vector.load %arg2[%c0_2, %c0_3] : memref<256x512xbf16, #tpu.memory_space<vmem>>, vector<256x512xbf16>
    %7 = arith.index_cast %4 : i32 to index
    %c0_4 = arith.constant 0 : index
    %8 = vector.load %arg3[%7, %c0_4] : memref<512x128xbf16, #tpu.memory_space<vmem>>, vector<512x128xbf16>
    %cst = arith.constant dense<0.000000e+00> : vector<256x128xf32>
    %9 = tpu.matmul %6, %8, %cst {dimension_numbers = #tpu.dot_dimension_numbers<[1], [0], [0], [1], [0, 0, 1, 1], [], []>} : vector<256x512xbf16>, vector<512x128xbf16>, vector<256x128xf32> -> vector<256x128xf32>
    %10 = arith.addf %5, %9 : vector<256x128xf32>
    %c0_5 = arith.constant 0 : index
    %c0_6 = arith.constant 0 : index
    %11 = vector.load %arg9[%c0_5, %c0_6] : memref<256x128xf32, #tpu.memory_space<vmem>>, vector<256x128xf32>
    tpu.vector_store %arg9[%c0_5, %c0_6], %10 {strides = array<i32>} : memref<256x128xf32, #tpu.memory_space<vmem>>, vector<256x128xf32>,
    %c0_i32_7 = arith.constant 0 : i32
    %12 = arith.cmpi eq, %arg1, %c0_i32_7 : i32
    %13 = arith.extui %12 : i1 to i32
    %c0_i32_8 = arith.constant 0 : i32
    %14 = arith.cmpi ne, %13, %c0_i32_8 : i32
    scf.if %14 {
      %c0_9 = arith.constant 0 : index
      %c0_10 = arith.constant 0 : index
      %15 = vector.load %arg4[%c0_9, %c0_10] : memref<256x1xf32, #tpu.memory_space<vmem>>, vector<256x1xf32>
      %c0_11 = arith.constant 0 : index
      %c0_12 = arith.constant 0 : index
      %16 = vector.load %arg9[%c0_11, %c0_12] : memref<256x128xf32, #tpu.memory_space<vmem>>, vector<256x128xf32>
      %17 = vector.broadcast %15 : vector<256x1xf32> to vector<256x128xf32>
      %18 = arith.mulf %17, %16 : vector<256x128xf32>
      %c0_13 = arith.constant 0 : index
      %c0_14 = arith.constant 0 : index
      %19 = vector.load %arg5[%c0_13, %c0_14] : memref<1x128xf32, #tpu.memory_space<vmem>>, vector<1x128xf32>
      %20 = vector.broadcast %19 : vector<1x128xf32> to vector<256x128xf32>
      %21 = arith.addf %18, %20 : vector<256x128xf32>
      %cst_15 = arith.constant 0.000000e+00 : f32
      %22 = vector.broadcast %cst_15 : f32 to vector<256x128xf32>
      %23 = arith.maximumf %21, %22 : vector<256x128xf32>
      %24 = arith.truncf %23 : vector<256x128xf32> to vector<256x128xbf16>
      %c0_16 = arith.constant 0 : index
      %c0_17 = arith.constant 0 : index
      %25 = vector.load %arg6[%c0_16, %c0_17] : memref<128x128xbf16, #tpu.memory_space<vmem>>, vector<128x128xbf16>
      %cst_18 = arith.constant dense<0.000000e+00> : vector<256x128xf32>
      %26 = tpu.matmul %24, %25, %cst_18 {dimension_numbers = #tpu.dot_dimension_numbers<[1], [0], [0], [1], [0, 0, 1, 1], [], []>} : vector<256x128xbf16>, vector<128x128xbf16>, vector<256x128xf32> -> vector<256x128xf32>
      %c0_19 = arith.constant 0 : index
      %c0_20 = arith.constant 0 : index
      %27 = vector.load %arg4[%c0_19, %c0_20] : memref<256x1xf32, #tpu.memory_space<vmem>>, vector<256x1xf32>
      %28 = vector.broadcast %27 : vector<256x1xf32> to vector<256x128xf32>
      %29 = arith.mulf %26, %28 : vector<256x128xf32>
      %30 = arith.truncf %29 : vector<256x128xf32> to vector<256x128xbf16>
      %c0_21 = arith.constant 0 : index
      %c0_22 = arith.constant 0 : index
      %31 = vector.load %arg8[%c0_21, %c0_22] : memref<256x128xbf16, #tpu.memory_space<vmem>>, vector<256x128xbf16>
      tpu.vector_store %arg8[%c0_21, %c0_22], %30 {strides = array<i32>} : memref<256x128xbf16, #tpu.memory_space<vmem>>, vector<256x128xbf16>,
    } else {
    }
    return
  }
  func.func @transform_0(%arg0: i32, %arg1: i32) -> (i32, i32) {
    %c0_i32 = arith.constant 0 : i32
    return %arg0, %arg1 : i32, i32
  }
  func.func @transform_1(%arg0: i32, %arg1: i32) -> (i32, i32) {
    %c0_i32 = arith.constant 0 : i32
    %c0_i32_0 = arith.constant 0 : i32
    %c0_i32_1 = arith.constant 0 : i32
    return %c0_i32, %c0_i32_0 : i32, i32
  }
  func.func @transform_2(%arg0: i32, %arg1: i32) -> (i32, i32) {
    %c0_i32 = arith.constant 0 : i32
    %c0_i32_0 = arith.constant 0 : i32
    return %arg0, %c0_i32 : i32, i32
  }
  func.func @transform_3(%arg0: i32, %arg1: i32) -> (i32, i32) {
    %c0_i32 = arith.constant 0 : i32
    %c0_i32_0 = arith.constant 0 : i32
    %c0_i32_1 = arith.constant 0 : i32
    return %c0_i32, %c0_i32_0 : i32, i32
  }
  func.func @transform_4(%arg0: i32, %arg1: i32) -> (i32, i32) {
    %c0_i32 = arith.constant 0 : i32
    %c0_i32_0 = arith.constant 0 : i32
    %c0_i32_1 = arith.constant 0 : i32
    return %c0_i32, %c0_i32_0 : i32, i32
  }
  func.func @transform_5(%arg0: i32, %arg1: i32) -> (i32, i32) {
    %c0_i32 = arith.constant 0 : i32
    %c0_i32_0 = arith.constant 0 : i32
    %c0_i32_1 = arith.constant 0 : i32
    return %c0_i32, %c0_i32_0 : i32, i32
  }
  func.func @transform_6(%arg0: i32, %arg1: i32) -> (i32, i32) {
    %c0_i32 = arith.constant 0 : i32
    %c0_i32_0 = arith.constant 0 : i32
    return %arg0, %c0_i32 : i32, i32
  }
}

module attributes {stable_mosaic.version = 11 : i64} {
  func.func @_agg_fused_kernel(%arg0: i32, %arg1: i32, %arg2: memref<256x512xbf16, #tpu.memory_space<vmem>>, %arg3: memref<512x128xbf16, #tpu.memory_space<vmem>>, %arg4: memref<256x1xf32, #tpu.memory_space<vmem>>, %arg5: memref<1x128xf32, #tpu.memory_space<vmem>>, %arg6: memref<128x128xbf16, #tpu.memory_space<vmem>>, %arg7: memref<1x128xf32, #tpu.memory_space<vmem>>, %arg8: memref<256x128xbf16, #tpu.memory_space<vmem>>, %arg9: memref<256x128xf32, #tpu.memory_space<vmem>>) attributes {dimension_semantics = [#tpu.dimension_semantics<parallel>, #tpu.dimension_semantics<arbitrary>], iteration_bounds = array<i64: 2, 1>, scalar_prefetch = 0 : i64, scratch_operands = 1 : i64, tpu.core_type = #tpu.core_type<tc>, window_params = [{transform_indices = @transform_0, window_bounds = array<i64: 256, 512>}, {pipeline_mode = #tpu.pipeline_mode<synchronous>, transform_indices = @transform_1, window_bounds = array<i64: 512, 128>}, {transform_indices = @transform_2, window_bounds = array<i64: 256, 1>}, {pipeline_mode = #tpu.pipeline_mode<synchronous>, transform_indices = @transform_3, window_bounds = array<i64: 1, 128>}, {pipeline_mode = #tpu.pipeline_mode<synchronous>, transform_indices = @transform_4, window_bounds = array<i64: 128, 128>}, {pipeline_mode = #tpu.pipeline_mode<synchronous>, transform_indices = @transform_5, window_bounds = array<i64: 1, 128>}, {transform_indices = @transform_6, window_bounds = array<i64: 256, 128>}]} {
    %c0_i32 = arith.constant 0 : i32
    %0 = arith.cmpi eq, %arg1, %c0_i32 : i32
    %1 = arith.extui %0 : i1 to i32
    %c0_i32_0 = arith.constant 0 : i32
    %2 = arith.cmpi ne, %1, %c0_i32_0 : i32
    scf.if %2 {
      %cst_9 = arith.constant 0.000000e+00 : f32
      %15 = vector.broadcast %cst_9 : f32 to vector<256x128xf32>
      %c0_10 = arith.constant 0 : index
      %c0_11 = arith.constant 0 : index
      %16 = vector.load %arg9[%c0_10, %c0_11] : memref<256x128xf32, #tpu.memory_space<vmem>>, vector<256x128xf32>
      tpu.vector_store %arg9[%c0_10, %c0_11], %15 {strides = array<i32>} : memref<256x128xf32, #tpu.memory_space<vmem>>, vector<256x128xf32>,
    } else {
    }
    %c512_i32 = arith.constant 512 : i32
    %3 = arith.muli %arg1, %c512_i32 : i32
    %4 = tpu.assume_multiple %3, 512 : i32
    %c0 = arith.constant 0 : index
    %c0_1 = arith.constant 0 : index
    %5 = vector.load %arg9[%c0, %c0_1] : memref<256x128xf32, #tpu.memory_space<vmem>>, vector<256x128xf32>
    %c0_2 = arith.constant 0 : index
    %c0_3 = arith.constant 0 : index
    %6 = vector.load %arg2[%c0_2, %c0_3] : memref<256x512xbf16, #tpu.memory_space<vmem>>, vector<256x512xbf16>
    %7 = arith.index_cast %4 : i32 to index
    %c0_4 = arith.constant 0 : index
    %8 = vector.load %arg3[%7, %c0_4] : memref<512x128xbf16, #tpu.memory_space<vmem>>, vector<512x128xbf16>
    %cst = arith.constant dense<0.000000e+00> : vector<256x128xf32>
    %9 = tpu.matmul %6, %8, %cst {dimension_numbers = #tpu.dot_dimension_numbers<[1], [0], [0], [1], [0, 0, 1, 1], [], []>} : vector<256x512xbf16>, vector<512x128xbf16>, vector<256x128xf32> -> vector<256x128xf32>
    %10 = arith.addf %5, %9 : vector<256x128xf32>
    %c0_5 = arith.constant 0 : index
    %c0_6 = arith.constant 0 : index
    %11 = vector.load %arg9[%c0_5, %c0_6] : memref<256x128xf32, #tpu.memory_space<vmem>>, vector<256x128xf32>
    tpu.vector_store %arg9[%c0_5, %c0_6], %10 {strides = array<i32>} : memref<256x128xf32, #tpu.memory_space<vmem>>, vector<256x128xf32>,
    %c0_i32_7 = arith.constant 0 : i32
    %12 = arith.cmpi eq, %arg1, %c0_i32_7 : i32
    %13 = arith.extui %12 : i1 to i32
    %c0_i32_8 = arith.constant 0 : i32
    %14 = arith.cmpi ne, %13, %c0_i32_8 : i32
    scf.if %14 {
      %c0_9 = arith.constant 0 : index
      %c0_10 = arith.constant 0 : index
      %15 = vector.load %arg4[%c0_9, %c0_10] : memref<256x1xf32, #tpu.memory_space<vmem>>, vector<256x1xf32>
      %c0_11 = arith.constant 0 : index
      %c0_12 = arith.constant 0 : index
      %16 = vector.load %arg9[%c0_11, %c0_12] : memref<256x128xf32, #tpu.memory_space<vmem>>, vector<256x128xf32>
      %17 = vector.broadcast %15 : vector<256x1xf32> to vector<256x128xf32>
      %18 = arith.mulf %17, %16 : vector<256x128xf32>
      %c0_13 = arith.constant 0 : index
      %c0_14 = arith.constant 0 : index
      %19 = vector.load %arg5[%c0_13, %c0_14] : memref<1x128xf32, #tpu.memory_space<vmem>>, vector<1x128xf32>
      %20 = vector.broadcast %19 : vector<1x128xf32> to vector<256x128xf32>
      %21 = arith.addf %18, %20 : vector<256x128xf32>
      %cst_15 = arith.constant 0.000000e+00 : f32
      %22 = vector.broadcast %cst_15 : f32 to vector<256x128xf32>
      %23 = arith.maximumf %21, %22 : vector<256x128xf32>
      %24 = arith.truncf %23 : vector<256x128xf32> to vector<256x128xbf16>
      %c0_16 = arith.constant 0 : index
      %c0_17 = arith.constant 0 : index
      %25 = vector.load %arg6[%c0_16, %c0_17] : memref<128x128xbf16, #tpu.memory_space<vmem>>, vector<128x128xbf16>
      %cst_18 = arith.constant dense<0.000000e+00> : vector<256x128xf32>
      %26 = tpu.matmul %24, %25, %cst_18 {dimension_numbers = #tpu.dot_dimension_numbers<[1], [0], [0], [1], [0, 0, 1, 1], [], []>} : vector<256x128xbf16>, vector<128x128xbf16>, vector<256x128xf32> -> vector<256x128xf32>
      %c0_19 = arith.constant 0 : index
      %c0_20 = arith.constant 0 : index
      %27 = vector.load %arg7[%c0_19, %c0_20] : memref<1x128xf32, #tpu.memory_space<vmem>>, vector<1x128xf32>
      %28 = vector.broadcast %27 : vector<1x128xf32> to vector<256x128xf32>
      %29 = arith.addf %26, %28 : vector<256x128xf32>
      %30 = arith.truncf %29 : vector<256x128xf32> to vector<256x128xbf16>
      %c0_21 = arith.constant 0 : index
      %c0_22 = arith.constant 0 : index
      %31 = vector.load %arg8[%c0_21, %c0_22] : memref<256x128xbf16, #tpu.memory_space<vmem>>, vector<256x128xbf16>
      tpu.vector_store %arg8[%c0_21, %c0_22], %30 {strides = array<i32>} : memref<256x128xbf16, #tpu.memory_space<vmem>>, vector<256x128xbf16>,
    } else {
    }
    return
  }
  func.func @transform_0(%arg0: i32, %arg1: i32) -> (i32, i32) {
    %c0_i32 = arith.constant 0 : i32
    return %arg0, %arg1 : i32, i32
  }
  func.func @transform_1(%arg0: i32, %arg1: i32) -> (i32, i32) {
    %c0_i32 = arith.constant 0 : i32
    %c0_i32_0 = arith.constant 0 : i32
    %c0_i32_1 = arith.constant 0 : i32
    return %c0_i32, %c0_i32_0 : i32, i32
  }
  func.func @transform_2(%arg0: i32, %arg1: i32) -> (i32, i32) {
    %c0_i32 = arith.constant 0 : i32
    %c0_i32_0 = arith.constant 0 : i32
    return %arg0, %c0_i32 : i32, i32
  }
  func.func @transform_3(%arg0: i32, %arg1: i32) -> (i32, i32) {
    %c0_i32 = arith.constant 0 : i32
    %c0_i32_0 = arith.constant 0 : i32
    %c0_i32_1 = arith.constant 0 : i32
    return %c0_i32, %c0_i32_0 : i32, i32
  }
  func.func @transform_4(%arg0: i32, %arg1: i32) -> (i32, i32) {
    %c0_i32 = arith.constant 0 : i32
    %c0_i32_0 = arith.constant 0 : i32
    %c0_i32_1 = arith.constant 0 : i32
    return %c0_i32, %c0_i32_0 : i32, i32
  }
  func.func @transform_5(%arg0: i32, %arg1: i32) -> (i32, i32) {
    %c0_i32 = arith.constant 0 : i32
    %c0_i32_0 = arith.constant 0 : i32
    %c0_i32_1 = arith.constant 0 : i32
    return %c0_i32, %c0_i32_0 : i32, i32
  }
  func.func @transform_6(%arg0: i32, %arg1: i32) -> (i32, i32) {
    %c0_i32 = arith.constant 0 : i32
    %c0_i32_0 = arith.constant 0 : i32
    return %arg0, %c0_i32 : i32, i32
  }
}

</mosaic_0001>

<llo_original>
// kernel: elliptic_gnn_forward.3
$region0: #{elliptic_gnn_forward.3}
  #allocation0 [shape = 'u32[]', space=smem, size = 0x4, offset = 0x4, fixed_abs, tag = 'smem constant byte address 0x4 - core index']
  #allocation1 [shape = 'u32[144,128]{1,0:T(1,128)}', space=vmem, size = 0x12000, scoped, tag = 'internal scratch']
  %s0 = inlined_call_operand.vmem [shape: bf16[512,128], index: 0, kind: input, shape index: {}]
  %s1 = inlined_call_operand.vmem [shape: bf16[128,128], index: 1, kind: input, shape index: {}]
  %s2 = inlined_call_operand.vmem [shape: f32[512,1], index: 2, kind: input, shape index: {}]
  %s3 = inlined_call_operand.vmem [shape: bf16[512,128], index: 3, kind: output, shape index: {}]
  %s4 = sld [smem:[#allocation0]]
  $region45: #{elliptic_gnn_forward.3} parent=0
    _
  %s6 = ssub.s32 1, %s4
  %s7 = scalar_select 0, %s6, %s4
  loop: start=0, step=1, limit=4
  $region2: #{elliptic_gnn_forward.3} parent=0 // loop_pre_header
    _
  $region3: #{elliptic_gnn_forward.3} parent=0 // loop_header
    %s9 = sphi 0, %s13
    %p10 = scmp.ge.s32.totalorder %s9, 4
    %s19 = sphi 0, %s21
    %s22 = sphi 0, %s19
    %s23 = sphi 0, %s22
    %s39 = sphi 0, %s23
    %s43 = sphi 0, %s43
    %s45 = sphi 0, %s43
    %s46 = sphi 0, %s45
    %s60 = sphi 0, %s46
    %s66 = sphi 0, %s68
    %s69 = sphi 0, %s66
    %s70 = sphi 0, %s69
    %s86 = sphi 0, %s70
    %s92 = sphi 0, %s94
    %s95 = sphi 0, %s92
    %s96 = sphi 0, %s95
    %s112 = sphi 0, %s96
  $region4: #{elliptic_gnn_forward.3} parent=0 // loop_header_branch
    %12 = sbr.rel (%p10) target = $region8
  $region5: #{elliptic_gnn_forward.3} parent=0 // loop_body
    %s14 = ssub.s32 %s9, 1
    %s15 = ssub.s32 %s9, 2
    %s16 = sadd.s32 %s9, 1
    %s17 = ssub.s32 %s9, %s16
    %p18 = scmp.eq.s32.totalorder %s17, 0
    %s20 = sadd.s32 %s19, 1
    %s21 = scalar_select %p18, %s19, %s20
    %p24 = pneg %p18
    %p25 = scmp.eq.s32.totalorder %s9, 1
    %p26 = por %p24, %p25
    %p27 = scmp.ne.s32.totalorder %s19, %s22
    %p28 = scmp.eq.s32.totalorder %s9, 0
    %p29 = por %p27, %p28
    %p30 = scmp.ne.s32.totalorder %s19, %s22
    %p31 = scmp.eq.s32.totalorder %s14, 1
    %p32 = por %p30, %p31
    %p33 = scmp.ne.s32.totalorder %s22, %s23
    %p34 = scmp.eq.s32.totalorder %s14, 0
    %p35 = por %p33, %p34
    %p36 = scmp.ne.s32.totalorder %s22, %s23
    %p37 = scmp.eq.s32.totalorder %s15, 1
    %p38 = por %p36, %p37
    %p40 = scmp.ne.s32.totalorder %s23, %s39
    %p41 = scmp.eq.s32.totalorder %s15, 0
    %p42 = por %p40, %p41
    %s44 = sadd.s32 %s43, 1
    %p47 = scmp.eq.s32.totalorder %s9, 1
    %p48 = scmp.ne.s32.totalorder %s43, %s45
    %p49 = scmp.eq.s32.totalorder %s9, 0
    %p50 = por %p48, %p49
    %p51 = scmp.ne.s32.totalorder %s43, %s45
    %p52 = scmp.eq.s32.totalorder %s14, 1
    %p53 = por %p51, %p52
    %p54 = scmp.ne.s32.totalorder %s45, %s46
    %p55 = scmp.eq.s32.totalorder %s14, 0
    %p56 = por %p54, %p55
    %p57 = scmp.ne.s32.totalorder %s45, %s46
    %p58 = scmp.eq.s32.totalorder %s15, 1
    %p59 = por %p57, %p58
    %p61 = scmp.ne.s32.totalorder %s46, %s60
    %p62 = scmp.eq.s32.totalorder %s15, 0
    %p63 = por %p61, %p62
    %s64 = ssub.s32 %s9, %s16
    %p65 = scmp.eq.s32.totalorder %s64, 0
    %s67 = sadd.s32 %s66, 1
    %s68 = scalar_select %p65, %s66, %s67
    %p71 = pneg %p65
    %p72 = scmp.eq.s32.totalorder %s9, 1
    %p73 = por %p71, %p72
    %p74 = scmp.ne.s32.totalorder %s66, %s69
    %p75 = scmp.eq.s32.totalorder %s9, 0
    %p76 = por %p74, %p75
    %p77 = scmp.ne.s32.totalorder %s66, %s69
    %p78 = scmp.eq.s32.totalorder %s14, 1
    %p79 = por %p77, %p78
    %p80 = scmp.ne.s32.totalorder %s69, %s70
    %p81 = scmp.eq.s32.totalorder %s14, 0
    %p82 = por %p80, %p81
    %p83 = scmp.ne.s32.totalorder %s69, %s70
    %p84 = scmp.eq.s32.totalorder %s15, 1
    %p85 = por %p83, %p84
    %p87 = scmp.ne.s32.totalorder %s70, %s86
    %p88 = scmp.eq.s32.totalorder %s15, 0
    %p89 = por %p87, %p88
    %s90 = ssub.s32 %s9, %s16
    %p91 = scmp.eq.s32.totalorder %s90, 0
    %s93 = sadd.s32 %s92, 1
    %s94 = scalar_select %p91, %s92, %s93
    %p97 = pneg %p91
    %p98 = scmp.eq.s32.totalorder %s9, 1
    %p99 = por %p97, %p98
    %p100 = scmp.ne.s32.totalorder %s92, %s95
    %p101 = scmp.eq.s32.totalorder %s9, 0
    %p102 = por %p100, %p101
    %p103 = scmp.ne.s32.totalorder %s92, %s95
    %p104 = scmp.eq.s32.totalorder %s14, 1
    %p105 = por %p103, %p104
    %p106 = scmp.ne.s32.totalorder %s95, %s96
    %p107 = scmp.eq.s32.totalorder %s14, 0
    %p108 = por %p106, %p107
    %p109 = scmp.ne.s32.totalorder %s95, %s96
    %p110 = scmp.eq.s32.totalorder %s15, 1
    %p111 = por %p109, %p110
    %p113 = scmp.ne.s32.totalorder %s96, %s112
    %p114 = scmp.eq.s32.totalorder %s15, 0
    %p115 = por %p113, %p114
    %p116 = scmp.le.s32.totalorder 1, %s9
    %p117 = scmp.lt.s32.totalorder %s9, 3
    %p118 = pnand %p116, %p117
    %p119 = pneg %p118
    // Predicated region
    $region9: #{elliptic_gnn_forward.3} parent=5 // pred_check
      _
    $region10: #{elliptic_gnn_forward.3} parent=5 // pred_check_branch
      %121 = sbr.rel (%p118) target = $region12
    $region11: #{elliptic_gnn_forward.3} parent=5 // pred_region
      %s122 = ssub.s32 %s9, 1
      // Predicated region
      $region13: #{elliptic_gnn_forward.3} parent=11 // pred_check
        %p123 = pneg %p56
      $region14: #{elliptic_gnn_forward.3} parent=11 // pred_check_branch
        %125 = sbr.rel (%p123) target = $region16
      $region15: #{elliptic_gnn_forward.3} parent=11 // pred_region
        _
      $region16: #{elliptic_gnn_forward.3} parent=11 // pred_fallthru
        _
    $region12: #{elliptic_gnn_forward.3} parent=5 // pred_fallthru
      _
    %p126 = scmp.lt.s32.totalorder %s9, 2
    // Predicated region
    $region17: #{elliptic_gnn_forward.3} parent=5 // pred_check
      %p127 = pneg %p126
    $region18: #{elliptic_gnn_forward.3} parent=5 // pred_check_branch
      %129 = sbr.rel (%p127) target = $region20
    $region19: #{elliptic_gnn_forward.3} parent=5 // pred_region
      // Predicated region
      $region21: #{elliptic_gnn_forward.3} parent=19 // pred_check
        %p130 = pneg %p29
      $region22: #{elliptic_gnn_forward.3} parent=19 // pred_check_branch
        %132 = sbr.rel (%p130) target = $region24
      $region23: #{elliptic_gnn_forward.3} parent=19 // pred_region
        %s133 = smul.u32 32, %s9
        %p134 = scmp.lt.s32.totalorder %s133, 63
        %s135 = scalar_select %p134, %s133, 63
        %s136 = smul.addr %s135, 4
        %s137 = scalar_lea.vmem %s0, %s136
        %s138 = smul.u32 32, %s9
      $region24: #{elliptic_gnn_forward.3} parent=19 // pred_fallthru
        _
      // Predicated region
      $region25: #{elliptic_gnn_forward.3} parent=19 // pred_check
        %p139 = pneg %p76
      $region26: #{elliptic_gnn_forward.3} parent=19 // pred_check_branch
        %141 = sbr.rel (%p139) target = $region28
      $region27: #{elliptic_gnn_forward.3} parent=19 // pred_region
        %s142 = smul.u32 32, %s9
        %p143 = scmp.lt.s32.totalorder %s142, 63
        %s144 = scalar_select %p143, %s142, 63
        %s145 = smul.addr %s144, 8
        %s146 = scalar_lea.vmem %s2, %s145
        %s147 = smul.u32 32, %s9
      $region28: #{elliptic_gnn_forward.3} parent=19 // pred_fallthru
        _
    $region20: #{elliptic_gnn_forward.3} parent=5 // pred_fallthru
      _
    %p148 = scmp.le.s32.totalorder 1, %s9
    %p149 = scmp.lt.s32.totalorder %s9, 3
    %p150 = pnand %p148, %p149
    %p151 = pneg %p150
    // Predicated region
    $region29: #{elliptic_gnn_forward.3} parent=5 // pred_check
      _
    $region30: #{elliptic_gnn_forward.3} parent=5 // pred_check_branch
      %153 = sbr.rel (%p150) target = $region32
    $region31: #{elliptic_gnn_forward.3} parent=5 // pred_region
      %s154 = ssub.s32 %s9, 1
      %s155 = smul.u32 32, %s14
      %p156 = scmp.lt.s32.totalorder %s155, 63
      %s157 = scalar_select %p156, %s155, 63
      %s158 = smul.addr %s157, 4
      %s159 = scalar_lea.vmem %s0, %s158
      %p160 = pneg %p35
      %p161 = pneg %p32
      %p162 = pneg %p56
      %p163 = pneg %p53
      %s164 = smul.u32 32, %s14
      %p165 = scmp.lt.s32.totalorder %s164, 63
      %s166 = scalar_select %p165, %s164, 63
      %s167 = smul.addr %s166, 8
      %s168 = scalar_lea.vmem %s2, %s167
      %p169 = pneg %p82
      %p170 = pneg %p79
      %p171 = pneg %p108
      %p172 = pneg %p105
      %s173 = smul.u32 32, %s14
      %p174 = scmp.lt.s32.totalorder %s173, 63
      %s175 = scalar_select %p174, %s173, 63
      %s176 = smul.addr %s175, 4
      %s177 = scalar_lea.vmem %s3, %s176
      %s178 = smul.u32 32, %s14
      %p179 = scmp.lt.s32.totalorder %s178, 63
      %s180 = scalar_select %p179, %s178, 63
      %s181 = smul.addr %s180, 4
      %s182 = scalar_lea.vmem %s0, %s181
      %s183 = smul.u32 32, %s14
      %s184 = smul.u32 32, %s14
      %p185 = scmp.lt.s32.totalorder %s184, 63
      %s186 = scalar_select %p185, %s184, 63
      %s187 = smul.addr %s186, 8
      %s188 = scalar_lea.vmem %s2, %s187
      %s189 = smul.u32 32, %s14
      %s190 = smul.u32 32, %s14
      %p191 = scmp.lt.s32.totalorder %s190, 63
      %s192 = scalar_select %p191, %s190, 63
      %s193 = smul.addr %s192, 4
      %s194 = scalar_lea.vmem %s3, %s193
      %s195 = smul.u32 32, %s14
      %v197 = vld [vmem:[%s182] sm:$0xf]
      %v198 = vld [vmem:[%s182 + $0x4] sm:$0xf]
      %v199 = vld [vmem:[%s182 + $0x8] sm:$0xf]
      %v200 = vld [vmem:[%s182 + $0xc] sm:$0xf]
      %v201 = vld [vmem:[%s182 + $0x10] sm:$0xf]
      %v202 = vld [vmem:[%s182 + $0x14] sm:$0xf]
      %v203 = vld [vmem:[%s182 + $0x18] sm:$0xf]
      %v204 = vld [vmem:[%s182 + $0x1c] sm:$0xf]
      %v205 = vld [vmem:[%s182 + $0x20] sm:$0xf]
      %v206 = vld [vmem:[%s182 + $0x24] sm:$0xf]
      %v207 = vld [vmem:[%s182 + $0x28] sm:$0xf]
      %v208 = vld [vmem:[%s182 + $0x2c] sm:$0xf]
      %v209 = vld [vmem:[%s182 + $0x30] sm:$0xf]
      %v210 = vld [vmem:[%s182 + $0x34] sm:$0xf]
      %v211 = vld [vmem:[%s182 + $0x38] sm:$0xf]
      %v212 = vld [vmem:[%s182 + $0x3c] sm:$0xf]
      %v213 = vld [vmem:[%s182 + $0x40] sm:$0xf]
      %v214 = vld [vmem:[%s182 + $0x44] sm:$0xf]
      %v215 = vld [vmem:[%s182 + $0x48] sm:$0xf]
      %v216 = vld [vmem:[%s182 + $0x4c] sm:$0xf]
      %v217 = vld [vmem:[%s182 + $0x50] sm:$0xf]
      %v218 = vld [vmem:[%s182 + $0x54] sm:$0xf]
      %v219 = vld [vmem:[%s182 + $0x58] sm:$0xf]
      %v220 = vld [vmem:[%s182 + $0x5c] sm:$0xf]
      %v221 = vld [vmem:[%s182 + $0x60] sm:$0xf]
      %v222 = vld [vmem:[%s182 + $0x64] sm:$0xf]
      %v223 = vld [vmem:[%s182 + $0x68] sm:$0xf]
      %v224 = vld [vmem:[%s182 + $0x6c] sm:$0xf]
      %v225 = vld [vmem:[%s182 + $0x70] sm:$0xf]
      %v226 = vld [vmem:[%s182 + $0x74] sm:$0xf]
      %v227 = vld [vmem:[%s182 + $0x78] sm:$0xf]
      %v228 = vld [vmem:[%s182 + $0x7c] sm:$0xf]
      %v229 = vld [vmem:[%s1] sm:$0xf]
      %v230 = vld [vmem:[%s1 + $0x4] sm:$0xf]
      %v231 = vld [vmem:[%s1 + $0x8] sm:$0xf]
      %v232 = vld [vmem:[%s1 + $0xc] sm:$0xf]
      %v233 = vld [vmem:[%s1 + $0x10] sm:$0xf]
      %v234 = vld [vmem:[%s1 + $0x14] sm:$0xf]
      %v235 = vld [vmem:[%s1 + $0x18] sm:$0xf]
      %v236 = vld [vmem:[%s1 + $0x1c] sm:$0xf]
      %v237 = vld [vmem:[%s1 + $0x20] sm:$0xf]
      %v238 = vld [vmem:[%s1 + $0x24] sm:$0xf]
      %v239 = vld [vmem:[%s1 + $0x28] sm:$0xf]
      %v240 = vld [vmem:[%s1 + $0x2c] sm:$0xf]
      %v241 = vld [vmem:[%s1 + $0x30] sm:$0xf]
      %v242 = vld [vmem:[%s1 + $0x34] sm:$0xf]
      %v243 = vld [vmem:[%s1 + $0x38] sm:$0xf]
      %v244 = vld [vmem:[%s1 + $0x3c] sm:$0xf]
      %v277 = vunpack.c.l.b16 %v197
      %v278 = vunpack.c.l.b16 %v198
      %v279 = vunpack.c.l.b16 %v199
      %v280 = vunpack.c.l.b16 %v200
      %v281 = vunpack.c.l.b16 %v201
      %v282 = vunpack.c.l.b16 %v202
      %v283 = vunpack.c.l.b16 %v203
      %v284 = vunpack.c.l.b16 %v204
      %v285 = vunpack.c.l.b16 %v205
      %v286 = vunpack.c.l.b16 %v206
      %v287 = vunpack.c.l.b16 %v207
      %v288 = vunpack.c.l.b16 %v208
      %v289 = vunpack.c.l.b16 %v209
      %v290 = vunpack.c.l.b16 %v210
      %v291 = vunpack.c.l.b16 %v211
      %v292 = vunpack.c.l.b16 %v212
      %v293 = vunpack.c.l.b16 %v213
      %v294 = vunpack.c.l.b16 %v214
      %v295 = vunpack.c.l.b16 %v215
      %v296 = vunpack.c.l.b16 %v216
      %v297 = vunpack.c.l.b16 %v217
      %v298 = vunpack.c.l.b16 %v218
      %v299 = vunpack.c.l.b16 %v219
      %v300 = vunpack.c.l.b16 %v220
      %v301 = vunpack.c.l.b16 %v221
      %v302 = vunpack.c.l.b16 %v222
      %v303 = vunpack.c.l.b16 %v223
      %v304 = vunpack.c.l.b16 %v224
      %v305 = vunpack.c.l.b16 %v225
      %v306 = vunpack.c.l.b16 %v226
      %v307 = vunpack.c.l.b16 %v227
      %v308 = vunpack.c.l.b16 %v228
      %v309 = vpack.c.b16 %v278, %v277
      %v310 = vpack.c.b16 %v280, %v279
      %v311 = vpack.c.b16 %v282, %v281
      %v312 = vpack.c.b16 %v284, %v283
      %v313 = vpack.c.b16 %v286, %v285
      %v314 = vpack.c.b16 %v288, %v287
      %v315 = vpack.c.b16 %v290, %v289
      %v316 = vpack.c.b16 %v292, %v291
      %v317 = vpack.c.b16 %v294, %v293
      %v318 = vpack.c.b16 %v296, %v295
      %v319 = vpack.c.b16 %v298, %v297
      %v320 = vpack.c.b16 %v300, %v299
      %v321 = vpack.c.b16 %v302, %v301
      %v322 = vpack.c.b16 %v304, %v303
      %v323 = vpack.c.b16 %v306, %v305
      %v324 = vpack.c.b16 %v308, %v307
      %v357 = vunpack.c.l.b16 %v229
      %v358 = vunpack.c.l.b16 %v230
      %v359 = vunpack.c.l.b16 %v231
      %v360 = vunpack.c.l.b16 %v232
      %v361 = vunpack.c.l.b16 %v233
      %v362 = vunpack.c.l.b16 %v234
      %v363 = vunpack.c.l.b16 %v235
      %v364 = vunpack.c.l.b16 %v236
      %v365 = vunpack.c.l.b16 %v237
      %v366 = vunpack.c.l.b16 %v238
      %v367 = vunpack.c.l.b16 %v239
      %v368 = vunpack.c.l.b16 %v240
      %v369 = vunpack.c.l.b16 %v241
      %v370 = vunpack.c.l.b16 %v242
      %v371 = vunpack.c.l.b16 %v243
      %v372 = vunpack.c.l.b16 %v244
      %v373 = vpack.c.b16 %v358, %v357
      %v374 = vpack.c.b16 %v360, %v359
      %v375 = vpack.c.b16 %v362, %v361
      %v376 = vpack.c.b16 %v364, %v363
      %v377 = vpack.c.b16 %v366, %v365
      %v378 = vpack.c.b16 %v368, %v367
      %v379 = vpack.c.b16 %v370, %v369
      %v380 = vpack.c.b16 %v372, %v371
      %389 = vmatprep.subr.bf16.mxu0 0
      %390 = vmatpush1.bf16.msra.mxu0 %v373
      %391 = vmatprep.subr.bf16.mxu0 0
      %392 = vmatpush1.bf16.msra.mxu0 %v374
      %393 = vmatprep.subr.bf16.mxu0 0
      %394 = vmatpush1.bf16.msra.mxu0 %v375
      %395 = vmatprep.subr.bf16.mxu0 0
      %396 = vmatpush1.bf16.msra.mxu0 %v376
      %397 = vmatprep.subr.bf16.mxu0 0
      %398 = vmatpush1.bf16.msra.mxu0 %v377
      %399 = vmatprep.subr.bf16.mxu0 0
      %400 = vmatpush1.bf16.msra.mxu0 %v378
      %401 = vmatprep.subr.bf16.mxu0 0
      %402 = vmatpush1.bf16.msra.mxu0 %v379
      %403 = vmatprep.subr.bf16.mxu0 0
      %404 = vmatpush1.bf16.msra.mxu0 %v380
      %405 = vmatprep.subr.bf16.mxu0 0
      %406 = vmatpush1.bf16.msra.mxu0 0
      %407 = vmatprep.subr.bf16.mxu0 0
      %408 = vmatpush1.bf16.msra.mxu0 0
      %409 = vmatprep.subr.bf16.mxu0 0
      %410 = vmatpush1.bf16.msra.mxu0 0
      %411 = vmatprep.subr.bf16.mxu0 0
      %412 = vmatpush1.bf16.msra.mxu0 0
      %413 = vmatprep.subr.bf16.mxu0 0
      %414 = vmatpush1.bf16.msra.mxu0 0
      %415 = vmatprep.subr.bf16.mxu0 0
      %416 = vmatpush1.bf16.msra.mxu0 0
      %417 = vmatprep.subr.bf16.mxu0 0
      %418 = vmatpush1.bf16.msra.mxu0 0
      %419 = vmatprep.subr.bf16.mxu0 0
      %420 = vmatpush1.bf16.msra.mxu0 0
      %421 = vmatprep.mubr.bf16.mxu0 0
      %422 = vmatmul.mubr.bf16.gmra.mrb[0].mxu0 %v309
      %v423 = vpop.f32.mrb[0].mxu0
      %v424 = vadd.f32 0.0, %v423
      %v425 = vpop.f32.mrb[0].mxu0
      %v426 = vpop.f32.mrb[0].mxu0
      %v427 = vadd.f32 0.0, %v426
      %v428 = vpop.f32.mrb[0].mxu0
      %429 = vmatprep.mubr.bf16.mxu0 0
      %430 = vmatmul.mubr.bf16.gmra.mrb[0].mxu0 %v310
      %v431 = vpop.f32.mrb[0].mxu0
      %v432 = vadd.f32 0.0, %v431
      %v433 = vpop.f32.mrb[0].mxu0
      %v434 = vpop.f32.mrb[0].mxu0
      %v435 = vadd.f32 0.0, %v434
      %v436 = vpop.f32.mrb[0].mxu0
      %437 = vmatprep.mubr.bf16.mxu0 0
      %438 = vmatmul.mubr.bf16.gmra.mrb[0].mxu0 %v311
      %v439 = vpop.f32.mrb[0].mxu0
      %v440 = vadd.f32 0.0, %v439
      %v441 = vpop.f32.mrb[0].mxu0
      %v442 = vpop.f32.mrb[0].mxu0
      %v443 = vadd.f32 0.0, %v442
      %v444 = vpop.f32.mrb[0].mxu0
      %445 = vmatprep.mubr.bf16.mxu0 0
      %446 = vmatmul.mubr.bf16.gmra.mrb[0].mxu0 %v312
      %v447 = vpop.f32.mrb[0].mxu0
      %v448 = vadd.f32 0.0, %v447
      %v449 = vpop.f32.mrb[0].mxu0
      %v450 = vpop.f32.mrb[0].mxu0
      %v451 = vadd.f32 0.0, %v450
      %v452 = vpop.f32.mrb[0].mxu0
      %453 = vmatprep.mubr.bf16.mxu0 0
      %454 = vmatmul.mubr.bf16.gmra.mrb[0].mxu0 %v313
      %v455 = vpop.f32.mrb[0].mxu0
      %v456 = vadd.f32 0.0, %v455
      %v457 = vpop.f32.mrb[0].mxu0
      %v458 = vpop.f32.mrb[0].mxu0
      %v459 = vadd.f32 0.0, %v458
      %v460 = vpop.f32.mrb[0].mxu0
      %461 = vmatprep.mubr.bf16.mxu0 0
      %462 = vmatmul.mubr.bf16.gmra.mrb[0].mxu0 %v314
      %v463 = vpop.f32.mrb[0].mxu0
      %v464 = vadd.f32 0.0, %v463
      %v465 = vpop.f32.mrb[0].mxu0
      %v466 = vpop.f32.mrb[0].mxu0
      %v467 = vadd.f32 0.0, %v466
      %v468 = vpop.f32.mrb[0].mxu0
      %469 = vmatprep.mubr.bf16.mxu0 0
      %470 = vmatmul.mubr.bf16.gmra.mrb[0].mxu0 %v315
      %v471 = vpop.f32.mrb[0].mxu0
      %v472 = vadd.f32 0.0, %v471
      %v473 = vpop.f32.mrb[0].mxu0
      %v474 = vpop.f32.mrb[0].mxu0
      %v475 = vadd.f32 0.0, %v474
      %v476 = vpop.f32.mrb[0].mxu0
      %477 = vmatprep.mubr.bf16.mxu0 0
      %478 = vmatmul.mubr.bf16.gmra.mrb[0].mxu0 %v316
      %v479 = vpop.f32.mrb[0].mxu0
      %v480 = vadd.f32 0.0, %v479
      %v481 = vpop.f32.mrb[0].mxu0
      %v482 = vpop.f32.mrb[0].mxu0
      %v483 = vadd.f32 0.0, %v482
      %v484 = vpop.f32.mrb[0].mxu0
      %485 = vmatprep.mubr.bf16.mxu0 0
      %486 = vmatmul.mubr.bf16.gmra.mrb[0].mxu0 %v317
      %v487 = vpop.f32.mrb[0].mxu0
      %v488 = vadd.f32 0.0, %v487
      %v489 = vpop.f32.mrb[0].mxu0
      %v490 = vpop.f32.mrb[0].mxu0
      %v491 = vadd.f32 0.0, %v490
      %v492 = vpop.f32.mrb[0].mxu0
      %493 = vmatprep.mubr.bf16.mxu0 0
      %494 = vmatmul.mubr.bf16.gmra.mrb[0].mxu0 %v318
      %v495 = vpop.f32.mrb[0].mxu0
      %v496 = vadd.f32 0.0, %v495
      %v497 = vpop.f32.mrb[0].mxu0
      %v498 = vpop.f32.mrb[0].mxu0
      %v499 = vadd.f32 0.0, %v498
      %v500 = vpop.f32.mrb[0].mxu0
      %501 = vmatprep.mubr.bf16.mxu0 0
      %502 = vmatmul.mubr.bf16.gmra.mrb[0].mxu0 %v319
      %v503 = vpop.f32.mrb[0].mxu0
      %v504 = vadd.f32 0.0, %v503
      %v505 = vpop.f32.mrb[0].mxu0
      %v506 = vpop.f32.mrb[0].mxu0
      %v507 = vadd.f32 0.0, %v506
      %v508 = vpop.f32.mrb[0].mxu0
      %509 = vmatprep.mubr.bf16.mxu0 0
      %510 = vmatmul.mubr.bf16.gmra.mrb[0].mxu0 %v320
      %v511 = vpop.f32.mrb[0].mxu0
      %v512 = vadd.f32 0.0, %v511
      %v513 = vpop.f32.mrb[0].mxu0
      %v514 = vpop.f32.mrb[0].mxu0
      %v515 = vadd.f32 0.0, %v514
      %v516 = vpop.f32.mrb[0].mxu0
      %517 = vmatprep.mubr.bf16.mxu0 0
      %518 = vmatmul.mubr.bf16.gmra.mrb[0].mxu0 %v321
      %v519 = vpop.f32.mrb[0].mxu0
      %v520 = vadd.f32 0.0, %v519
      %v521 = vpop.f32.mrb[0].mxu0
      %v522 = vpop.f32.mrb[0].mxu0
      %v523 = vadd.f32 0.0, %v522
      %v524 = vpop.f32.mrb[0].mxu0
      %525 = vmatprep.mubr.bf16.mxu0 0
      %526 = vmatmul.mubr.bf16.gmra.mrb[0].mxu0 %v322
      %v527 = vpop.f32.mrb[0].mxu0
      %v528 = vadd.f32 0.0, %v527
      %v529 = vpop.f32.mrb[0].mxu0
      %v530 = vpop.f32.mrb[0].mxu0
      %v531 = vadd.f32 0.0, %v530
      %v532 = vpop.f32.mrb[0].mxu0
      %533 = vmatprep.mubr.bf16.mxu0 0
      %534 = vmatmul.mubr.bf16.gmra.mrb[0].mxu0 %v323
      %v535 = vpop.f32.mrb[0].mxu0
      %v536 = vadd.f32 0.0, %v535
      %v537 = vpop.f32.mrb[0].mxu0
      %v538 = vpop.f32.mrb[0].mxu0
      %v539 = vadd.f32 0.0, %v538
      %v540 = vpop.f32.mrb[0].mxu0
      %541 = vmatprep.mubr.bf16.mxu0 0
      %542 = vmatmul.mubr.bf16.gmra.mrb[0].mxu0 %v324
      %v543 = vpop.f32.mrb[0].mxu0
      %v544 = vadd.f32 0.0, %v543
      %v545 = vpop.f32.mrb[0].mxu0
      %v546 = vpop.f32.mrb[0].mxu0
      %v547 = vadd.f32 0.0, %v546
      %v548 = vpop.f32.mrb[0].mxu0
      %549 = vdwg.mxu0
      %v550 = vld [vmem:[%s188] sm:$0xff]
      %v551 = vld [vmem:[%s188 + $0x8] sm:$0xff]
      %v552 = vld [vmem:[%s188 + $0x10] sm:$0xff]
      %v553 = vld [vmem:[%s188 + $0x18] sm:$0xff]
      %v554 = vld [vmem:[%s188 + $0x20] sm:$0xff]
      %v555 = vld [vmem:[%s188 + $0x28] sm:$0xff]
      %v556 = vld [vmem:[%s188 + $0x30] sm:$0xff]
      %v557 = vld [vmem:[%s188 + $0x38] sm:$0xff]
      %v558 = vld [vmem:[%s188 + $0x40] sm:$0xff]
      %v559 = vld [vmem:[%s188 + $0x48] sm:$0xff]
      %v560 = vld [vmem:[%s188 + $0x50] sm:$0xff]
      %v561 = vld [vmem:[%s188 + $0x58] sm:$0xff]
      %v562 = vld [vmem:[%s188 + $0x60] sm:$0xff]
      %v563 = vld [vmem:[%s188 + $0x68] sm:$0xff]
      %v564 = vld [vmem:[%s188 + $0x70] sm:$0xff]
      %v565 = vld [vmem:[%s188 + $0x78] sm:$0xff]
      %v566 = vld [vmem:[%s188 + $0x80] sm:$0xff]
      %v567 = vld [vmem:[%s188 + $0x88] sm:$0xff]
      %v568 = vld [vmem:[%s188 + $0x90] sm:$0xff]
      %v569 = vld [vmem:[%s188 + $0x98] sm:$0xff]
      %v570 = vld [vmem:[%s188 + $0xa0] sm:$0xff]
      %v571 = vld [vmem:[%s188 + $0xa8] sm:$0xff]
      %v572 = vld [vmem:[%s188 + $0xb0] sm:$0xff]
      %v573 = vld [vmem:[%s188 + $0xb8] sm:$0xff]
      %v574 = vld [vmem:[%s188 + $0xc0] sm:$0xff]
      %v575 = vld [vmem:[%s188 + $0xc8] sm:$0xff]
      %v576 = vld [vmem:[%s188 + $0xd0] sm:$0xff]
      %v577 = vld [vmem:[%s188 + $0xd8] sm:$0xff]
      %v578 = vld [vmem:[%s188 + $0xe0] sm:$0xff]
      %v579 = vld [vmem:[%s188 + $0xe8] sm:$0xff]
      %v580 = vld [vmem:[%s188 + $0xf0] sm:$0xff]
      %v581 = vld [vmem:[%s188 + $0xf8] sm:$0xff]
      %583 = vset.pattern.permute.xlu0 0
      %584 = vperm.xlu0 %583, %v550
      %v585 = vpop.permute.xlu0 %584
      %588 = vset.pattern.permute.xlu0 0
      %589 = vperm.xlu0 %588, %v551
      %v590 = vpop.permute.xlu0 %589
      %593 = vset.pattern.permute.xlu0 0
      %594 = vperm.xlu0 %593, %v552
      %v595 = vpop.permute.xlu0 %594
      %598 = vset.pattern.permute.xlu0 0
      %599 = vperm.xlu0 %598, %v553
      %v600 = vpop.permute.xlu0 %599
      %603 = vset.pattern.permute.xlu0 0
      %604 = vperm.xlu0 %603, %v554
      %v605 = vpop.permute.xlu0 %604
      %608 = vset.pattern.permute.xlu0 0
      %609 = vperm.xlu0 %608, %v555
      %v610 = vpop.permute.xlu0 %609
      %613 = vset.pattern.permute.xlu0 0
      %614 = vperm.xlu0 %613, %v556
      %v615 = vpop.permute.xlu0 %614
      %618 = vset.pattern.permute.xlu0 0
      %619 = vperm.xlu0 %618, %v557
      %v620 = vpop.permute.xlu0 %619
      %623 = vset.pattern.permute.xlu0 0
      %624 = vperm.xlu0 %623, %v558
      %v625 = vpop.permute.xlu0 %624
      %628 = vset.pattern.permute.xlu0 0
      %629 = vperm.xlu0 %628, %v559
      %v630 = vpop.permute.xlu0 %629
      %633 = vset.pattern.permute.xlu0 0
      %634 = vperm.xlu0 %633, %v560
      %v635 = vpop.permute.xlu0 %634
      %638 = vset.pattern.permute.xlu0 0
      %639 = vperm.xlu0 %638, %v561
      %v640 = vpop.permute.xlu0 %639
      %643 = vset.pattern.permute.xlu0 0
      %644 = vperm.xlu0 %643, %v562
      %v645 = vpop.permute.xlu0 %644
      %648 = vset.pattern.permute.xlu0 0
      %649 = vperm.xlu0 %648, %v563
      %v650 = vpop.permute.xlu0 %649
      %653 = vset.pattern.permute.xlu0 0
      %654 = vperm.xlu0 %653, %v564
      %v655 = vpop.permute.xlu0 %654
      %658 = vset.pattern.permute.xlu0 0
      %659 = vperm.xlu0 %658, %v565
      %v660 = vpop.permute.xlu0 %659
      %663 = vset.pattern.permute.xlu0 0
      %664 = vperm.xlu0 %663, %v566
      %v665 = vpop.permute.xlu0 %664
      %668 = vset.pattern.permute.xlu0 0
      %669 = vperm.xlu0 %668, %v567
      %v670 = vpop.permute.xlu0 %669
      %673 = vset.pattern.permute.xlu0 0
      %674 = vperm.xlu0 %673, %v568
      %v675 = vpop.permute.xlu0 %674
      %678 = vset.pattern.permute.xlu0 0
      %679 = vperm.xlu0 %678, %v569
      %v680 = vpop.permute.xlu0 %679
      %683 = vset.pattern.permute.xlu0 0
      %684 = vperm.xlu0 %683, %v570
      %v685 = vpop.permute.xlu0 %684
      %688 = vset.pattern.permute.xlu0 0
      %689 = vperm.xlu0 %688, %v571
      %v690 = vpop.permute.xlu0 %689
      %693 = vset.pattern.permute.xlu0 0
      %694 = vperm.xlu0 %693, %v572
      %v695 = vpop.permute.xlu0 %694
      %698 = vset.pattern.permute.xlu0 0
      %699 = vperm.xlu0 %698, %v573
      %v700 = vpop.permute.xlu0 %699
      %703 = vset.pattern.permute.xlu0 0
      %704 = vperm.xlu0 %703, %v574
      %v705 = vpop.permute.xlu0 %704
      %708 = vset.pattern.permute.xlu0 0
      %709 = vperm.xlu0 %708, %v575
      %v710 = vpop.permute.xlu0 %709
      %713 = vset.pattern.permute.xlu0 0
      %714 = vperm.xlu0 %713, %v576
      %v715 = vpop.permute.xlu0 %714
      %718 = vset.pattern.permute.xlu0 0
      %719 = vperm.xlu0 %718, %v577
      %v720 = vpop.permute.xlu0 %719
      %723 = vset.pattern.permute.xlu0 0
      %724 = vperm.xlu0 %723, %v578
      %v725 = vpop.permute.xlu0 %724
      %728 = vset.pattern.permute.xlu0 0
      %729 = vperm.xlu0 %728, %v579
      %v730 = vpop.permute.xlu0 %729
      %733 = vset.pattern.permute.xlu0 0
      %734 = vperm.xlu0 %733, %v580
      %v735 = vpop.permute.xlu0 %734
      %738 = vset.pattern.permute.xlu0 0
      %739 = vperm.xlu0 %738, %v581
      %v740 = vpop.permute.xlu0 %739
      %v742 = vmul.f32 %v424, %v585
      %v743 = vmul.f32 %v427, %v590
      %v744 = vmul.f32 %v432, %v595
      %v745 = vmul.f32 %v435, %v600
      %v746 = vmul.f32 %v440, %v605
      %v747 = vmul.f32 %v443, %v610
      %v748 = vmul.f32 %v448, %v615
      %v749 = vmul.f32 %v451, %v620
      %v750 = vmul.f32 %v456, %v625
      %v751 = vmul.f32 %v459, %v630
      %v752 = vmul.f32 %v464, %v635
      %v753 = vmul.f32 %v467, %v640
      %v754 = vmul.f32 %v472, %v645
      %v755 = vmul.f32 %v475, %v650
      %v756 = vmul.f32 %v480, %v655
      %v757 = vmul.f32 %v483, %v660
      %v758 = vmul.f32 %v488, %v665
      %v759 = vmul.f32 %v491, %v670
      %v760 = vmul.f32 %v496, %v675
      %v761 = vmul.f32 %v499, %v680
      %v762 = vmul.f32 %v504, %v685
      %v763 = vmul.f32 %v507, %v690
      %v764 = vmul.f32 %v512, %v695
      %v765 = vmul.f32 %v515, %v700
      %v766 = vmul.f32 %v520, %v705
      %v767 = vmul.f32 %v523, %v710
      %v768 = vmul.f32 %v528, %v715
      %v769 = vmul.f32 %v531, %v720
      %v770 = vmul.f32 %v536, %v725
      %v771 = vmul.f32 %v539, %v730
      %v772 = vmul.f32 %v544, %v735
      %v773 = vmul.f32 %v547, %v740
      %v774 = vpack.c.bf16 %v743, %v742
      %v775 = vpack.c.bf16 %v745, %v744
      %v776 = vpack.c.bf16 %v747, %v746
      %v777 = vpack.c.bf16 %v749, %v748
      %v778 = vpack.c.bf16 %v751, %v750
      %v779 = vpack.c.bf16 %v753, %v752
      %v780 = vpack.c.bf16 %v755, %v754
      %v781 = vpack.c.bf16 %v757, %v756
      %v782 = vpack.c.bf16 %v759, %v758
      %v783 = vpack.c.bf16 %v761, %v760
      %v784 = vpack.c.bf16 %v763, %v762
      %v785 = vpack.c.bf16 %v765, %v764
      %v786 = vpack.c.bf16 %v767, %v766
      %v787 = vpack.c.bf16 %v769, %v768
      %v788 = vpack.c.bf16 %v771, %v770
      %v789 = vpack.c.bf16 %v773, %v772
      %v806 = vunpack.c.l.b16 %v774
      %v807 = vunpack.c.h.b16 %v774
      %v808 = vunpack.c.l.b16 %v775
      %v809 = vunpack.c.h.b16 %v775
      %v810 = vunpack.c.l.b16 %v776
      %v811 = vunpack.c.h.b16 %v776
      %v812 = vunpack.c.l.b16 %v777
      %v813 = vunpack.c.h.b16 %v777
      %v814 = vunpack.c.l.b16 %v778
      %v815 = vunpack.c.h.b16 %v778
      %v816 = vunpack.c.l.b16 %v779
      %v817 = vunpack.c.h.b16 %v779
      %v818 = vunpack.c.l.b16 %v780
      %v819 = vunpack.c.h.b16 %v780
      %v820 = vunpack.c.l.b16 %v781
      %v821 = vunpack.c.h.b16 %v781
      %v822 = vunpack.c.l.b16 %v782
      %v823 = vunpack.c.h.b16 %v782
      %v824 = vunpack.c.l.b16 %v783
      %v825 = vunpack.c.h.b16 %v783
      %v826 = vunpack.c.l.b16 %v784
      %v827 = vunpack.c.h.b16 %v784
      %v828 = vunpack.c.l.b16 %v785
      %v829 = vunpack.c.h.b16 %v785
      %v830 = vunpack.c.l.b16 %v786
      %v831 = vunpack.c.h.b16 %v786
      %v832 = vunpack.c.l.b16 %v787
      %v833 = vunpack.c.h.b16 %v787
      %v834 = vunpack.c.l.b16 %v788
      %v835 = vunpack.c.h.b16 %v788
      %v836 = vunpack.c.l.b16 %v789
      %v837 = vunpack.c.h.b16 %v789
      %v838 = vpack.c.b16 %v806, %v806
      %v839 = vpack.c.b16 %v807, %v807
      %v840 = vpack.c.b16 %v808, %v808
      %v841 = vpack.c.b16 %v809, %v809
      %v842 = vpack.c.b16 %v810, %v810
      %v843 = vpack.c.b16 %v811, %v811
      %v844 = vpack.c.b16 %v812, %v812
      %v845 = vpack.c.b16 %v813, %v813
      %v846 = vpack.c.b16 %v814, %v814
      %v847 = vpack.c.b16 %v815, %v815
      %v848 = vpack.c.b16 %v816, %v816
      %v849 = vpack.c.b16 %v817, %v817
      %v850 = vpack.c.b16 %v818, %v818
      %v851 = vpack.c.b16 %v819, %v819
      %v852 = vpack.c.b16 %v820, %v820
      %v853 = vpack.c.b16 %v821, %v821
      %v854 = vpack.c.b16 %v822, %v822
      %v855 = vpack.c.b16 %v823, %v823
      %v856 = vpack.c.b16 %v824, %v824
      %v857 = vpack.c.b16 %v825, %v825
      %v858 = vpack.c.b16 %v826, %v826
      %v859 = vpack.c.b16 %v827, %v827
      %v860 = vpack.c.b16 %v828, %v828
      %v861 = vpack.c.b16 %v829, %v829
      %v862 = vpack.c.b16 %v830, %v830
      %v863 = vpack.c.b16 %v831, %v831
      %v864 = vpack.c.b16 %v832, %v832
      %v865 = vpack.c.b16 %v833, %v833
      %v866 = vpack.c.b16 %v834, %v834
      %v867 = vpack.c.b16 %v835, %v835
      %v868 = vpack.c.b16 %v836, %v836
      %v869 = vpack.c.b16 %v837, %v837
      %902 = vst [vmem:[%s194] sm:$0xf] %v838
      %903 = vst [vmem:[%s194 + $0x4] sm:$0xf] %v839
      %904 = vst [vmem:[%s194 + $0x8] sm:$0xf] %v840
      %905 = vst [vmem:[%s194 + $0xc] sm:$0xf] %v841
      %906 = vst [vmem:[%s194 + $0x10] sm:$0xf] %v842
      %907 = vst [vmem:[%s194 + $0x14] sm:$0xf] %v843
      %908 = vst [vmem:[%s194 + $0x18] sm:$0xf] %v844
      %909 = vst [vmem:[%s194 + $0x1c] sm:$0xf] %v845
      %910 = vst [vmem:[%s194 + $0x20] sm:$0xf] %v846
      %911 = vst [vmem:[%s194 + $0x24] sm:$0xf] %v847
      %912 = vst [vmem:[%s194 + $0x28] sm:$0xf] %v848
      %913 = vst [vmem:[%s194 + $0x2c] sm:$0xf] %v849
      %914 = vst [vmem:[%s194 + $0x30] sm:$0xf] %v850
      %915 = vst [vmem:[%s194 + $0x34] sm:$0xf] %v851
      %916 = vst [vmem:[%s194 + $0x38] sm:$0xf] %v852
      %917 = vst [vmem:[%s194 + $0x3c] sm:$0xf] %v853
      %918 = vst [vmem:[%s194 + $0x40] sm:$0xf] %v854
      %919 = vst [vmem:[%s194 + $0x44] sm:$0xf] %v855
      %920 = vst [vmem:[%s194 + $0x48] sm:$0xf] %v856
      %921 = vst [vmem:[%s194 + $0x4c] sm:$0xf] %v857
      %922 = vst [vmem:[%s194 + $0x50] sm:$0xf] %v858
      %923 = vst [vmem:[%s194 + $0x54] sm:$0xf] %v859
      %924 = vst [vmem:[%s194 + $0x58] sm:$0xf] %v860
      %925 = vst [vmem:[%s194 + $0x5c] sm:$0xf] %v861
      %926 = vst [vmem:[%s194 + $0x60] sm:$0xf] %v862
      %927 = vst [vmem:[%s194 + $0x64] sm:$0xf] %v863
      %928 = vst [vmem:[%s194 + $0x68] sm:$0xf] %v864
      %929 = vst [vmem:[%s194 + $0x6c] sm:$0xf] %v865
      %930 = vst [vmem:[%s194 + $0x70] sm:$0xf] %v866
      %931 = vst [vmem:[%s194 + $0x74] sm:$0xf] %v867
      %932 = vst [vmem:[%s194 + $0x78] sm:$0xf] %v868
      %933 = vst [vmem:[%s194 + $0x7c] sm:$0xf] %v869
      %s934 = smul.u32 32, %s14
      %p935 = scmp.lt.s32.totalorder %s934, 63
      %s936 = scalar_select %p935, %s934, 63
      %s937 = smul.addr %s936, 4
      %s938 = scalar_lea.vmem %s3, %s937
      // Predicated region
      $region33: #{elliptic_gnn_forward.3} parent=31 // pred_check
        %p939 = pneg %p105
      $region34: #{elliptic_gnn_forward.3} parent=31 // pred_check_branch
        %941 = sbr.rel (%p939) target = $region36
      $region35: #{elliptic_gnn_forward.3} parent=31 // pred_region
        %s942 = smul.u32 32, %s14
      $region36: #{elliptic_gnn_forward.3} parent=31 // pred_fallthru
        _
    $region32: #{elliptic_gnn_forward.3} parent=5 // pred_fallthru
      _
    %p943 = scmp.le.s32.totalorder 2, %s9
    // Predicated region
    $region37: #{elliptic_gnn_forward.3} parent=5 // pred_check
      %p944 = pneg %p943
    $region38: #{elliptic_gnn_forward.3} parent=5 // pred_check_branch
      %946 = sbr.rel (%p944) target = $region40
    $region39: #{elliptic_gnn_forward.3} parent=5 // pred_region
      %s947 = ssub.s32 %s9, 2
      // Predicated region
      $region41: #{elliptic_gnn_forward.3} parent=39 // pred_check
        %p948 = pneg %p111
      $region42: #{elliptic_gnn_forward.3} parent=39 // pred_check_branch
        %950 = sbr.rel (%p948) target = $region44
      $region43: #{elliptic_gnn_forward.3} parent=39 // pred_region
        %s951 = smul.u32 32, %s15
        %p952 = scmp.lt.s32.totalorder %s951, 63
        %s953 = scalar_select %p952, %s951, 63
        %s954 = smul.addr %s953, 4
        %s955 = scalar_lea.vmem %s3, %s954
      $region44: #{elliptic_gnn_forward.3} parent=39 // pred_fallthru
        _
    $region40: #{elliptic_gnn_forward.3} parent=5 // pred_fallthru
      _
  $region6: #{elliptic_gnn_forward.3} parent=0 // loop_footer
    %s13 = sadd.s32 1, %s9
  $region7: #{elliptic_gnn_forward.3} parent=0 // loop_footer_branch
    %8 = sbr.rel target = $region3
  $region8: #{elliptic_gnn_forward.3} parent=0 // loop_exit
    _

// kernel: elliptic_gnn_forward.4
$region0: #{elliptic_gnn_forward.4}
  #allocation0 [shape = 'u32[]', space=smem, size = 0x4, offset = 0x4, fixed_abs, tag = 'smem constant byte address 0x4 - core index']
  #allocation1 [shape = 'u32[144,128]{1,0:T(1,128)}', space=vmem, size = 0x12000, scoped, tag = 'internal scratch']
  #allocation2 [shape = 'f32[256,128]{1,0:T(8,128)}', space=vmem, size = 0x20000, scoped, tag = 'scratch operand']
  %s0 = inlined_call_operand.vmem [shape: bf16[512,512], index: 0, kind: input, shape index: {}]
  %s1 = inlined_call_operand.vmem [shape: bf16[512,128], index: 1, kind: input, shape index: {}]
  %s2 = inlined_call_operand.vmem [shape: f32[512,1], index: 2, kind: input, shape index: {}]
  %s3 = inlined_call_operand.vmem [shape: f32[1,128], index: 3, kind: input, shape index: {}]
  %s4 = inlined_call_operand.vmem [shape: bf16[128,128], index: 4, kind: input, shape index: {}]
  %s5 = inlined_call_operand.vmem [shape: f32[1,128], index: 5, kind: input, shape index: {}]
  %s6 = inlined_call_operand.vmem [shape: bf16[512,128], index: 6, kind: output, shape index: {}]
  %s7 = sld [smem:[#allocation0]]
  $region65: #{elliptic_gnn_forward.4} parent=0
    _
  %s9 = ssub.s32 1, %s7
  %s10 = scalar_select 0, %s9, %s7
  loop: start=0, step=1, limit=4
  $region2: #{elliptic_gnn_forward.4} parent=0 // loop_pre_header
    _
  $region3: #{elliptic_gnn_forward.4} parent=0 // loop_header
    %s12 = sphi 0, %s16
    %p13 = scmp.ge.s32.totalorder %s12, 4
    %s19 = sphi 0, %s31
    %s20 = sphi 0, %s27
    %s21 = sphi 0, %s19
    %s22 = sphi 0, %s20
    %s23 = sphi 0, %s21
    %s24 = sphi 0, %s22
    %s36 = sphi 0, %s38
    %s39 = sphi 0, %s36
    %s40 = sphi 0, %s39
    %s56 = sphi 0, %s40
    %s60 = sphi 0, %s60
    %s62 = sphi 0, %s60
    %s63 = sphi 0, %s62
    %s77 = sphi 0, %s63
    %s83 = sphi 0, %s85
    %s86 = sphi 0, %s83
    %s87 = sphi 0, %s86
    %s103 = sphi 0, %s87
    %s107 = sphi 0, %s107
    %s109 = sphi 0, %s107
    %s110 = sphi 0, %s109
    %s124 = sphi 0, %s110
    %s128 = sphi 0, %s128
    %s130 = sphi 0, %s128
    %s131 = sphi 0, %s130
    %s145 = sphi 0, %s131
    %s149 = sphi 0, %s149
    %s151 = sphi 0, %s149
    %s152 = sphi 0, %s151
    %s166 = sphi 0, %s152
    %s172 = sphi 0, %s174
    %s175 = sphi 0, %s172
    %s176 = sphi 0, %s175
    %s192 = sphi 0, %s176
  $region4: #{elliptic_gnn_forward.4} parent=0 // loop_header_branch
    %15 = sbr.rel (%p13) target = $region8
  $region5: #{elliptic_gnn_forward.4} parent=0 // loop_body
    %s17 = ssub.s32 %s12, 1
    %s18 = ssub.s32 %s12, 2
    %s25 = sadd.s32 1, %s20
    %p26 = scmp.ge.s32.totalorder %s25, 1
    %s27 = scalar_select %p26, 0, %s25
    %s28 = sadd.s32 1, %s19
    %s29 = scalar_select %p26, %s28, %s19
    %p30 = scmp.ge.s32.totalorder %s29, 2
    %s31 = scalar_select %p30, 0, %s29
    %s32 = ssub.s32 %s19, %s31
    %s33 = ssub.s32 %s20, %s27
    %s34 = sor.u32 %s32, %s33
    %p35 = scmp.eq.s32.totalorder %s34, 0
    %s37 = sadd.s32 %s36, 1
    %s38 = scalar_select %p35, %s36, %s37
    %p41 = pneg %p35
    %p42 = scmp.eq.s32.totalorder %s12, 1
    %p43 = por %p41, %p42
    %p44 = scmp.ne.s32.totalorder %s36, %s39
    %p45 = scmp.eq.s32.totalorder %s12, 0
    %p46 = por %p44, %p45
    %p47 = scmp.ne.s32.totalorder %s36, %s39
    %p48 = scmp.eq.s32.totalorder %s17, 1
    %p49 = por %p47, %p48
    %p50 = scmp.ne.s32.totalorder %s39, %s40
    %p51 = scmp.eq.s32.totalorder %s17, 0
    %p52 = por %p50, %p51
    %p53 = scmp.ne.s32.totalorder %s39, %s40
    %p54 = scmp.eq.s32.totalorder %s18, 1
    %p55 = por %p53, %p54
    %p57 = scmp.ne.s32.totalorder %s40, %s56
    %p58 = scmp.eq.s32.totalorder %s18, 0
    %p59 = por %p57, %p58
    %s61 = sadd.s32 %s60, 1
    %p64 = scmp.eq.s32.totalorder %s12, 1
    %p65 = scmp.ne.s32.totalorder %s60, %s62
    %p66 = scmp.eq.s32.totalorder %s12, 0
    %p67 = por %p65, %p66
    %p68 = scmp.ne.s32.totalorder %s60, %s62
    %p69 = scmp.eq.s32.totalorder %s17, 1
    %p70 = por %p68, %p69
    %p71 = scmp.ne.s32.totalorder %s62, %s63
    %p72 = scmp.eq.s32.totalorder %s17, 0
    %p73 = por %p71, %p72
    %p74 = scmp.ne.s32.totalorder %s62, %s63
    %p75 = scmp.eq.s32.totalorder %s18, 1
    %p76 = por %p74, %p75
    %p78 = scmp.ne.s32.totalorder %s63, %s77
    %p79 = scmp.eq.s32.totalorder %s18, 0
    %p80 = por %p78, %p79
    %s81 = ssub.s32 %s19, %s31
    %p82 = scmp.eq.s32.totalorder %s81, 0
    %s84 = sadd.s32 %s83, 1
    %s85 = scalar_select %p82, %s83, %s84
    %p88 = pneg %p82
    %p89 = scmp.eq.s32.totalorder %s12, 1
    %p90 = por %p88, %p89
    %p91 = scmp.ne.s32.totalorder %s83, %s86
    %p92 = scmp.eq.s32.totalorder %s12, 0
    %p93 = por %p91, %p92
    %p94 = scmp.ne.s32.totalorder %s83, %s86
    %p95 = scmp.eq.s32.totalorder %s17, 1
    %p96 = por %p94, %p95
    %p97 = scmp.ne.s32.totalorder %s86, %s87
    %p98 = scmp.eq.s32.totalorder %s17, 0
    %p99 = por %p97, %p98
    %p100 = scmp.ne.s32.totalorder %s86, %s87
    %p101 = scmp.eq.s32.totalorder %s18, 1
    %p102 = por %p100, %p101
    %p104 = scmp.ne.s32.totalorder %s87, %s103
    %p105 = scmp.eq.s32.totalorder %s18, 0
    %p106 = por %p104, %p105
    %s108 = sadd.s32 %s107, 1
    %p111 = scmp.eq.s32.totalorder %s12, 1
    %p112 = scmp.ne.s32.totalorder %s107, %s109
    %p113 = scmp.eq.s32.totalorder %s12, 0
    %p114 = por %p112, %p113
    %p115 = scmp.ne.s32.totalorder %s107, %s109
    %p116 = scmp.eq.s32.totalorder %s17, 1
    %p117 = por %p115, %p116
    %p118 = scmp.ne.s32.totalorder %s109, %s110
    %p119 = scmp.eq.s32.totalorder %s17, 0
    %p120 = por %p118, %p119
    %p121 = scmp.ne.s32.totalorder %s109, %s110
    %p122 = scmp.eq.s32.totalorder %s18, 1
    %p123 = por %p121, %p122
    %p125 = scmp.ne.s32.totalorder %s110, %s124
    %p126 = scmp.eq.s32.totalorder %s18, 0
    %p127 = por %p125, %p126
    %s129 = sadd.s32 %s128, 1
    %p132 = scmp.eq.s32.totalorder %s12, 1
    %p133 = scmp.ne.s32.totalorder %s128, %s130
    %p134 = scmp.eq.s32.totalorder %s12, 0
    %p135 = por %p133, %p134
    %p136 = scmp.ne.s32.totalorder %s128, %s130
    %p137 = scmp.eq.s32.totalorder %s17, 1
    %p138 = por %p136, %p137
    %p139 = scmp.ne.s32.totalorder %s130, %s131
    %p140 = scmp.eq.s32.totalorder %s17, 0
    %p141 = por %p139, %p140
    %p142 = scmp.ne.s32.totalorder %s130, %s131
    %p143 = scmp.eq.s32.totalorder %s18, 1
    %p144 = por %p142, %p143
    %p146 = scmp.ne.s32.totalorder %s131, %s145
    %p147 = scmp.eq.s32.totalorder %s18, 0
    %p148 = por %p146, %p147
    %s150 = sadd.s32 %s149, 1
    %p153 = scmp.eq.s32.totalorder %s12, 1
    %p154 = scmp.ne.s32.totalorder %s149, %s151
    %p155 = scmp.eq.s32.totalorder %s12, 0
    %p156 = por %p154, %p155
    %p157 = scmp.ne.s32.totalorder %s149, %s151
    %p158 = scmp.eq.s32.totalorder %s17, 1
    %p159 = por %p157, %p158
    %p160 = scmp.ne.s32.totalorder %s151, %s152
    %p161 = scmp.eq.s32.totalorder %s17, 0
    %p162 = por %p160, %p161
    %p163 = scmp.ne.s32.totalorder %s151, %s152
    %p164 = scmp.eq.s32.totalorder %s18, 1
    %p165 = por %p163, %p164
    %p167 = scmp.ne.s32.totalorder %s152, %s166
    %p168 = scmp.eq.s32.totalorder %s18, 0
    %p169 = por %p167, %p168
    %s170 = ssub.s32 %s19, %s31
    %p171 = scmp.eq.s32.totalorder %s170, 0
    %s173 = sadd.s32 %s172, 1
    %s174 = scalar_select %p171, %s172, %s173
    %p177 = pneg %p171
    %p178 = scmp.eq.s32.totalorder %s12, 1
    %p179 = por %p177, %p178
    %p180 = scmp.ne.s32.totalorder %s172, %s175
    %p181 = scmp.eq.s32.totalorder %s12, 0
    %p182 = por %p180, %p181
    %p183 = scmp.ne.s32.totalorder %s172, %s175
    %p184 = scmp.eq.s32.totalorder %s17, 1
    %p185 = por %p183, %p184
    %p186 = scmp.ne.s32.totalorder %s175, %s176
    %p187 = scmp.eq.s32.totalorder %s17, 0
    %p188 = por %p186, %p187
    %p189 = scmp.ne.s32.totalorder %s175, %s176
    %p190 = scmp.eq.s32.totalorder %s18, 1
    %p191 = por %p189, %p190
    %p193 = scmp.ne.s32.totalorder %s176, %s192
    %p194 = scmp.eq.s32.totalorder %s18, 0
    %p195 = por %p193, %p194
    %p196 = scmp.le.s32.totalorder 1, %s12
    %p197 = scmp.lt.s32.totalorder %s12, 3
    %p198 = pnand %p196, %p197
    %p199 = pneg %p198
    // Predicated region
    $region9: #{elliptic_gnn_forward.4} parent=5 // pred_check
      _
    $region10: #{elliptic_gnn_forward.4} parent=5 // pred_check_branch
      %201 = sbr.rel (%p198) target = $region12
    $region11: #{elliptic_gnn_forward.4} parent=5 // pred_region
      %s202 = ssub.s32 %s12, 1
      // Predicated region
      $region13: #{elliptic_gnn_forward.4} parent=11 // pred_check
        %p203 = pneg %p73
      $region14: #{elliptic_gnn_forward.4} parent=11 // pred_check_branch
        %205 = sbr.rel (%p203) target = $region16
      $region15: #{elliptic_gnn_forward.4} parent=11 // pred_region
        _
      $region16: #{elliptic_gnn_forward.4} parent=11 // pred_fallthru
        _
      // Predicated region
      $region17: #{elliptic_gnn_forward.4} parent=11 // pred_check
        %p206 = pneg %p120
      $region18: #{elliptic_gnn_forward.4} parent=11 // pred_check_branch
        %208 = sbr.rel (%p206) target = $region20
      $region19: #{elliptic_gnn_forward.4} parent=11 // pred_region
        _
      $region20: #{elliptic_gnn_forward.4} parent=11 // pred_fallthru
        _
      // Predicated region
      $region21: #{elliptic_gnn_forward.4} parent=11 // pred_check
        %p209 = pneg %p141
      $region22: #{elliptic_gnn_forward.4} parent=11 // pred_check_branch
        %211 = sbr.rel (%p209) target = $region24
      $region23: #{elliptic_gnn_forward.4} parent=11 // pred_region
        _
      $region24: #{elliptic_gnn_forward.4} parent=11 // pred_fallthru
        _
      // Predicated region
      $region25: #{elliptic_gnn_forward.4} parent=11 // pred_check
        %p212 = pneg %p162
      $region26: #{elliptic_gnn_forward.4} parent=11 // pred_check_branch
        %214 = sbr.rel (%p212) target = $region28
      $region27: #{elliptic_gnn_forward.4} parent=11 // pred_region
        _
      $region28: #{elliptic_gnn_forward.4} parent=11 // pred_fallthru
        _
    $region12: #{elliptic_gnn_forward.4} parent=5 // pred_fallthru
      _
    %p215 = scmp.lt.s32.totalorder %s12, 2
    // Predicated region
    $region29: #{elliptic_gnn_forward.4} parent=5 // pred_check
      %p216 = pneg %p215
    $region30: #{elliptic_gnn_forward.4} parent=5 // pred_check_branch
      %218 = sbr.rel (%p216) target = $region32
    $region31: #{elliptic_gnn_forward.4} parent=5 // pred_region
      // Predicated region
      $region33: #{elliptic_gnn_forward.4} parent=31 // pred_check
        %p219 = pneg %p46
      $region34: #{elliptic_gnn_forward.4} parent=31 // pred_check_branch
        %221 = sbr.rel (%p219) target = $region36
      $region35: #{elliptic_gnn_forward.4} parent=31 // pred_region
        %s222 = smul.u32 32, %s19
        %s223 = smul.u32 4, %s20
        %p224 = scmp.lt.s32.totalorder %s222, 63
        %s225 = scalar_select %p224, %s222, 63
        %p226 = scmp.lt.s32.totalorder %s223, 3
        %s227 = scalar_select %p226, %s223, 3
        %s228 = smul.addr %s225, 4
        %s229 = sadd.s32 %s227, %s228
        %s230 = smul.addr %s229, 4
        %s231 = scalar_lea.vmem %s0, %s230
        %s232 = smul.u32 32, %s19
        %s233 = smul.u32 4, %s20
      $region36: #{elliptic_gnn_forward.4} parent=31 // pred_fallthru
        _
      // Predicated region
      $region37: #{elliptic_gnn_forward.4} parent=31 // pred_check
        %p234 = pneg %p93
      $region38: #{elliptic_gnn_forward.4} parent=31 // pred_check_branch
        %236 = sbr.rel (%p234) target = $region40
      $region39: #{elliptic_gnn_forward.4} parent=31 // pred_region
        %s237 = smul.u32 32, %s19
        %p238 = scmp.lt.s32.totalorder %s237, 63
        %s239 = scalar_select %p238, %s237, 63
        %s240 = smul.addr %s239, 8
        %s241 = scalar_lea.vmem %s2, %s240
        %s242 = smul.u32 32, %s19
      $region40: #{elliptic_gnn_forward.4} parent=31 // pred_fallthru
        _
    $region32: #{elliptic_gnn_forward.4} parent=5 // pred_fallthru
      _
    %p243 = scmp.le.s32.totalorder 1, %s12
    %p244 = scmp.lt.s32.totalorder %s12, 3
    %p245 = pnand %p243, %p244
    %p246 = pneg %p245
    // Predicated region
    $region41: #{elliptic_gnn_forward.4} parent=5 // pred_check
      _
    $region42: #{elliptic_gnn_forward.4} parent=5 // pred_check_branch
      %248 = sbr.rel (%p245) target = $region44
    $region43: #{elliptic_gnn_forward.4} parent=5 // pred_region
      %s249 = ssub.s32 %s12, 1
      %s250 = smul.u32 32, %s21
      %s251 = smul.u32 4, %s22
      %p252 = scmp.lt.s32.totalorder %s250, 63
      %s253 = scalar_select %p252, %s250, 63
      %p254 = scmp.lt.s32.totalorder %s251, 3
      %s255 = scalar_select %p254, %s251, 3
      %s256 = smul.addr %s253, 4
      %s257 = sadd.s32 %s255, %s256
      %s258 = smul.addr %s257, 4
      %s259 = scalar_lea.vmem %s0, %s258
      %p260 = pneg %p52
      %p261 = pneg %p49
      %p262 = pneg %p73
      %p263 = pneg %p70
      %s264 = smul.u32 32, %s21
      %p265 = scmp.lt.s32.totalorder %s264, 63
      %s266 = scalar_select %p265, %s264, 63
      %s267 = smul.addr %s266, 8
      %s268 = scalar_lea.vmem %s2, %s267
      %p269 = pneg %p99
      %p270 = pneg %p96
      %p271 = pneg %p120
      %p272 = pneg %p117
      %p273 = pneg %p141
      %p274 = pneg %p138
      %p275 = pneg %p162
      %p276 = pneg %p159
      %p277 = pneg %p188
      %p278 = pneg %p185
      %s279 = smul.u32 32, %s21
      %p280 = scmp.lt.s32.totalorder %s279, 63
      %s281 = scalar_select %p280, %s279, 63
      %s282 = smul.addr %s281, 4
      %s283 = scalar_lea.vmem %s6, %s282
      %s284 = smul.u32 32, %s21
      %s285 = smul.u32 4, %s22
      %p286 = scmp.lt.s32.totalorder %s284, 63
      %s287 = scalar_select %p286, %s284, 63
      %p288 = scmp.lt.s32.totalorder %s285, 3
      %s289 = scalar_select %p288, %s285, 3
      %s290 = smul.addr %s287, 4
      %s291 = sadd.s32 %s289, %s290
      %s292 = smul.addr %s291, 4
      %s293 = scalar_lea.vmem %s0, %s292
      %s294 = smul.u32 32, %s21
      %s295 = smul.u32 4, %s22
      %s296 = smul.u32 32, %s21
      %p297 = scmp.lt.s32.totalorder %s296, 63
      %s298 = scalar_select %p297, %s296, 63
      %s299 = smul.addr %s298, 8
      %s300 = scalar_lea.vmem %s2, %s299
      %s301 = smul.u32 32, %s21
      %s302 = smul.u32 32, %s21
      %p303 = scmp.lt.s32.totalorder %s302, 63
      %s304 = scalar_select %p303, %s302, 63
      %s305 = smul.addr %s304, 4
      %s306 = scalar_lea.vmem %s6, %s305
      %s307 = smul.u32 32, %s21
      %p309 = scmp.eq.s32.totalorder %s22, 0
      // Predicated region
      $region45: #{elliptic_gnn_forward.4} parent=43 // pred_check
        %p310 = pneg %p309
      $region46: #{elliptic_gnn_forward.4} parent=43 // pred_check_branch
        %312 = sbr.rel (%p310) target = $region48
      $region47: #{elliptic_gnn_forward.4} parent=43 // pred_region
        %313 = vst [vmem:[#allocation2] sm:$0xff] 0.0
        %314 = vst [vmem:[#allocation2 + $0x8] sm:$0xff] 0.0
        %315 = vst [vmem:[#allocation2 + $0x10] sm:$0xff] 0.0
        %316 = vst [vmem:[#allocation2 + $0x18] sm:$0xff] 0.0
        %317 = vst [vmem:[#allocation2 + $0x20] sm:$0xff] 0.0
        %318 = vst [vmem:[#allocation2 + $0x28] sm:$0xff] 0.0
        %319 = vst [vmem:[#allocation2 + $0x30] sm:$0xff] 0.0
        %320 = vst [vmem:[#allocation2 + $0x38] sm:$0xff] 0.0
        %321 = vst [vmem:[#allocation2 + $0x40] sm:$0xff] 0.0
        %322 = vst [vmem:[#allocation2 + $0x48] sm:$0xff] 0.0
        %323 = vst [vmem:[#allocation2 + $0x50] sm:$0xff] 0.0
        %324 = vst [vmem:[#allocation2 + $0x58] sm:$0xff] 0.0
        %325 = vst [vmem:[#allocation2 + $0x60] sm:$0xff] 0.0
        %326 = vst [vmem:[#allocation2 + $0x68] sm:$0xff] 0.0
        %327 = vst [vmem:[#allocation2 + $0x70] sm:$0xff] 0.0
        %328 = vst [vmem:[#allocation2 + $0x78] sm:$0xff] 0.0
        %329 = vst [vmem:[#allocation2 + $0x80] sm:$0xff] 0.0
        %330 = vst [vmem:[#allocation2 + $0x88] sm:$0xff] 0.0
        %331 = vst [vmem:[#allocation2 + $0x90] sm:$0xff] 0.0
        %332 = vst [vmem:[#allocation2 + $0x98] sm:$0xff] 0.0
        %333 = vst [vmem:[#allocation2 + $0xa0] sm:$0xff] 0.0
        %334 = vst [vmem:[#allocation2 + $0xa8] sm:$0xff] 0.0
        %335 = vst [vmem:[#allocation2 + $0xb0] sm:$0xff] 0.0
        %336 = vst [vmem:[#allocation2 + $0xb8] sm:$0xff] 0.0
        %337 = vst [vmem:[#allocation2 + $0xc0] sm:$0xff] 0.0
        %338 = vst [vmem:[#allocation2 + $0xc8] sm:$0xff] 0.0
        %339 = vst [vmem:[#allocation2 + $0xd0] sm:$0xff] 0.0
        %340 = vst [vmem:[#allocation2 + $0xd8] sm:$0xff] 0.0
        %341 = vst [vmem:[#allocation2 + $0xe0] sm:$0xff] 0.0
        %342 = vst [vmem:[#allocation2 + $0xe8] sm:$0xff] 0.0
        %343 = vst [vmem:[#allocation2 + $0xf0] sm:$0xff] 0.0
        %344 = vst [vmem:[#allocation2 + $0xf8] sm:$0xff] 0.0
      $region48: #{elliptic_gnn_forward.4} parent=43 // pred_fallthru
        _
      %s345 = smul.u32 %s22, 512
      %v346 = vld [vmem:[#allocation2] sm:$0xff]
      %v347 = vld [vmem:[#allocation2 + $0x8] sm:$0xff]
      %v348 = vld [vmem:[#allocation2 + $0x10] sm:$0xff]
      %v349 = vld [vmem:[#allocation2 + $0x18] sm:$0xff]
      %v350 = vld [vmem:[#allocation2 + $0x20] sm:$0xff]
      %v351 = vld [vmem:[#allocation2 + $0x28] sm:$0xff]
      %v352 = vld [vmem:[#allocation2 + $0x30] sm:$0xff]
      %v353 = vld [vmem:[#allocation2 + $0x38] sm:$0xff]
      %v354 = vld [vmem:[#allocation2 + $0x40] sm:$0xff]
      %v355 = vld [vmem:[#allocation2 + $0x48] sm:$0xff]
      %v356 = vld [vmem:[#allocation2 + $0x50] sm:$0xff]
      %v357 = vld [vmem:[#allocation2 + $0x58] sm:$0xff]
      %v358 = vld [vmem:[#allocation2 + $0x60] sm:$0xff]
      %v359 = vld [vmem:[#allocation2 + $0x68] sm:$0xff]
      %v360 = vld [vmem:[#allocation2 + $0x70] sm:$0xff]
      %v361 = vld [vmem:[#allocation2 + $0x78] sm:$0xff]
      %v362 = vld [vmem:[#allocation2 + $0x80] sm:$0xff]
      %v363 = vld [vmem:[#allocation2 + $0x88] sm:$0xff]
      %v364 = vld [vmem:[#allocation2 + $0x90] sm:$0xff]
      %v365 = vld [vmem:[#allocation2 + $0x98] sm:$0xff]
      %v366 = vld [vmem:[#allocation2 + $0xa0] sm:$0xff]
      %v367 = vld [vmem:[#allocation2 + $0xa8] sm:$0xff]
      %v368 = vld [vmem:[#allocation2 + $0xb0] sm:$0xff]
      %v369 = vld [vmem:[#allocation2 + $0xb8] sm:$0xff]
      %v370 = vld [vmem:[#allocation2 + $0xc0] sm:$0xff]
      %v371 = vld [vmem:[#allocation2 + $0xc8] sm:$0xff]
      %v372 = vld [vmem:[#allocation2 + $0xd0] sm:$0xff]
      %v373 = vld [vmem:[#allocation2 + $0xd8] sm:$0xff]
      %v374 = vld [vmem:[#allocation2 + $0xe0] sm:$0xff]
      %v375 = vld [vmem:[#allocation2 + $0xe8] sm:$0xff]
      %v376 = vld [vmem:[#allocation2 + $0xf0] sm:$0xff]
      %v377 = vld [vmem:[#allocation2 + $0xf8] sm:$0xff]
      %v378 = vld [vmem:[%s293] sm:$0xff]
      %v379 = vld [vmem:[%s293 + $0x8] sm:$0xff]
      %v380 = vld [vmem:[%s293 + $0x10] sm:$0xff]
      %v381 = vld [vmem:[%s293 + $0x18] sm:$0xff]
      %v382 = vld [vmem:[%s293 + $0x20] sm:$0xff]
      %v383 = vld [vmem:[%s293 + $0x28] sm:$0xff]
      %v384 = vld [vmem:[%s293 + $0x30] sm:$0xff]
      %v385 = vld [vmem:[%s293 + $0x38] sm:$0xff]
      %v386 = vld [vmem:[%s293 + $0x40] sm:$0xff]
      %v387 = vld [vmem:[%s293 + $0x48] sm:$0xff]
      %v388 = vld [vmem:[%s293 + $0x50] sm:$0xff]
      %v389 = vld [vmem:[%s293 + $0x58] sm:$0xff]
      %v390 = vld [vmem:[%s293 + $0x60] sm:$0xff]
      %v391 = vld [vmem:[%s293 + $0x68] sm:$0xff]
      %v392 = vld [vmem:[%s293 + $0x70] sm:$0xff]
      %v393 = vld [vmem:[%s293 + $0x78] sm:$0xff]
      %v394 = vld [vmem:[%s293 + $0x80] sm:$0xff]
      %v395 = vld [vmem:[%s293 + $0x88] sm:$0xff]
      %v396 = vld [vmem:[%s293 + $0x90] sm:$0xff]
      %v397 = vld [vmem:[%s293 + $0x98] sm:$0xff]
      %v398 = vld [vmem:[%s293 + $0xa0] sm:$0xff]
      %v399 = vld [vmem:[%s293 + $0xa8] sm:$0xff]
      %v400 = vld [vmem:[%s293 + $0xb0] sm:$0xff]
      %v401 = vld [vmem:[%s293 + $0xb8] sm:$0xff]
      %v402 = vld [vmem:[%s293 + $0xc0] sm:$0xff]
      %v403 = vld [vmem:[%s293 + $0xc8] sm:$0xff]
      %v404 = vld [vmem:[%s293 + $0xd0] sm:$0xff]
      %v405 = vld [vmem:[%s293 + $0xd8] sm:$0xff]
      %v406 = vld [vmem:[%s293 + $0xe0] sm:$0xff]
      %v407 = vld [vmem:[%s293 + $0xe8] sm:$0xff]
      %v408 = vld [vmem:[%s293 + $0xf0] sm:$0xff]
      %v409 = vld [vmem:[%s293 + $0xf8] sm:$0xff]
      %v410 = vld [vmem:[%s293 + $0x100] sm:$0xff]
      %v411 = vld [vmem:[%s293 + $0x108] sm:$0xff]
      %v412 = vld [vmem:[%s293 + $0x110] sm:$0xff]
      %v413 = vld [vmem:[%s293 + $0x118] sm:$0xff]
      %v414 = vld [vmem:[%s293 + $0x120] sm:$0xff]
      %v415 = vld [vmem:[%s293 + $0x128] sm:$0xff]
      %v416 = vld [vmem:[%s293 + $0x130] sm:$0xff]
      %v417 = vld [vmem:[%s293 + $0x138] sm:$0xff]
      %v418 = vld [vmem:[%s293 + $0x140] sm:$0xff]
      %v419 = vld [vmem:[%s293 + $0x148] sm:$0xff]
      %v420 = vld [vmem:[%s293 + $0x150] sm:$0xff]
      %v421 = vld [vmem:[%s293 + $0x158] sm:$0xff]
      %v422 = vld [vmem:[%s293 + $0x160] sm:$0xff]
      %v423 = vld [vmem:[%s293 + $0x168] sm:$0xff]
      %v424 = vld [vmem:[%s293 + $0x170] sm:$0xff]
      %v425 = vld [vmem:[%s293 + $0x178] sm:$0xff]
      %v426 = vld [vmem:[%s293 + $0x180] sm:$0xff]
      %v427 = vld [vmem:[%s293 + $0x188] sm:$0xff]
      %v428 = vld [vmem:[%s293 + $0x190] sm:$0xff]
      %v429 = vld [vmem:[%s293 + $0x198] sm:$0xff]
      %v430 = vld [vmem:[%s293 + $0x1a0] sm:$0xff]
      %v431 = vld [vmem:[%s293 + $0x1a8] sm:$0xff]
      %v432 = vld [vmem:[%s293 + $0x1b0] sm:$0xff]
      %v433 = vld [vmem:[%s293 + $0x1b8] sm:$0xff]
      %v434 = vld [vmem:[%s293 + $0x1c0] sm:$0xff]
      %v435 = vld [vmem:[%s293 + $0x1c8] sm:$0xff]
      %v436 = vld [vmem:[%s293 + $0x1d0] sm:$0xff]
      %v437 = vld [vmem:[%s293 + $0x1d8] sm:$0xff]
      %v438 = vld [vmem:[%s293 + $0x1e0] sm:$0xff]
      %v439 = vld [vmem:[%s293 + $0x1e8] sm:$0xff]
      %v440 = vld [vmem:[%s293 + $0x1f0] sm:$0xff]
      %v441 = vld [vmem:[%s293 + $0x1f8] sm:$0xff]
      %s442 = sshra.s32 %s345, 3
      %s443 = sand.u32 %s345, 7
      %s444 = smul.addr %s442, 4
      %s445 = scalar_lea.vmem %s1, %s444
      %v446 = vld [vmem:[%s445] sm:$0xf]
      %v447 = vld [vmem:[%s445 + $0x4] sm:$0xf]
      %v448 = vld [vmem:[%s445 + $0x8] sm:$0xf]
      %v449 = vld [vmem:[%s445 + $0xc] sm:$0xf]
      %v450 = vld [vmem:[%s445 + $0x10] sm:$0xf]
      %v451 = vld [vmem:[%s445 + $0x14] sm:$0xf]
      %v452 = vld [vmem:[%s445 + $0x18] sm:$0xf]
      %v453 = vld [vmem:[%s445 + $0x1c] sm:$0xf]
      %v454 = vld [vmem:[%s445 + $0x20] sm:$0xf]
      %v455 = vld [vmem:[%s445 + $0x24] sm:$0xf]
      %v456 = vld [vmem:[%s445 + $0x28] sm:$0xf]
      %v457 = vld [vmem:[%s445 + $0x2c] sm:$0xf]
      %v458 = vld [vmem:[%s445 + $0x30] sm:$0xf]
      %v459 = vld [vmem:[%s445 + $0x34] sm:$0xf]
      %v460 = vld [vmem:[%s445 + $0x38] sm:$0xf]
      %v461 = vld [vmem:[%s445 + $0x3c] sm:$0xf]
      %v462 = vld [vmem:[%s445 + $0x40] sm:$0xf]
      %v463 = vld [vmem:[%s445 + $0x44] sm:$0xf]
      %v464 = vld [vmem:[%s445 + $0x48] sm:$0xf]
      %v465 = vld [vmem:[%s445 + $0x4c] sm:$0xf]
      %v466 = vld [vmem:[%s445 + $0x50] sm:$0xf]
      %v467 = vld [vmem:[%s445 + $0x54] sm:$0xf]
      %v468 = vld [vmem:[%s445 + $0x58] sm:$0xf]
      %v469 = vld [vmem:[%s445 + $0x5c] sm:$0xf]
      %v470 = vld [vmem:[%s445 + $0x60] sm:$0xf]
      %v471 = vld [vmem:[%s445 + $0x64] sm:$0xf]
      %v472 = vld [vmem:[%s445 + $0x68] sm:$0xf]
      %v473 = vld [vmem:[%s445 + $0x6c] sm:$0xf]
      %v474 = vld [vmem:[%s445 + $0x70] sm:$0xf]
      %v475 = vld [vmem:[%s445 + $0x74] sm:$0xf]
      %v476 = vld [vmem:[%s445 + $0x78] sm:$0xf]
      %v477 = vld [vmem:[%s445 + $0x7c] sm:$0xf]
      %v478 = vld [vmem:[%s445 + $0x80] sm:$0xf]
      %v479 = vld [vmem:[%s445 + $0x84] sm:$0xf]
      %v480 = vld [vmem:[%s445 + $0x88] sm:$0xf]
      %v481 = vld [vmem:[%s445 + $0x8c] sm:$0xf]
      %v482 = vld [vmem:[%s445 + $0x90] sm:$0xf]
      %v483 = vld [vmem:[%s445 + $0x94] sm:$0xf]
      %v484 = vld [vmem:[%s445 + $0x98] sm:$0xf]
      %v485 = vld [vmem:[%s445 + $0x9c] sm:$0xf]
      %v486 = vld [vmem:[%s445 + $0xa0] sm:$0xf]
      %v487 = vld [vmem:[%s445 + $0xa4] sm:$0xf]
      %v488 = vld [vmem:[%s445 + $0xa8] sm:$0xf]
      %v489 = vld [vmem:[%s445 + $0xac] sm:$0xf]
      %v490 = vld [vmem:[%s445 + $0xb0] sm:$0xf]
      %v491 = vld [vmem:[%s445 + $0xb4] sm:$0xf]
      %v492 = vld [vmem:[%s445 + $0xb8] sm:$0xf]
      %v493 = vld [vmem:[%s445 + $0xbc] sm:$0xf]
      %v494 = vld [vmem:[%s445 + $0xc0] sm:$0xf]
      %v495 = vld [vmem:[%s445 + $0xc4] sm:$0xf]
      %v496 = vld [vmem:[%s445 + $0xc8] sm:$0xf]
      %v497 = vld [vmem:[%s445 + $0xcc] sm:$0xf]
      %v498 = vld [vmem:[%s445 + $0xd0] sm:$0xf]
      %v499 = vld [vmem:[%s445 + $0xd4] sm:$0xf]
      %v500 = vld [vmem:[%s445 + $0xd8] sm:$0xf]
      %v501 = vld [vmem:[%s445 + $0xdc] sm:$0xf]
      %v502 = vld [vmem:[%s445 + $0xe0] sm:$0xf]
      %v503 = vld [vmem:[%s445 + $0xe4] sm:$0xf]
      %v504 = vld [vmem:[%s445 + $0xe8] sm:$0xf]
      %v505 = vld [vmem:[%s445 + $0xec] sm:$0xf]
      %v506 = vld [vmem:[%s445 + $0xf0] sm:$0xf]
      %v507 = vld [vmem:[%s445 + $0xf4] sm:$0xf]
      %v508 = vld [vmem:[%s445 + $0xf8] sm:$0xf]
      %v509 = vld [vmem:[%s445 + $0xfc] sm:$0xf]
      %v574 = vunpack.c.l.b16 %v378
      %v575 = vunpack.c.h.b16 %v378
      %v576 = vunpack.c.l.b16 %v379
      %v577 = vunpack.c.h.b16 %v379
      %v578 = vunpack.c.l.b16 %v380
      %v579 = vunpack.c.h.b16 %v380
      %v580 = vunpack.c.l.b16 %v381
      %v581 = vunpack.c.h.b16 %v381
      %v582 = vunpack.c.l.b16 %v382
      %v583 = vunpack.c.h.b16 %v382
      %v584 = vunpack.c.l.b16 %v383
      %v585 = vunpack.c.h.b16 %v383
      %v586 = vunpack.c.l.b16 %v384
      %v587 = vunpack.c.h.b16 %v384
      %v588 = vunpack.c.l.b16 %v385
      %v589 = vunpack.c.h.b16 %v385
      %v590 = vunpack.c.l.b16 %v386
      %v591 = vunpack.c.h.b16 %v386
      %v592 = vunpack.c.l.b16 %v387
      %v593 = vunpack.c.h.b16 %v387
      %v594 = vunpack.c.l.b16 %v388
      %v595 = vunpack.c.h.b16 %v388
      %v596 = vunpack.c.l.b16 %v389
      %v597 = vunpack.c.h.b16 %v389
      %v598 = vunpack.c.l.b16 %v390
      %v599 = vunpack.c.h.b16 %v390
      %v600 = vunpack.c.l.b16 %v391
      %v601 = vunpack.c.h.b16 %v391
      %v602 = vunpack.c.l.b16 %v392
      %v603 = vunpack.c.h.b16 %v392
      %v604 = vunpack.c.l.b16 %v393
      %v605 = vunpack.c.h.b16 %v393
      %v606 = vunpack.c.l.b16 %v394
      %v607 = vunpack.c.h.b16 %v394
      %v608 = vunpack.c.l.b16 %v395
      %v609 = vunpack.c.h.b16 %v395
      %v610 = vunpack.c.l.b16 %v396
      %v611 = vunpack.c.h.b16 %v396
      %v612 = vunpack.c.l.b16 %v397
      %v613 = vunpack.c.h.b16 %v397
      %v614 = vunpack.c.l.b16 %v398
      %v615 = vunpack.c.h.b16 %v398
      %v616 = vunpack.c.l.b16 %v399
      %v617 = vunpack.c.h.b16 %v399
      %v618 = vunpack.c.l.b16 %v400
      %v619 = vunpack.c.h.b16 %v400
      %v620 = vunpack.c.l.b16 %v401
      %v621 = vunpack.c.h.b16 %v401
      %v622 = vunpack.c.l.b16 %v402
      %v623 = vunpack.c.h.b16 %v402
      %v624 = vunpack.c.l.b16 %v403
      %v625 = vunpack.c.h.b16 %v403
      %v626 = vunpack.c.l.b16 %v404
      %v627 = vunpack.c.h.b16 %v404
      %v628 = vunpack.c.l.b16 %v405
      %v629 = vunpack.c.h.b16 %v405
      %v630 = vunpack.c.l.b16 %v406
      %v631 = vunpack.c.h.b16 %v406
      %v632 = vunpack.c.l.b16 %v407
      %v633 = vunpack.c.h.b16 %v407
      %v634 = vunpack.c.l.b16 %v408
      %v635 = vunpack.c.h.b16 %v408
      %v636 = vunpack.c.l.b16 %v409
      %v637 = vunpack.c.h.b16 %v409
      %v638 = vunpack.c.l.b16 %v410
      %v639 = vunpack.c.h.b16 %v410
      %v640 = vunpack.c.l.b16 %v411
      %v641 = vunpack.c.h.b16 %v411
      %v642 = vunpack.c.l.b16 %v412
      %v643 = vunpack.c.h.b16 %v412
      %v644 = vunpack.c.l.b16 %v413
      %v645 = vunpack.c.h.b16 %v413
      %v646 = vunpack.c.l.b16 %v414
      %v647 = vunpack.c.h.b16 %v414
      %v648 = vunpack.c.l.b16 %v415
      %v649 = vunpack.c.h.b16 %v415
      %v650 = vunpack.c.l.b16 %v416
      %v651 = vunpack.c.h.b16 %v416
      %v652 = vunpack.c.l.b16 %v417
      %v653 = vunpack.c.h.b16 %v417
      %v654 = vunpack.c.l.b16 %v418
      %v655 = vunpack.c.h.b16 %v418
      %v656 = vunpack.c.l.b16 %v419
      %v657 = vunpack.c.h.b16 %v419
      %v658 = vunpack.c.l.b16 %v420
      %v659 = vunpack.c.h.b16 %v420
      %v660 = vunpack.c.l.b16 %v421
      %v661 = vunpack.c.h.b16 %v421
      %v662 = vunpack.c.l.b16 %v422
      %v663 = vunpack.c.h.b16 %v422
      %v664 = vunpack.c.l.b16 %v423
      %v665 = vunpack.c.h.b16 %v423
      %v666 = vunpack.c.l.b16 %v424
      %v667 = vunpack.c.h.b16 %v424
      %v668 = vunpack.c.l.b16 %v425
      %v669 = vunpack.c.h.b16 %v425
      %v670 = vunpack.c.l.b16 %v426
      %v671 = vunpack.c.h.b16 %v426
      %v672 = vunpack.c.l.b16 %v427
      %v673 = vunpack.c.h.b16 %v427
      %v674 = vunpack.c.l.b16 %v428
      %v675 = vunpack.c.h.b16 %v428
      %v676 = vunpack.c.l.b16 %v429
      %v677 = vunpack.c.h.b16 %v429
      %v678 = vunpack.c.l.b16 %v430
      %v679 = vunpack.c.h.b16 %v430
      %v680 = vunpack.c.l.b16 %v431
      %v681 = vunpack.c.h.b16 %v431
      %v682 = vunpack.c.l.b16 %v432
      %v683 = vunpack.c.h.b16 %v432
      %v684 = vunpack.c.l.b16 %v433
      %v685 = vunpack.c.h.b16 %v433
      %v686 = vunpack.c.l.b16 %v434
      %v687 = vunpack.c.h.b16 %v434
      %v688 = vunpack.c.l.b16 %v435
      %v689 = vunpack.c.h.b16 %v435
      %v690 = vunpack.c.l.b16 %v436
      %v691 = vunpack.c.h.b16 %v436
      %v692 = vunpack.c.l.b16 %v437
      %v693 = vunpack.c.h.b16 %v437
      %v694 = vunpack.c.l.b16 %v438
      %v695 = vunpack.c.h.b16 %v438
      %v696 = vunpack.c.l.b16 %v439
      %v697 = vunpack.c.h.b16 %v439
      %v698 = vunpack.c.l.b16 %v440
      %v699 = vunpack.c.h.b16 %v440
      %v700 = vunpack.c.l.b16 %v441
      %v701 = vunpack.c.h.b16 %v441
      %v702 = vpack.c.b16 %v578, %v574
      %v703 = vpack.c.b16 %v579, %v575
      %v704 = vpack.c.b16 %v580, %v576
      %v705 = vpack.c.b16 %v581, %v577
      %v706 = vpack.c.b16 %v586, %v582
      %v707 = vpack.c.b16 %v587, %v583
      %v708 = vpack.c.b16 %v588, %v584
      %v709 = vpack.c.b16 %v589, %v585
      %v710 = vpack.c.b16 %v594, %v590
      %v711 = vpack.c.b16 %v595, %v591
      %v712 = vpack.c.b16 %v596, %v592
      %v713 = vpack.c.b16 %v597, %v593
      %v714 = vpack.c.b16 %v602, %v598
      %v715 = vpack.c.b16 %v603, %v599
      %v716 = vpack.c.b16 %v604, %v600
      %v717 = vpack.c.b16 %v605, %v601
      %v718 = vpack.c.b16 %v610, %v606
      %v719 = vpack.c.b16 %v611, %v607
      %v720 = vpack.c.b16 %v612, %v608
      %v721 = vpack.c.b16 %v613, %v609
      %v722 = vpack.c.b16 %v618, %v614
      %v723 = vpack.c.b16 %v619, %v615
      %v724 = vpack.c.b16 %v620, %v616
      %v725 = vpack.c.b16 %v621, %v617
      %v726 = vpack.c.b16 %v626, %v622
      %v727 = vpack.c.b16 %v627, %v623
      %v728 = vpack.c.b16 %v628, %v624
      %v729 = vpack.c.b16 %v629, %v625
      %v730 = vpack.c.b16 %v634, %v630
      %v731 = vpack.c.b16 %v635, %v631
      %v732 = vpack.c.b16 %v636, %v632
      %v733 = vpack.c.b16 %v637, %v633
      %v734 = vpack.c.b16 %v642, %v638
      %v735 = vpack.c.b16 %v643, %v639
      %v736 = vpack.c.b16 %v644, %v640
      %v737 = vpack.c.b16 %v645, %v641
      %v738 = vpack.c.b16 %v650, %v646
      %v739 = vpack.c.b16 %v651, %v647
      %v740 = vpack.c.b16 %v652, %v648
      %v741 = vpack.c.b16 %v653, %v649
      %v742 = vpack.c.b16 %v658, %v654
      %v743 = vpack.c.b16 %v659, %v655
      %v744 = vpack.c.b16 %v660, %v656
      %v745 = vpack.c.b16 %v661, %v657
      %v746 = vpack.c.b16 %v666, %v662
      %v747 = vpack.c.b16 %v667, %v663
      %v748 = vpack.c.b16 %v668, %v664
      %v749 = vpack.c.b16 %v669, %v665
      %v750 = vpack.c.b16 %v674, %v670
      %v751 = vpack.c.b16 %v675, %v671
      %v752 = vpack.c.b16 %v676, %v672
      %v753 = vpack.c.b16 %v677, %v673
      %v754 = vpack.c.b16 %v682, %v678
      %v755 = vpack.c.b16 %v683, %v679
      %v756 = vpack.c.b16 %v684, %v680
      %v757 = vpack.c.b16 %v685, %v681
      %v758 = vpack.c.b16 %v690, %v686
      %v759 = vpack.c.b16 %v691, %v687
      %v760 = vpack.c.b16 %v692, %v688
      %v761 = vpack.c.b16 %v693, %v689
      %v762 = vpack.c.b16 %v698, %v694
      %v763 = vpack.c.b16 %v699, %v695
      %v764 = vpack.c.b16 %v700, %v696
      %v765 = vpack.c.b16 %v701, %v697
      %v894 = vunpack.c.l.b16 %v446
      %v895 = vunpack.c.l.b16 %v447
      %v896 = vunpack.c.l.b16 %v448
      %v897 = vunpack.c.l.b16 %v449
      %v898 = vunpack.c.l.b16 %v450
      %v899 = vunpack.c.l.b16 %v451
      %v900 = vunpack.c.l.b16 %v452
      %v901 = vunpack.c.l.b16 %v453
      %v902 = vunpack.c.l.b16 %v454
      %v903 = vunpack.c.l.b16 %v455
      %v904 = vunpack.c.l.b16 %v456
      %v905 = vunpack.c.l.b16 %v457
      %v906 = vunpack.c.l.b16 %v458
      %v907 = vunpack.c.l.b16 %v459
      %v908 = vunpack.c.l.b16 %v460
      %v909 = vunpack.c.l.b16 %v461
      %v910 = vunpack.c.l.b16 %v462
      %v911 = vunpack.c.l.b16 %v463
      %v912 = vunpack.c.l.b16 %v464
      %v913 = vunpack.c.l.b16 %v465
      %v914 = vunpack.c.l.b16 %v466
      %v915 = vunpack.c.l.b16 %v467
      %v916 = vunpack.c.l.b16 %v468
      %v917 = vunpack.c.l.b16 %v469
      %v918 = vunpack.c.l.b16 %v470
      %v919 = vunpack.c.l.b16 %v471
      %v920 = vunpack.c.l.b16 %v472
      %v921 = vunpack.c.l.b16 %v473
      %v922 = vunpack.c.l.b16 %v474
      %v923 = vunpack.c.l.b16 %v475
      %v924 = vunpack.c.l.b16 %v476
      %v925 = vunpack.c.l.b16 %v477
      %v926 = vunpack.c.l.b16 %v478
      %v927 = vunpack.c.l.b16 %v479
      %v928 = vunpack.c.l.b16 %v480
      %v929 = vunpack.c.l.b16 %v481
      %v930 = vunpack.c.l.b16 %v482
      %v931 = vunpack.c.l.b16 %v483
      %v932 = vunpack.c.l.b16 %v484
      %v933 = vunpack.c.l.b16 %v485
      %v934 = vunpack.c.l.b16 %v486
      %v935 = vunpack.c.l.b16 %v487
      %v936 = vunpack.c.l.b16 %v488
      %v937 = vunpack.c.l.b16 %v489
      %v938 = vunpack.c.l.b16 %v490
      %v939 = vunpack.c.l.b16 %v491
      %v940 = vunpack.c.l.b16 %v492
      %v941 = vunpack.c.l.b16 %v493
      %v942 = vunpack.c.l.b16 %v494
      %v943 = vunpack.c.l.b16 %v495
      %v944 = vunpack.c.l.b16 %v496
      %v945 = vunpack.c.l.b16 %v497
      %v946 = vunpack.c.l.b16 %v498
      %v947 = vunpack.c.l.b16 %v499
      %v948 = vunpack.c.l.b16 %v500
      %v949 = vunpack.c.l.b16 %v501
      %v950 = vunpack.c.l.b16 %v502
      %v951 = vunpack.c.l.b16 %v503
      %v952 = vunpack.c.l.b16 %v504
      %v953 = vunpack.c.l.b16 %v505
      %v954 = vunpack.c.l.b16 %v506
      %v955 = vunpack.c.l.b16 %v507
      %v956 = vunpack.c.l.b16 %v508
      %v957 = vunpack.c.l.b16 %v509
      %v958 = vpack.c.b16 %v895, %v894
      %v959 = vpack.c.b16 %v897, %v896
      %v960 = vpack.c.b16 %v899, %v898
      %v961 = vpack.c.b16 %v901, %v900
      %v962 = vpack.c.b16 %v903, %v902
      %v963 = vpack.c.b16 %v905, %v904
      %v964 = vpack.c.b16 %v907, %v906
      %v965 = vpack.c.b16 %v909, %v908
      %v966 = vpack.c.b16 %v911, %v910
      %v967 = vpack.c.b16 %v913, %v912
      %v968 = vpack.c.b16 %v915, %v914
      %v969 = vpack.c.b16 %v917, %v916
      %v970 = vpack.c.b16 %v919, %v918
      %v971 = vpack.c.b16 %v921, %v920
      %v972 = vpack.c.b16 %v923, %v922
      %v973 = vpack.c.b16 %v925, %v924
      %v974 = vpack.c.b16 %v927, %v926
      %v975 = vpack.c.b16 %v929, %v928
      %v976 = vpack.c.b16 %v931, %v930
      %v977 = vpack.c.b16 %v933, %v932
      %v978 = vpack.c.b16 %v935, %v934
      %v979 = vpack.c.b16 %v937, %v936
      %v980 = vpack.c.b16 %v939, %v938
      %v981 = vpack.c.b16 %v941, %v940
      %v982 = vpack.c.b16 %v943, %v942
      %v983 = vpack.c.b16 %v945, %v944
      %v984 = vpack.c.b16 %v947, %v946
      %v985 = vpack.c.b16 %v949, %v948
      %v986 = vpack.c.b16 %v951, %v950
      %v987 = vpack.c.b16 %v953, %v952
      %v988 = vpack.c.b16 %v955, %v954
      %v989 = vpack.c.b16 %v957, %v956
      %1022 = vmatprep.subr.bf16.mxu0 0
      %1023 = vmatpush1.bf16.msra.mxu0 %v958
      %1024 = vmatprep.subr.bf16.mxu0 0
      %1025 = vmatpush1.bf16.msra.mxu0 %v959
      %1026 = vmatprep.subr.bf16.mxu0 0
      %1027 = vmatpush1.bf16.msra.mxu0 %v960
      %1028 = vmatprep.subr.bf16.mxu0 0
      %1029 = vmatpush1.bf16.msra.mxu0 %v961
      %1030 = vmatprep.subr.bf16.mxu0 0
      %1031 = vmatpush1.bf16.msra.mxu0 %v962
      %1032 = vmatprep.subr.bf16.mxu0 0
      %1033 = vmatpush1.bf16.msra.mxu0 %v963
      %1034 = vmatprep.subr.bf16.mxu0 0
      %1035 = vmatpush1.bf16.msra.mxu0 %v964
      %1036 = vmatprep.subr.bf16.mxu0 0
      %1037 = vmatpush1.bf16.msra.mxu0 %v965
      %1038 = vmatprep.subr.bf16.mxu0 0
      %1039 = vmatpush1.bf16.msra.mxu0 %v966
      %1040 = vmatprep.subr.bf16.mxu0 0
      %1041 = vmatpush1.bf16.msra.mxu0 %v967
      %1042 = vmatprep.subr.bf16.mxu0 0
      %1043 = vmatpush1.bf16.msra.mxu0 %v968
      %1044 = vmatprep.subr.bf16.mxu0 0
      %1045 = vmatpush1.bf16.msra.mxu0 %v969
      %1046 = vmatprep.subr.bf16.mxu0 0
      %1047 = vmatpush1.bf16.msra.mxu0 %v970
      %1048 = vmatprep.subr.bf16.mxu0 0
      %1049 = vmatpush1.bf16.msra.mxu0 %v971
      %1050 = vmatprep.subr.bf16.mxu0 0
      %1051 = vmatpush1.bf16.msra.mxu0 %v972
      %1052 = vmatprep.subr.bf16.mxu0 0
      %1053 = vmatpush1.bf16.msra.mxu0 %v973
      %1054 = vmatprep.mubr.bf16.mxu0 %v703
      %1055 = vmatmul.mubr.bf16.gmra.mrb[0].mxu0 %v702
      %v1056 = vpop.f32.mrb[0].mxu0
      %v1057 = vadd.f32 0.0, %v1056
      %v1058 = vpop.f32.mrb[0].mxu0
      %v1059 = vpop.f32.mrb[0].mxu0
      %v1060 = vadd.f32 0.0, %v1059
      %v1061 = vpop.f32.mrb[0].mxu0
      %1062 = vmatprep.mubr.bf16.mxu0 %v707
      %1063 = vmatmul.mubr.bf16.gmra.mrb[0].mxu0 %v706
      %v1064 = vpop.f32.mrb[0].mxu0
      %v1065 = vadd.f32 0.0, %v1064
      %v1066 = vpop.f32.mrb[0].mxu0
      %v1067 = vpop.f32.mrb[0].mxu0
      %v1068 = vadd.f32 0.0, %v1067
      %v1069 = vpop.f32.mrb[0].mxu0
      %1070 = vmatprep.mubr.bf16.mxu0 %v711
      %1071 = vmatmul.mubr.bf16.gmra.mrb[0].mxu0 %v710
      %v1072 = vpop.f32.mrb[0].mxu0
      %v1073 = vadd.f32 0.0, %v1072
      %v1074 = vpop.f32.mrb[0].mxu0
      %v1075 = vpop.f32.mrb[0].mxu0
      %v1076 = vadd.f32 0.0, %v1075
      %v1077 = vpop.f32.mrb[0].mxu0
      %1078 = vmatprep.mubr.bf16.mxu0 %v715
      %1079 = vmatmul.mubr.bf16.gmra.mrb[0].mxu0 %v714
      %v1080 = vpop.f32.mrb[0].mxu0
      %v1081 = vadd.f32 0.0, %v1080
      %v1082 = vpop.f32.mrb[0].mxu0
      %v1083 = vpop.f32.mrb[0].mxu0
      %v1084 = vadd.f32 0.0, %v1083
      %v1085 = vpop.f32.mrb[0].mxu0
      %1086 = vmatprep.mubr.bf16.mxu0 %v719
      %1087 = vmatmul.mubr.bf16.gmra.mrb[0].mxu0 %v718
      %v1088 = vpop.f32.mrb[0].mxu0
      %v1089 = vadd.f32 0.0, %v1088
      %v1090 = vpop.f32.mrb[0].mxu0
      %v1091 = vpop.f32.mrb[0].mxu0
      %v1092 = vadd.f32 0.0, %v1091
      %v1093 = vpop.f32.mrb[0].mxu0
      %1094 = vmatprep.mubr.bf16.mxu0 %v723
      %1095 = vmatmul.mubr.bf16.gmra.mrb[0].mxu0 %v722
      %v1096 = vpop.f32.mrb[0].mxu0
      %v1097 = vadd.f32 0.0, %v1096
      %v1098 = vpop.f32.mrb[0].mxu0
      %v1099 = vpop.f32.mrb[0].mxu0
      %v1100 = vadd.f32 0.0, %v1099
      %v1101 = vpop.f32.mrb[0].mxu0
      %1102 = vmatprep.mubr.bf16.mxu0 %v727
      %1103 = vmatmul.mubr.bf16.gmra.mrb[0].mxu0 %v726
      %v1104 = vpop.f32.mrb[0].mxu0
      %v1105 = vadd.f32 0.0, %v1104
      %v1106 = vpop.f32.mrb[0].mxu0
      %v1107 = vpop.f32.mrb[0].mxu0
      %v1108 = vadd.f32 0.0, %v1107
      %v1109 = vpop.f32.mrb[0].mxu0
      %1110 = vmatprep.mubr.bf16.mxu0 %v731
      %1111 = vmatmul.mubr.bf16.gmra.mrb[0].mxu0 %v730
      %v1112 = vpop.f32.mrb[0].mxu0
      %v1113 = vadd.f32 0.0, %v1112
      %v1114 = vpop.f32.mrb[0].mxu0
      %v1115 = vpop.f32.mrb[0].mxu0
      %v1116 = vadd.f32 0.0, %v1115
      %v1117 = vpop.f32.mrb[0].mxu0
      %1118 = vmatprep.mubr.bf16.mxu0 %v735
      %1119 = vmatmul.mubr.bf16.gmra.mrb[0].mxu0 %v734
      %v1120 = vpop.f32.mrb[0].mxu0
      %v1121 = vadd.f32 0.0, %v1120
      %v1122 = vpop.f32.mrb[0].mxu0
      %v1123 = vpop.f32.mrb[0].mxu0
      %v1124 = vadd.f32 0.0, %v1123
      %v1125 = vpop.f32.mrb[0].mxu0
      %1126 = vmatprep.mubr.bf16.mxu0 %v739
      %1127 = vmatmul.mubr.bf16.gmra.mrb[0].mxu0 %v738
      %v1128 = vpop.f32.mrb[0].mxu0
      %v1129 = vadd.f32 0.0, %v1128
      %v1130 = vpop.f32.mrb[0].mxu0
      %v1131 = vpop.f32.mrb[0].mxu0
      %v1132 = vadd.f32 0.0, %v1131
      %v1133 = vpop.f32.mrb[0].mxu0
      %1134 = vmatprep.mubr.bf16.mxu0 %v743
      %1135 = vmatmul.mubr.bf16.gmra.mrb[0].mxu0 %v742
      %v1136 = vpop.f32.mrb[0].mxu0
      %v1137 = vadd.f32 0.0, %v1136
      %v1138 = vpop.f32.mrb[0].mxu0
      %v1139 = vpop.f32.mrb[0].mxu0
      %v1140 = vadd.f32 0.0, %v1139
      %v1141 = vpop.f32.mrb[0].mxu0
      %1142 = vmatprep.mubr.bf16.mxu0 %v747
      %1143 = vmatmul.mubr.bf16.gmra.mrb[0].mxu0 %v746
      %v1144 = vpop.f32.mrb[0].mxu0
      %v1145 = vadd.f32 0.0, %v1144
      %v1146 = vpop.f32.mrb[0].mxu0
      %v1147 = vpop.f32.mrb[0].mxu0
      %v1148 = vadd.f32 0.0, %v1147
      %v1149 = vpop.f32.mrb[0].mxu0
      %1150 = vmatprep.mubr.bf16.mxu0 %v751
      %1151 = vmatmul.mubr.bf16.gmra.mrb[0].mxu0 %v750
      %v1152 = vpop.f32.mrb[0].mxu0
      %v1153 = vadd.f32 0.0, %v1152
      %v1154 = vpop.f32.mrb[0].mxu0
      %v1155 = vpop.f32.mrb[0].mxu0
      %v1156 = vadd.f32 0.0, %v1155
      %v1157 = vpop.f32.mrb[0].mxu0
      %1158 = vmatprep.mubr.bf16.mxu0 %v755
      %1159 = vmatmul.mubr.bf16.gmra.mrb[0].mxu0 %v754
      %v1160 = vpop.f32.mrb[0].mxu0
      %v1161 = vadd.f32 0.0, %v1160
      %v1162 = vpop.f32.mrb[0].mxu0
      %v1163 = vpop.f32.mrb[0].mxu0
      %v1164 = vadd.f32 0.0, %v1163
      %v1165 = vpop.f32.mrb[0].mxu0
      %1166 = vmatprep.mubr.bf16.mxu0 %v759
      %1167 = vmatmul.mubr.bf16.gmra.mrb[0].mxu0 %v758
      %v1168 = vpop.f32.mrb[0].mxu0
      %v1169 = vadd.f32 0.0, %v1168
      %v1170 = vpop.f32.mrb[0].mxu0
      %v1171 = vpop.f32.mrb[0].mxu0
      %v1172 = vadd.f32 0.0, %v1171
      %v1173 = vpop.f32.mrb[0].mxu0
      %1174 = vmatprep.mubr.bf16.mxu0 %v763
      %1175 = vmatmul.mubr.bf16.gmra.mrb[0].mxu0 %v762
      %v1176 = vpop.f32.mrb[0].mxu0
      %v1177 = vadd.f32 0.0, %v1176
      %v1178 = vpop.f32.mrb[0].mxu0
      %v1179 = vpop.f32.mrb[0].mxu0
      %v1180 = vadd.f32 0.0, %v1179
      %v1181 = vpop.f32.mrb[0].mxu0
      %1182 = vdwg.mxu0
      %1183 = vmatprep.subr.bf16.mxu0 0
      %1184 = vmatpush1.bf16.msra.mxu0 %v974
      %1185 = vmatprep.subr.bf16.mxu0 0
      %1186 = vmatpush1.bf16.msra.mxu0 %v975
      %1187 = vmatprep.subr.bf16.mxu0 0
      %1188 = vmatpush1.bf16.msra.mxu0 %v976
      %1189 = vmatprep.subr.bf16.mxu0 0
      %1190 = vmatpush1.bf16.msra.mxu0 %v977
      %1191 = vmatprep.subr.bf16.mxu0 0
      %1192 = vmatpush1.bf16.msra.mxu0 %v978
      %1193 = vmatprep.subr.bf16.mxu0 0
      %1194 = vmatpush1.bf16.msra.mxu0 %v979
      %1195 = vmatprep.subr.bf16.mxu0 0
      %1196 = vmatpush1.bf16.msra.mxu0 %v980
      %1197 = vmatprep.subr.bf16.mxu0 0
      %1198 = vmatpush1.bf16.msra.mxu0 %v981
      %1199 = vmatprep.subr.bf16.mxu0 0
      %1200 = vmatpush1.bf16.msra.mxu0 %v982
      %1201 = vmatprep.subr.bf16.mxu0 0
      %1202 = vmatpush1.bf16.msra.mxu0 %v983
      %1203 = vmatprep.subr.bf16.mxu0 0
      %1204 = vmatpush1.bf16.msra.mxu0 %v984
      %1205 = vmatprep.subr.bf16.mxu0 0
      %1206 = vmatpush1.bf16.msra.mxu0 %v985
      %1207 = vmatprep.subr.bf16.mxu0 0
      %1208 = vmatpush1.bf16.msra.mxu0 %v986
      %1209 = vmatprep.subr.bf16.mxu0 0
      %1210 = vmatpush1.bf16.msra.mxu0 %v987
      %1211 = vmatprep.subr.bf16.mxu0 0
      %1212 = vmatpush1.bf16.msra.mxu0 %v988
      %1213 = vmatprep.subr.bf16.mxu0 0
      %1214 = vmatpush1.bf16.msra.mxu0 %v989
      %1215 = vmatprep.mubr.bf16.mxu0 %v705
      %1216 = vmatmul.mubr.bf16.gmra.mrb[0].mxu0 %v704
      %v1217 = vpop.f32.mrb[0].mxu0
      %v1218 = vadd.f32 %v1057, %v1217
      %v1219 = vpop.f32.mrb[0].mxu0
      %v1220 = vpop.f32.mrb[0].mxu0
      %v1221 = vadd.f32 %v1060, %v1220
      %v1222 = vpop.f32.mrb[0].mxu0
      %1223 = vmatprep.mubr.bf16.mxu0 %v709
      %1224 = vmatmul.mubr.bf16.gmra.mrb[0].mxu0 %v708
      %v1225 = vpop.f32.mrb[0].mxu0
      %v1226 = vadd.f32 %v1065, %v1225
      %v1227 = vpop.f32.mrb[0].mxu0
      %v1228 = vpop.f32.mrb[0].mxu0
      %v1229 = vadd.f32 %v1068, %v1228
      %v1230 = vpop.f32.mrb[0].mxu0
      %1231 = vmatprep.mubr.bf16.mxu0 %v713
      %1232 = vmatmul.mubr.bf16.gmra.mrb[0].mxu0 %v712
      %v1233 = vpop.f32.mrb[0].mxu0
      %v1234 = vadd.f32 %v1073, %v1233
      %v1235 = vpop.f32.mrb[0].mxu0
      %v1236 = vpop.f32.mrb[0].mxu0
      %v1237 = vadd.f32 %v1076, %v1236
      %v1238 = vpop.f32.mrb[0].mxu0
      %1239 = vmatprep.mubr.bf16.mxu0 %v717
      %1240 = vmatmul.mubr.bf16.gmra.mrb[0].mxu0 %v716
      %v1241 = vpop.f32.mrb[0].mxu0
      %v1242 = vadd.f32 %v1081, %v1241
      %v1243 = vpop.f32.mrb[0].mxu0
      %v1244 = vpop.f32.mrb[0].mxu0
      %v1245 = vadd.f32 %v1084, %v1244
      %v1246 = vpop.f32.mrb[0].mxu0
      %1247 = vmatprep.mubr.bf16.mxu0 %v721
      %1248 = vmatmul.mubr.bf16.gmra.mrb[0].mxu0 %v720
      %v1249 = vpop.f32.mrb[0].mxu0
      %v1250 = vadd.f32 %v1089, %v1249
      %v1251 = vpop.f32.mrb[0].mxu0
      %v1252 = vpop.f32.mrb[0].mxu0
      %v1253 = vadd.f32 %v1092, %v1252
      %v1254 = vpop.f32.mrb[0].mxu0
      %1255 = vmatprep.mubr.bf16.mxu0 %v725
      %1256 = vmatmul.mubr.bf16.gmra.mrb[0].mxu0 %v724
      %v1257 = vpop.f32.mrb[0].mxu0
      %v1258 = vadd.f32 %v1097, %v1257
      %v1259 = vpop.f32.mrb[0].mxu0
      %v1260 = vpop.f32.mrb[0].mxu0
      %v1261 = vadd.f32 %v1100, %v1260
      %v1262 = vpop.f32.mrb[0].mxu0
      %1263 = vmatprep.mubr.bf16.mxu0 %v729
      %1264 = vmatmul.mubr.bf16.gmra.mrb[0].mxu0 %v728
      %v1265 = vpop.f32.mrb[0].mxu0
      %v1266 = vadd.f32 %v1105, %v1265
      %v1267 = vpop.f32.mrb[0].mxu0
      %v1268 = vpop.f32.mrb[0].mxu0
      %v1269 = vadd.f32 %v1108, %v1268
      %v1270 = vpop.f32.mrb[0].mxu0
      %1271 = vmatprep.mubr.bf16.mxu0 %v733
      %1272 = vmatmul.mubr.bf16.gmra.mrb[0].mxu0 %v732
      %v1273 = vpop.f32.mrb[0].mxu0
      %v1274 = vadd.f32 %v1113, %v1273
      %v1275 = vpop.f32.mrb[0].mxu0
      %v1276 = vpop.f32.mrb[0].mxu0
      %v1277 = vadd.f32 %v1116, %v1276
      %v1278 = vpop.f32.mrb[0].mxu0
      %1279 = vmatprep.mubr.bf16.mxu0 %v737
      %1280 = vmatmul.mubr.bf16.gmra.mrb[0].mxu0 %v736
      %v1281 = vpop.f32.mrb[0].mxu0
      %v1282 = vadd.f32 %v1121, %v1281
      %v1283 = vpop.f32.mrb[0].mxu0
      %v1284 = vpop.f32.mrb[0].mxu0
      %v1285 = vadd.f32 %v1124, %v1284
      %v1286 = vpop.f32.mrb[0].mxu0
      %1287 = vmatprep.mubr.bf16.mxu0 %v741
      %1288 = vmatmul.mubr.bf16.gmra.mrb[0].mxu0 %v740
      %v1289 = vpop.f32.mrb[0].mxu0
      %v1290 = vadd.f32 %v1129, %v1289
      %v1291 = vpop.f32.mrb[0].mxu0
      %v1292 = vpop.f32.mrb[0].mxu0
      %v1293 = vadd.f32 %v1132, %v1292
      %v1294 = vpop.f32.mrb[0].mxu0
      %1295 = vmatprep.mubr.bf16.mxu0 %v745
      %1296 = vmatmul.mubr.bf16.gmra.mrb[0].mxu0 %v744
      %v1297 = vpop.f32.mrb[0].mxu0
      %v1298 = vadd.f32 %v1137, %v1297
      %v1299 = vpop.f32.mrb[0].mxu0
      %v1300 = vpop.f32.mrb[0].mxu0
      %v1301 = vadd.f32 %v1140, %v1300
      %v1302 = vpop.f32.mrb[0].mxu0
      %1303 = vmatprep.mubr.bf16.mxu0 %v749
      %1304 = vmatmul.mubr.bf16.gmra.mrb[0].mxu0 %v748
      %v1305 = vpop.f32.mrb[0].mxu0
      %v1306 = vadd.f32 %v1145, %v1305
      %v1307 = vpop.f32.mrb[0].mxu0
      %v1308 = vpop.f32.mrb[0].mxu0
      %v1309 = vadd.f32 %v1148, %v1308
      %v1310 = vpop.f32.mrb[0].mxu0
      %1311 = vmatprep.mubr.bf16.mxu0 %v753
      %1312 = vmatmul.mubr.bf16.gmra.mrb[0].mxu0 %v752
      %v1313 = vpop.f32.mrb[0].mxu0
      %v1314 = vadd.f32 %v1153, %v1313
      %v1315 = vpop.f32.mrb[0].mxu0
      %v1316 = vpop.f32.mrb[0].mxu0
      %v1317 = vadd.f32 %v1156, %v1316
      %v1318 = vpop.f32.mrb[0].mxu0
      %1319 = vmatprep.mubr.bf16.mxu0 %v757
      %1320 = vmatmul.mubr.bf16.gmra.mrb[0].mxu0 %v756
      %v1321 = vpop.f32.mrb[0].mxu0
      %v1322 = vadd.f32 %v1161, %v1321
      %v1323 = vpop.f32.mrb[0].mxu0
      %v1324 = vpop.f32.mrb[0].mxu0
      %v1325 = vadd.f32 %v1164, %v1324
      %v1326 = vpop.f32.mrb[0].mxu0
      %1327 = vmatprep.mubr.bf16.mxu0 %v761
      %1328 = vmatmul.mubr.bf16.gmra.mrb[0].mxu0 %v760
      %v1329 = vpop.f32.mrb[0].mxu0
      %v1330 = vadd.f32 %v1169, %v1329
      %v1331 = vpop.f32.mrb[0].mxu0
      %v1332 = vpop.f32.mrb[0].mxu0
      %v1333 = vadd.f32 %v1172, %v1332
      %v1334 = vpop.f32.mrb[0].mxu0
      %1335 = vmatprep.mubr.bf16.mxu0 %v765
      %1336 = vmatmul.mubr.bf16.gmra.mrb[0].mxu0 %v764
      %v1337 = vpop.f32.mrb[0].mxu0
      %v1338 = vadd.f32 %v1177, %v1337
      %v1339 = vpop.f32.mrb[0].mxu0
      %v1340 = vpop.f32.mrb[0].mxu0
      %v1341 = vadd.f32 %v1180, %v1340
      %v1342 = vpop.f32.mrb[0].mxu0
      %1343 = vdwg.mxu0
      %v1344 = vadd.f32 %v346, %v1218
      %v1345 = vadd.f32 %v347, %v1221
      %v1346 = vadd.f32 %v348, %v1226
      %v1347 = vadd.f32 %v349, %v1229
      %v1348 = vadd.f32 %v350, %v1234
      %v1349 = vadd.f32 %v351, %v1237
      %v1350 = vadd.f32 %v352, %v1242
      %v1351 = vadd.f32 %v353, %v1245
      %v1352 = vadd.f32 %v354, %v1250
      %v1353 = vadd.f32 %v355, %v1253
      %v1354 = vadd.f32 %v356, %v1258
      %v1355 = vadd.f32 %v357, %v1261
      %v1356 = vadd.f32 %v358, %v1266
      %v1357 = vadd.f32 %v359, %v1269
      %v1358 = vadd.f32 %v360, %v1274
      %v1359 = vadd.f32 %v361, %v1277
      %v1360 = vadd.f32 %v362, %v1282
      %v1361 = vadd.f32 %v363, %v1285
      %v1362 = vadd.f32 %v364, %v1290
      %v1363 = vadd.f32 %v365, %v1293
      %v1364 = vadd.f32 %v366, %v1298
      %v1365 = vadd.f32 %v367, %v1301
      %v1366 = vadd.f32 %v368, %v1306
      %v1367 = vadd.f32 %v369, %v1309
      %v1368 = vadd.f32 %v370, %v1314
      %v1369 = vadd.f32 %v371, %v1317
      %v1370 = vadd.f32 %v372, %v1322
      %v1371 = vadd.f32 %v373, %v1325
      %v1372 = vadd.f32 %v374, %v1330
      %v1373 = vadd.f32 %v375, %v1333
      %v1374 = vadd.f32 %v376, %v1338
      %v1375 = vadd.f32 %v377, %v1341
      %1376 = vst [vmem:[#allocation2] sm:$0xff] %v1344
      %1377 = vst [vmem:[#allocation2 + $0x8] sm:$0xff] %v1345
      %1378 = vst [vmem:[#allocation2 + $0x10] sm:$0xff] %v1346
      %1379 = vst [vmem:[#allocation2 + $0x18] sm:$0xff] %v1347
      %1380 = vst [vmem:[#allocation2 + $0x20] sm:$0xff] %v1348
      %1381 = vst [vmem:[#allocation2 + $0x28] sm:$0xff] %v1349
      %1382 = vst [vmem:[#allocation2 + $0x30] sm:$0xff] %v1350
      %1383 = vst [vmem:[#allocation2 + $0x38] sm:$0xff] %v1351
      %1384 = vst [vmem:[#allocation2 + $0x40] sm:$0xff] %v1352
      %1385 = vst [vmem:[#allocation2 + $0x48] sm:$0xff] %v1353
      %1386 = vst [vmem:[#allocation2 + $0x50] sm:$0xff] %v1354
      %1387 = vst [vmem:[#allocation2 + $0x58] sm:$0xff] %v1355
      %1388 = vst [vmem:[#allocation2 + $0x60] sm:$0xff] %v1356
      %1389 = vst [vmem:[#allocation2 + $0x68] sm:$0xff] %v1357
      %1390 = vst [vmem:[#allocation2 + $0x70] sm:$0xff] %v1358
      %1391 = vst [vmem:[#allocation2 + $0x78] sm:$0xff] %v1359
      %1392 = vst [vmem:[#allocation2 + $0x80] sm:$0xff] %v1360
      %1393 = vst [vmem:[#allocation2 + $0x88] sm:$0xff] %v1361
      %1394 = vst [vmem:[#allocation2 + $0x90] sm:$0xff] %v1362
      %1395 = vst [vmem:[#allocation2 + $0x98] sm:$0xff] %v1363
      %1396 = vst [vmem:[#allocation2 + $0xa0] sm:$0xff] %v1364
      %1397 = vst [vmem:[#allocation2 + $0xa8] sm:$0xff] %v1365
      %1398 = vst [vmem:[#allocation2 + $0xb0] sm:$0xff] %v1366
      %1399 = vst [vmem:[#allocation2 + $0xb8] sm:$0xff] %v1367
      %1400 = vst [vmem:[#allocation2 + $0xc0] sm:$0xff] %v1368
      %1401 = vst [vmem:[#allocation2 + $0xc8] sm:$0xff] %v1369
      %1402 = vst [vmem:[#allocation2 + $0xd0] sm:$0xff] %v1370
      %1403 = vst [vmem:[#allocation2 + $0xd8] sm:$0xff] %v1371
      %1404 = vst [vmem:[#allocation2 + $0xe0] sm:$0xff] %v1372
      %1405 = vst [vmem:[#allocation2 + $0xe8] sm:$0xff] %v1373
      %1406 = vst [vmem:[#allocation2 + $0xf0] sm:$0xff] %v1374
      %1407 = vst [vmem:[#allocation2 + $0xf8] sm:$0xff] %v1375
      // Predicated region
      $region49: #{elliptic_gnn_forward.4} parent=43 // pred_check
        %p1408 = pneg %p309
      $region50: #{elliptic_gnn_forward.4} parent=43 // pred_check_branch
        %1410 = sbr.rel (%p1408) target = $region52
      $region51: #{elliptic_gnn_forward.4} parent=43 // pred_region
        %v1411 = vld [vmem:[%s300] sm:$0xff]
        %v1412 = vld [vmem:[%s300 + $0x8] sm:$0xff]
        %v1413 = vld [vmem:[%s300 + $0x10] sm:$0xff]
        %v1414 = vld [vmem:[%s300 + $0x18] sm:$0xff]
        %v1415 = vld [vmem:[%s300 + $0x20] sm:$0xff]
        %v1416 = vld [vmem:[%s300 + $0x28] sm:$0xff]
        %v1417 = vld [vmem:[%s300 + $0x30] sm:$0xff]
        %v1418 = vld [vmem:[%s300 + $0x38] sm:$0xff]
        %v1419 = vld [vmem:[%s300 + $0x40] sm:$0xff]
        %v1420 = vld [vmem:[%s300 + $0x48] sm:$0xff]
        %v1421 = vld [vmem:[%s300 + $0x50] sm:$0xff]
        %v1422 = vld [vmem:[%s300 + $0x58] sm:$0xff]
        %v1423 = vld [vmem:[%s300 + $0x60] sm:$0xff]
        %v1424 = vld [vmem:[%s300 + $0x68] sm:$0xff]
        %v1425 = vld [vmem:[%s300 + $0x70] sm:$0xff]
        %v1426 = vld [vmem:[%s300 + $0x78] sm:$0xff]
        %v1427 = vld [vmem:[%s300 + $0x80] sm:$0xff]
        %v1428 = vld [vmem:[%s300 + $0x88] sm:$0xff]
        %v1429 = vld [vmem:[%s300 + $0x90] sm:$0xff]
        %v1430 = vld [vmem:[%s300 + $0x98] sm:$0xff]
        %v1431 = vld [vmem:[%s300 + $0xa0] sm:$0xff]
        %v1432 = vld [vmem:[%s300 + $0xa8] sm:$0xff]
        %v1433 = vld [vmem:[%s300 + $0xb0] sm:$0xff]
        %v1434 = vld [vmem:[%s300 + $0xb8] sm:$0xff]
        %v1435 = vld [vmem:[%s300 + $0xc0] sm:$0xff]
        %v1436 = vld [vmem:[%s300 + $0xc8] sm:$0xff]
        %v1437 = vld [vmem:[%s300 + $0xd0] sm:$0xff]
        %v1438 = vld [vmem:[%s300 + $0xd8] sm:$0xff]
        %v1439 = vld [vmem:[%s300 + $0xe0] sm:$0xff]
        %v1440 = vld [vmem:[%s300 + $0xe8] sm:$0xff]
        %v1441 = vld [vmem:[%s300 + $0xf0] sm:$0xff]
        %v1442 = vld [vmem:[%s300 + $0xf8] sm:$0xff]
        %v1443 = vld [vmem:[#allocation2] sm:$0xff]
        %v1444 = vld [vmem:[#allocation2 + $0x8] sm:$0xff]
        %v1445 = vld [vmem:[#allocation2 + $0x10] sm:$0xff]
        %v1446 = vld [vmem:[#allocation2 + $0x18] sm:$0xff]
        %v1447 = vld [vmem:[#allocation2 + $0x20] sm:$0xff]
        %v1448 = vld [vmem:[#allocation2 + $0x28] sm:$0xff]
        %v1449 = vld [vmem:[#allocation2 + $0x30] sm:$0xff]
        %v1450 = vld [vmem:[#allocation2 + $0x38] sm:$0xff]
        %v1451 = vld [vmem:[#allocation2 + $0x40] sm:$0xff]
        %v1452 = vld [vmem:[#allocation2 + $0x48] sm:$0xff]
        %v1453 = vld [vmem:[#allocation2 + $0x50] sm:$0xff]
        %v1454 = vld [vmem:[#allocation2 + $0x58] sm:$0xff]
        %v1455 = vld [vmem:[#allocation2 + $0x60] sm:$0xff]
        %v1456 = vld [vmem:[#allocation2 + $0x68] sm:$0xff]
        %v1457 = vld [vmem:[#allocation2 + $0x70] sm:$0xff]
        %v1458 = vld [vmem:[#allocation2 + $0x78] sm:$0xff]
        %v1459 = vld [vmem:[#allocation2 + $0x80] sm:$0xff]
        %v1460 = vld [vmem:[#allocation2 + $0x88] sm:$0xff]
        %v1461 = vld [vmem:[#allocation2 + $0x90] sm:$0xff]
        %v1462 = vld [vmem:[#allocation2 + $0x98] sm:$0xff]
        %v1463 = vld [vmem:[#allocation2 + $0xa0] sm:$0xff]
        %v1464 = vld [vmem:[#allocation2 + $0xa8] sm:$0xff]
        %v1465 = vld [vmem:[#allocation2 + $0xb0] sm:$0xff]
        %v1466 = vld [vmem:[#allocation2 + $0xb8] sm:$0xff]
        %v1467 = vld [vmem:[#allocation2 + $0xc0] sm:$0xff]
        %v1468 = vld [vmem:[#allocation2 + $0xc8] sm:$0xff]
        %v1469 = vld [vmem:[#allocation2 + $0xd0] sm:$0xff]
        %v1470 = vld [vmem:[#allocation2 + $0xd8] sm:$0xff]
        %v1471 = vld [vmem:[#allocation2 + $0xe0] sm:$0xff]
        %v1472 = vld [vmem:[#allocation2 + $0xe8] sm:$0xff]
        %v1473 = vld [vmem:[#allocation2 + $0xf0] sm:$0xff]
        %v1474 = vld [vmem:[#allocation2 + $0xf8] sm:$0xff]
        %1476 = vset.pattern.permute.xlu0 0
        %1477 = vperm.xlu0 %1476, %v1411
        %v1478 = vpop.permute.xlu0 %1477
        %1481 = vset.pattern.permute.xlu0 0
        %1482 = vperm.xlu0 %1481, %v1412
        %v1483 = vpop.permute.xlu0 %1482
        %1486 = vset.pattern.permute.xlu0 0
        %1487 = vperm.xlu0 %1486, %v1413
        %v1488 = vpop.permute.xlu0 %1487
        %1491 = vset.pattern.permute.xlu0 0
        %1492 = vperm.xlu0 %1491, %v1414
        %v1493 = vpop.permute.xlu0 %1492
        %1496 = vset.pattern.permute.xlu0 0
        %1497 = vperm.xlu0 %1496, %v1415
        %v1498 = vpop.permute.xlu0 %1497
        %1501 = vset.pattern.permute.xlu0 0
        %1502 = vperm.xlu0 %1501, %v1416
        %v1503 = vpop.permute.xlu0 %1502
        %1506 = vset.pattern.permute.xlu0 0
        %1507 = vperm.xlu0 %1506, %v1417
        %v1508 = vpop.permute.xlu0 %1507
        %1511 = vset.pattern.permute.xlu0 0
        %1512 = vperm.xlu0 %1511, %v1418
        %v1513 = vpop.permute.xlu0 %1512
        %1516 = vset.pattern.permute.xlu0 0
        %1517 = vperm.xlu0 %1516, %v1419
        %v1518 = vpop.permute.xlu0 %1517
        %1521 = vset.pattern.permute.xlu0 0
        %1522 = vperm.xlu0 %1521, %v1420
        %v1523 = vpop.permute.xlu0 %1522
        %1526 = vset.pattern.permute.xlu0 0
        %1527 = vperm.xlu0 %1526, %v1421
        %v1528 = vpop.permute.xlu0 %1527
        %1531 = vset.pattern.permute.xlu0 0
        %1532 = vperm.xlu0 %1531, %v1422
        %v1533 = vpop.permute.xlu0 %1532
        %1536 = vset.pattern.permute.xlu0 0
        %1537 = vperm.xlu0 %1536, %v1423
        %v1538 = vpop.permute.xlu0 %1537
        %1541 = vset.pattern.permute.xlu0 0
        %1542 = vperm.xlu0 %1541, %v1424
        %v1543 = vpop.permute.xlu0 %1542
        %1546 = vset.pattern.permute.xlu0 0
        %1547 = vperm.xlu0 %1546, %v1425
        %v1548 = vpop.permute.xlu0 %1547
        %1551 = vset.pattern.permute.xlu0 0
        %1552 = vperm.xlu0 %1551, %v1426
        %v1553 = vpop.permute.xlu0 %1552
        %1556 = vset.pattern.permute.xlu0 0
        %1557 = vperm.xlu0 %1556, %v1427
        %v1558 = vpop.permute.xlu0 %1557
        %1561 = vset.pattern.permute.xlu0 0
        %1562 = vperm.xlu0 %1561, %v1428
        %v1563 = vpop.permute.xlu0 %1562
        %1566 = vset.pattern.permute.xlu0 0
        %1567 = vperm.xlu0 %1566, %v1429
        %v1568 = vpop.permute.xlu0 %1567
        %1571 = vset.pattern.permute.xlu0 0
        %1572 = vperm.xlu0 %1571, %v1430
        %v1573 = vpop.permute.xlu0 %1572
        %1576 = vset.pattern.permute.xlu0 0
        %1577 = vperm.xlu0 %1576, %v1431
        %v1578 = vpop.permute.xlu0 %1577
        %1581 = vset.pattern.permute.xlu0 0
        %1582 = vperm.xlu0 %1581, %v1432
        %v1583 = vpop.permute.xlu0 %1582
        %1586 = vset.pattern.permute.xlu0 0
        %1587 = vperm.xlu0 %1586, %v1433
        %v1588 = vpop.permute.xlu0 %1587
        %1591 = vset.pattern.permute.xlu0 0
        %1592 = vperm.xlu0 %1591, %v1434
        %v1593 = vpop.permute.xlu0 %1592
        %1596 = vset.pattern.permute.xlu0 0
        %1597 = vperm.xlu0 %1596, %v1435
        %v1598 = vpop.permute.xlu0 %1597
        %1601 = vset.pattern.permute.xlu0 0
        %1602 = vperm.xlu0 %1601, %v1436
        %v1603 = vpop.permute.xlu0 %1602
        %1606 = vset.pattern.permute.xlu0 0
        %1607 = vperm.xlu0 %1606, %v1437
        %v1608 = vpop.permute.xlu0 %1607
        %1611 = vset.pattern.permute.xlu0 0
        %1612 = vperm.xlu0 %1611, %v1438
        %v1613 = vpop.permute.xlu0 %1612
        %1616 = vset.pattern.permute.xlu0 0
        %1617 = vperm.xlu0 %1616, %v1439
        %v1618 = vpop.permute.xlu0 %1617
        %1621 = vset.pattern.permute.xlu0 0
        %1622 = vperm.xlu0 %1621, %v1440
        %v1623 = vpop.permute.xlu0 %1622
        %1626 = vset.pattern.permute.xlu0 0
        %1627 = vperm.xlu0 %1626, %v1441
        %v1628 = vpop.permute.xlu0 %1627
        %1631 = vset.pattern.permute.xlu0 0
        %1632 = vperm.xlu0 %1631, %v1442
        %v1633 = vpop.permute.xlu0 %1632
        %v1635 = vmul.f32 %v1478, %v1443
        %v1636 = vmul.f32 %v1483, %v1444
        %v1637 = vmul.f32 %v1488, %v1445
        %v1638 = vmul.f32 %v1493, %v1446
        %v1639 = vmul.f32 %v1498, %v1447
        %v1640 = vmul.f32 %v1503, %v1448
        %v1641 = vmul.f32 %v1508, %v1449
        %v1642 = vmul.f32 %v1513, %v1450
        %v1643 = vmul.f32 %v1518, %v1451
        %v1644 = vmul.f32 %v1523, %v1452
        %v1645 = vmul.f32 %v1528, %v1453
        %v1646 = vmul.f32 %v1533, %v1454
        %v1647 = vmul.f32 %v1538, %v1455
        %v1648 = vmul.f32 %v1543, %v1456
        %v1649 = vmul.f32 %v1548, %v1457
        %v1650 = vmul.f32 %v1553, %v1458
        %v1651 = vmul.f32 %v1558, %v1459
        %v1652 = vmul.f32 %v1563, %v1460
        %v1653 = vmul.f32 %v1568, %v1461
        %v1654 = vmul.f32 %v1573, %v1462
        %v1655 = vmul.f32 %v1578, %v1463
        %v1656 = vmul.f32 %v1583, %v1464
        %v1657 = vmul.f32 %v1588, %v1465
        %v1658 = vmul.f32 %v1593, %v1466
        %v1659 = vmul.f32 %v1598, %v1467
        %v1660 = vmul.f32 %v1603, %v1468
        %v1661 = vmul.f32 %v1608, %v1469
        %v1662 = vmul.f32 %v1613, %v1470
        %v1663 = vmul.f32 %v1618, %v1471
        %v1664 = vmul.f32 %v1623, %v1472
        %v1665 = vmul.f32 %v1628, %v1473
        %v1666 = vmul.f32 %v1633, %v1474
        %v1667 = vld [vmem:[%s3] sm:$0x1]
        %v1669 = vlaneseq
        %v1670 = vshrl.u32 %v1669, 7
        %v1671 = vsub.s32 0, %v1670
        %v1672 = vrot.slane %v1667, %v1671
        %v1674 = vadd.f32 %v1635, %v1672
        %v1675 = vadd.f32 %v1636, %v1672
        %v1676 = vadd.f32 %v1637, %v1672
        %v1677 = vadd.f32 %v1638, %v1672
        %v1678 = vadd.f32 %v1639, %v1672
        %v1679 = vadd.f32 %v1640, %v1672
        %v1680 = vadd.f32 %v1641, %v1672
        %v1681 = vadd.f32 %v1642, %v1672
        %v1682 = vadd.f32 %v1643, %v1672
        %v1683 = vadd.f32 %v1644, %v1672
        %v1684 = vadd.f32 %v1645, %v1672
        %v1685 = vadd.f32 %v1646, %v1672
        %v1686 = vadd.f32 %v1647, %v1672
        %v1687 = vadd.f32 %v1648, %v1672
        %v1688 = vadd.f32 %v1649, %v1672
        %v1689 = vadd.f32 %v1650, %v1672
        %v1690 = vadd.f32 %v1651, %v1672
        %v1691 = vadd.f32 %v1652, %v1672
        %v1692 = vadd.f32 %v1653, %v1672
        %v1693 = vadd.f32 %v1654, %v1672
        %v1694 = vadd.f32 %v1655, %v1672
        %v1695 = vadd.f32 %v1656, %v1672
        %v1696 = vadd.f32 %v1657, %v1672
        %v1697 = vadd.f32 %v1658, %v1672
        %v1698 = vadd.f32 %v1659, %v1672
        %v1699 = vadd.f32 %v1660, %v1672
        %v1700 = vadd.f32 %v1661, %v1672
        %v1701 = vadd.f32 %v1662, %v1672
        %v1702 = vadd.f32 %v1663, %v1672
        %v1703 = vadd.f32 %v1664, %v1672
        %v1704 = vadd.f32 %v1665, %v1672
        %v1705 = vadd.f32 %v1666, %v1672
        %v1706 = vmax.f32 %v1674, 0.0
        %v1707 = vmax.f32 %v1675, 0.0
        %v1708 = vmax.f32 %v1676, 0.0
        %v1709 = vmax.f32 %v1677, 0.0
        %v1710 = vmax.f32 %v1678, 0.0
        %v1711 = vmax.f32 %v1679, 0.0
        %v1712 = vmax.f32 %v1680, 0.0
        %v1713 = vmax.f32 %v1681, 0.0
        %v1714 = vmax.f32 %v1682, 0.0
        %v1715 = vmax.f32 %v1683, 0.0
        %v1716 = vmax.f32 %v1684, 0.0
        %v1717 = vmax.f32 %v1685, 0.0
        %v1718 = vmax.f32 %v1686, 0.0
        %v1719 = vmax.f32 %v1687, 0.0
        %v1720 = vmax.f32 %v1688, 0.0
        %v1721 = vmax.f32 %v1689, 0.0
        %v1722 = vmax.f32 %v1690, 0.0
        %v1723 = vmax.f32 %v1691, 0.0
        %v1724 = vmax.f32 %v1692, 0.0
        %v1725 = vmax.f32 %v1693, 0.0
        %v1726 = vmax.f32 %v1694, 0.0
        %v1727 = vmax.f32 %v1695, 0.0
        %v1728 = vmax.f32 %v1696, 0.0
        %v1729 = vmax.f32 %v1697, 0.0
        %v1730 = vmax.f32 %v1698, 0.0
        %v1731 = vmax.f32 %v1699, 0.0
        %v1732 = vmax.f32 %v1700, 0.0
        %v1733 = vmax.f32 %v1701, 0.0
        %v1734 = vmax.f32 %v1702, 0.0
        %v1735 = vmax.f32 %v1703, 0.0
        %v1736 = vmax.f32 %v1704, 0.0
        %v1737 = vmax.f32 %v1705, 0.0
        %v1738 = vpack.c.bf16 %v1707, %v1706
        %v1739 = vpack.c.bf16 %v1709, %v1708
        %v1740 = vpack.c.bf16 %v1711, %v1710
        %v1741 = vpack.c.bf16 %v1713, %v1712
        %v1742 = vpack.c.bf16 %v1715, %v1714
        %v1743 = vpack.c.bf16 %v1717, %v1716
        %v1744 = vpack.c.bf16 %v1719, %v1718
        %v1745 = vpack.c.bf16 %v1721, %v1720
        %v1746 = vpack.c.bf16 %v1723, %v1722
        %v1747 = vpack.c.bf16 %v1725, %v1724
        %v1748 = vpack.c.bf16 %v1727, %v1726
        %v1749 = vpack.c.bf16 %v1729, %v1728
        %v1750 = vpack.c.bf16 %v1731, %v1730
        %v1751 = vpack.c.bf16 %v1733, %v1732
        %v1752 = vpack.c.bf16 %v1735, %v1734
        %v1753 = vpack.c.bf16 %v1737, %v1736
        %v1754 = vld [vmem:[%s4] sm:$0xf]
        %v1755 = vld [vmem:[%s4 + $0x4] sm:$0xf]
        %v1756 = vld [vmem:[%s4 + $0x8] sm:$0xf]
        %v1757 = vld [vmem:[%s4 + $0xc] sm:$0xf]
        %v1758 = vld [vmem:[%s4 + $0x10] sm:$0xf]
        %v1759 = vld [vmem:[%s4 + $0x14] sm:$0xf]
        %v1760 = vld [vmem:[%s4 + $0x18] sm:$0xf]
        %v1761 = vld [vmem:[%s4 + $0x1c] sm:$0xf]
        %v1762 = vld [vmem:[%s4 + $0x20] sm:$0xf]
        %v1763 = vld [vmem:[%s4 + $0x24] sm:$0xf]
        %v1764 = vld [vmem:[%s4 + $0x28] sm:$0xf]
        %v1765 = vld [vmem:[%s4 + $0x2c] sm:$0xf]
        %v1766 = vld [vmem:[%s4 + $0x30] sm:$0xf]
        %v1767 = vld [vmem:[%s4 + $0x34] sm:$0xf]
        %v1768 = vld [vmem:[%s4 + $0x38] sm:$0xf]
        %v1769 = vld [vmem:[%s4 + $0x3c] sm:$0xf]
        %v1786 = vunpack.c.l.b16 %v1754
        %v1787 = vunpack.c.l.b16 %v1755
        %v1788 = vunpack.c.l.b16 %v1756
        %v1789 = vunpack.c.l.b16 %v1757
        %v1790 = vunpack.c.l.b16 %v1758
        %v1791 = vunpack.c.l.b16 %v1759
        %v1792 = vunpack.c.l.b16 %v1760
        %v1793 = vunpack.c.l.b16 %v1761
        %v1794 = vunpack.c.l.b16 %v1762
        %v1795 = vunpack.c.l.b16 %v1763
        %v1796 = vunpack.c.l.b16 %v1764
        %v1797 = vunpack.c.l.b16 %v1765
        %v1798 = vunpack.c.l.b16 %v1766
        %v1799 = vunpack.c.l.b16 %v1767
        %v1800 = vunpack.c.l.b16 %v1768
        %v1801 = vunpack.c.l.b16 %v1769
        %v1802 = vpack.c.b16 %v1787, %v1786
        %v1803 = vpack.c.b16 %v1789, %v1788
        %v1804 = vpack.c.b16 %v1791, %v1790
        %v1805 = vpack.c.b16 %v1793, %v1792
        %v1806 = vpack.c.b16 %v1795, %v1794
        %v1807 = vpack.c.b16 %v1797, %v1796
        %v1808 = vpack.c.b16 %v1799, %v1798
        %v1809 = vpack.c.b16 %v1801, %v1800
        %1818 = vmatprep.subr.bf16.mxu0 0
        %1819 = vmatpush1.bf16.msra.mxu0 %v1802
        %1820 = vmatprep.subr.bf16.mxu0 0
        %1821 = vmatpush1.bf16.msra.mxu0 %v1803
        %1822 = vmatprep.subr.bf16.mxu0 0
        %1823 = vmatpush1.bf16.msra.mxu0 %v1804
        %1824 = vmatprep.subr.bf16.mxu0 0
        %1825 = vmatpush1.bf16.msra.mxu0 %v1805
        %1826 = vmatprep.subr.bf16.mxu0 0
        %1827 = vmatpush1.bf16.msra.mxu0 %v1806
        %1828 = vmatprep.subr.bf16.mxu0 0
        %1829 = vmatpush1.bf16.msra.mxu0 %v1807
        %1830 = vmatprep.subr.bf16.mxu0 0
        %1831 = vmatpush1.bf16.msra.mxu0 %v1808
        %1832 = vmatprep.subr.bf16.mxu0 0
        %1833 = vmatpush1.bf16.msra.mxu0 %v1809
        %1834 = vmatprep.subr.bf16.mxu0 0
        %1835 = vmatpush1.bf16.msra.mxu0 0
        %1836 = vmatprep.subr.bf16.mxu0 0
        %1837 = vmatpush1.bf16.msra.mxu0 0
        %1838 = vmatprep.subr.bf16.mxu0 0
        %1839 = vmatpush1.bf16.msra.mxu0 0
        %1840 = vmatprep.subr.bf16.mxu0 0
        %1841 = vmatpush1.bf16.msra.mxu0 0
        %1842 = vmatprep.subr.bf16.mxu0 0
        %1843 = vmatpush1.bf16.msra.mxu0 0
        %1844 = vmatprep.subr.bf16.mxu0 0
        %1845 = vmatpush1.bf16.msra.mxu0 0
        %1846 = vmatprep.subr.bf16.mxu0 0
        %1847 = vmatpush1.bf16.msra.mxu0 0
        %1848 = vmatprep.subr.bf16.mxu0 0
        %1849 = vmatpush1.bf16.msra.mxu0 0
        %1850 = vmatprep.mubr.bf16.mxu0 0
        %1851 = vmatmul.mubr.bf16.gmra.mrb[0].mxu0 %v1738
        %v1852 = vpop.f32.mrb[0].mxu0
        %v1853 = vadd.f32 0.0, %v1852
        %v1854 = vpop.f32.mrb[0].mxu0
        %v1855 = vpop.f32.mrb[0].mxu0
        %v1856 = vadd.f32 0.0, %v1855
        %v1857 = vpop.f32.mrb[0].mxu0
        %1858 = vmatprep.mubr.bf16.mxu0 0
        %1859 = vmatmul.mubr.bf16.gmra.mrb[0].mxu0 %v1739
        %v1860 = vpop.f32.mrb[0].mxu0
        %v1861 = vadd.f32 0.0, %v1860
        %v1862 = vpop.f32.mrb[0].mxu0
        %v1863 = vpop.f32.mrb[0].mxu0
        %v1864 = vadd.f32 0.0, %v1863
        %v1865 = vpop.f32.mrb[0].mxu0
        %1866 = vmatprep.mubr.bf16.mxu0 0
        %1867 = vmatmul.mubr.bf16.gmra.mrb[0].mxu0 %v1740
        %v1868 = vpop.f32.mrb[0].mxu0
        %v1869 = vadd.f32 0.0, %v1868
        %v1870 = vpop.f32.mrb[0].mxu0
        %v1871 = vpop.f32.mrb[0].mxu0
        %v1872 = vadd.f32 0.0, %v1871
        %v1873 = vpop.f32.mrb[0].mxu0
        %1874 = vmatprep.mubr.bf16.mxu0 0
        %1875 = vmatmul.mubr.bf16.gmra.mrb[0].mxu0 %v1741
        %v1876 = vpop.f32.mrb[0].mxu0
        %v1877 = vadd.f32 0.0, %v1876
        %v1878 = vpop.f32.mrb[0].mxu0
        %v1879 = vpop.f32.mrb[0].mxu0
        %v1880 = vadd.f32 0.0, %v1879
        %v1881 = vpop.f32.mrb[0].mxu0
        %1882 = vmatprep.mubr.bf16.mxu0 0
        %1883 = vmatmul.mubr.bf16.gmra.mrb[0].mxu0 %v1742
        %v1884 = vpop.f32.mrb[0].mxu0
        %v1885 = vadd.f32 0.0, %v1884
        %v1886 = vpop.f32.mrb[0].mxu0
        %v1887 = vpop.f32.mrb[0].mxu0
        %v1888 = vadd.f32 0.0, %v1887
        %v1889 = vpop.f32.mrb[0].mxu0
        %1890 = vmatprep.mubr.bf16.mxu0 0
        %1891 = vmatmul.mubr.bf16.gmra.mrb[0].mxu0 %v1743
        %v1892 = vpop.f32.mrb[0].mxu0
        %v1893 = vadd.f32 0.0, %v1892
        %v1894 = vpop.f32.mrb[0].mxu0
        %v1895 = vpop.f32.mrb[0].mxu0
        %v1896 = vadd.f32 0.0, %v1895
        %v1897 = vpop.f32.mrb[0].mxu0
        %1898 = vmatprep.mubr.bf16.mxu0 0
        %1899 = vmatmul.mubr.bf16.gmra.mrb[0].mxu0 %v1744
        %v1900 = vpop.f32.mrb[0].mxu0
        %v1901 = vadd.f32 0.0, %v1900
        %v1902 = vpop.f32.mrb[0].mxu0
        %v1903 = vpop.f32.mrb[0].mxu0
        %v1904 = vadd.f32 0.0, %v1903
        %v1905 = vpop.f32.mrb[0].mxu0
        %1906 = vmatprep.mubr.bf16.mxu0 0
        %1907 = vmatmul.mubr.bf16.gmra.mrb[0].mxu0 %v1745
        %v1908 = vpop.f32.mrb[0].mxu0
        %v1909 = vadd.f32 0.0, %v1908
        %v1910 = vpop.f32.mrb[0].mxu0
        %v1911 = vpop.f32.mrb[0].mxu0
        %v1912 = vadd.f32 0.0, %v1911
        %v1913 = vpop.f32.mrb[0].mxu0
        %1914 = vmatprep.mubr.bf16.mxu0 0
        %1915 = vmatmul.mubr.bf16.gmra.mrb[0].mxu0 %v1746
        %v1916 = vpop.f32.mrb[0].mxu0
        %v1917 = vadd.f32 0.0, %v1916
        %v1918 = vpop.f32.mrb[0].mxu0
        %v1919 = vpop.f32.mrb[0].mxu0
        %v1920 = vadd.f32 0.0, %v1919
        %v1921 = vpop.f32.mrb[0].mxu0
        %1922 = vmatprep.mubr.bf16.mxu0 0
        %1923 = vmatmul.mubr.bf16.gmra.mrb[0].mxu0 %v1747
        %v1924 = vpop.f32.mrb[0].mxu0
        %v1925 = vadd.f32 0.0, %v1924
        %v1926 = vpop.f32.mrb[0].mxu0
        %v1927 = vpop.f32.mrb[0].mxu0
        %v1928 = vadd.f32 0.0, %v1927
        %v1929 = vpop.f32.mrb[0].mxu0
        %1930 = vmatprep.mubr.bf16.mxu0 0
        %1931 = vmatmul.mubr.bf16.gmra.mrb[0].mxu0 %v1748
        %v1932 = vpop.f32.mrb[0].mxu0
        %v1933 = vadd.f32 0.0, %v1932
        %v1934 = vpop.f32.mrb[0].mxu0
        %v1935 = vpop.f32.mrb[0].mxu0
        %v1936 = vadd.f32 0.0, %v1935
        %v1937 = vpop.f32.mrb[0].mxu0
        %1938 = vmatprep.mubr.bf16.mxu0 0
        %1939 = vmatmul.mubr.bf16.gmra.mrb[0].mxu0 %v1749
        %v1940 = vpop.f32.mrb[0].mxu0
        %v1941 = vadd.f32 0.0, %v1940
        %v1942 = vpop.f32.mrb[0].mxu0
        %v1943 = vpop.f32.mrb[0].mxu0
        %v1944 = vadd.f32 0.0, %v1943
        %v1945 = vpop.f32.mrb[0].mxu0
        %1946 = vmatprep.mubr.bf16.mxu0 0
        %1947 = vmatmul.mubr.bf16.gmra.mrb[0].mxu0 %v1750
        %v1948 = vpop.f32.mrb[0].mxu0
        %v1949 = vadd.f32 0.0, %v1948
        %v1950 = vpop.f32.mrb[0].mxu0
        %v1951 = vpop.f32.mrb[0].mxu0
        %v1952 = vadd.f32 0.0, %v1951
        %v1953 = vpop.f32.mrb[0].mxu0
        %1954 = vmatprep.mubr.bf16.mxu0 0
        %1955 = vmatmul.mubr.bf16.gmra.mrb[0].mxu0 %v1751
        %v1956 = vpop.f32.mrb[0].mxu0
        %v1957 = vadd.f32 0.0, %v1956
        %v1958 = vpop.f32.mrb[0].mxu0
        %v1959 = vpop.f32.mrb[0].mxu0
        %v1960 = vadd.f32 0.0, %v1959
        %v1961 = vpop.f32.mrb[0].mxu0
        %1962 = vmatprep.mubr.bf16.mxu0 0
        %1963 = vmatmul.mubr.bf16.gmra.mrb[0].mxu0 %v1752
        %v1964 = vpop.f32.mrb[0].mxu0
        %v1965 = vadd.f32 0.0, %v1964
        %v1966 = vpop.f32.mrb[0].mxu0
        %v1967 = vpop.f32.mrb[0].mxu0
        %v1968 = vadd.f32 0.0, %v1967
        %v1969 = vpop.f32.mrb[0].mxu0
        %1970 = vmatprep.mubr.bf16.mxu0 0
        %1971 = vmatmul.mubr.bf16.gmra.mrb[0].mxu0 %v1753
        %v1972 = vpop.f32.mrb[0].mxu0
        %v1973 = vadd.f32 0.0, %v1972
        %v1974 = vpop.f32.mrb[0].mxu0
        %v1975 = vpop.f32.mrb[0].mxu0
        %v1976 = vadd.f32 0.0, %v1975
        %v1977 = vpop.f32.mrb[0].mxu0
        %1978 = vdwg.mxu0
        %v1979 = vmul.f32 %v1853, %v1478
        %v1980 = vmul.f32 %v1856, %v1483
        %v1981 = vmul.f32 %v1861, %v1488
        %v1982 = vmul.f32 %v1864, %v1493
        %v1983 = vmul.f32 %v1869, %v1498
        %v1984 = vmul.f32 %v1872, %v1503
        %v1985 = vmul.f32 %v1877, %v1508
        %v1986 = vmul.f32 %v1880, %v1513
        %v1987 = vmul.f32 %v1885, %v1518
        %v1988 = vmul.f32 %v1888, %v1523
        %v1989 = vmul.f32 %v1893, %v1528
        %v1990 = vmul.f32 %v1896, %v1533
        %v1991 = vmul.f32 %v1901, %v1538
        %v1992 = vmul.f32 %v1904, %v1543
        %v1993 = vmul.f32 %v1909, %v1548
        %v1994 = vmul.f32 %v1912, %v1553
        %v1995 = vmul.f32 %v1917, %v1558
        %v1996 = vmul.f32 %v1920, %v1563
        %v1997 = vmul.f32 %v1925, %v1568
        %v1998 = vmul.f32 %v1928, %v1573
        %v1999 = vmul.f32 %v1933, %v1578
        %v2000 = vmul.f32 %v1936, %v1583
        %v2001 = vmul.f32 %v1941, %v1588
        %v2002 = vmul.f32 %v1944, %v1593
        %v2003 = vmul.f32 %v1949, %v1598
        %v2004 = vmul.f32 %v1952, %v1603
        %v2005 = vmul.f32 %v1957, %v1608
        %v2006 = vmul.f32 %v1960, %v1613
        %v2007 = vmul.f32 %v1965, %v1618
        %v2008 = vmul.f32 %v1968, %v1623
        %v2009 = vmul.f32 %v1973, %v1628
        %v2010 = vmul.f32 %v1976, %v1633
        %v2011 = vpack.c.bf16 %v1980, %v1979
        %v2012 = vpack.c.bf16 %v1982, %v1981
        %v2013 = vpack.c.bf16 %v1984, %v1983
        %v2014 = vpack.c.bf16 %v1986, %v1985
        %v2015 = vpack.c.bf16 %v1988, %v1987
        %v2016 = vpack.c.bf16 %v1990, %v1989
        %v2017 = vpack.c.bf16 %v1992, %v1991
        %v2018 = vpack.c.bf16 %v1994, %v1993
        %v2019 = vpack.c.bf16 %v1996, %v1995
        %v2020 = vpack.c.bf16 %v1998, %v1997
        %v2021 = vpack.c.bf16 %v2000, %v1999
        %v2022 = vpack.c.bf16 %v2002, %v2001
        %v2023 = vpack.c.bf16 %v2004, %v2003
        %v2024 = vpack.c.bf16 %v2006, %v2005
        %v2025 = vpack.c.bf16 %v2008, %v2007
        %v2026 = vpack.c.bf16 %v2010, %v2009
        %v2043 = vunpack.c.l.b16 %v2011
        %v2044 = vunpack.c.h.b16 %v2011
        %v2045 = vunpack.c.l.b16 %v2012
        %v2046 = vunpack.c.h.b16 %v2012
        %v2047 = vunpack.c.l.b16 %v2013
        %v2048 = vunpack.c.h.b16 %v2013
        %v2049 = vunpack.c.l.b16 %v2014
        %v2050 = vunpack.c.h.b16 %v2014
        %v2051 = vunpack.c.l.b16 %v2015
        %v2052 = vunpack.c.h.b16 %v2015
        %v2053 = vunpack.c.l.b16 %v2016
        %v2054 = vunpack.c.h.b16 %v2016
        %v2055 = vunpack.c.l.b16 %v2017
        %v2056 = vunpack.c.h.b16 %v2017
        %v2057 = vunpack.c.l.b16 %v2018
        %v2058 = vunpack.c.h.b16 %v2018
        %v2059 = vunpack.c.l.b16 %v2019
        %v2060 = vunpack.c.h.b16 %v2019
        %v2061 = vunpack.c.l.b16 %v2020
        %v2062 = vunpack.c.h.b16 %v2020
        %v2063 = vunpack.c.l.b16 %v2021
        %v2064 = vunpack.c.h.b16 %v2021
        %v2065 = vunpack.c.l.b16 %v2022
        %v2066 = vunpack.c.h.b16 %v2022
        %v2067 = vunpack.c.l.b16 %v2023
        %v2068 = vunpack.c.h.b16 %v2023
        %v2069 = vunpack.c.l.b16 %v2024
        %v2070 = vunpack.c.h.b16 %v2024
        %v2071 = vunpack.c.l.b16 %v2025
        %v2072 = vunpack.c.h.b16 %v2025
        %v2073 = vunpack.c.l.b16 %v2026
        %v2074 = vunpack.c.h.b16 %v2026
        %v2075 = vpack.c.b16 %v2043, %v2043
        %v2076 = vpack.c.b16 %v2044, %v2044
        %v2077 = vpack.c.b16 %v2045, %v2045
        %v2078 = vpack.c.b16 %v2046, %v2046
        %v2079 = vpack.c.b16 %v2047, %v2047
        %v2080 = vpack.c.b16 %v2048, %v2048
        %v2081 = vpack.c.b16 %v2049, %v2049
        %v2082 = vpack.c.b16 %v2050, %v2050
        %v2083 = vpack.c.b16 %v2051, %v2051
        %v2084 = vpack.c.b16 %v2052, %v2052
        %v2085 = vpack.c.b16 %v2053, %v2053
        %v2086 = vpack.c.b16 %v2054, %v2054
        %v2087 = vpack.c.b16 %v2055, %v2055
        %v2088 = vpack.c.b16 %v2056, %v2056
        %v2089 = vpack.c.b16 %v2057, %v2057
        %v2090 = vpack.c.b16 %v2058, %v2058
        %v2091 = vpack.c.b16 %v2059, %v2059
        %v2092 = vpack.c.b16 %v2060, %v2060
        %v2093 = vpack.c.b16 %v2061, %v2061
        %v2094 = vpack.c.b16 %v2062, %v2062
        %v2095 = vpack.c.b16 %v2063, %v2063
        %v2096 = vpack.c.b16 %v2064, %v2064
        %v2097 = vpack.c.b16 %v2065, %v2065
        %v2098 = vpack.c.b16 %v2066, %v2066
        %v2099 = vpack.c.b16 %v2067, %v2067
        %v2100 = vpack.c.b16 %v2068, %v2068
        %v2101 = vpack.c.b16 %v2069, %v2069
        %v2102 = vpack.c.b16 %v2070, %v2070
        %v2103 = vpack.c.b16 %v2071, %v2071
        %v2104 = vpack.c.b16 %v2072, %v2072
        %v2105 = vpack.c.b16 %v2073, %v2073
        %v2106 = vpack.c.b16 %v2074, %v2074
        %2139 = vst [vmem:[%s306] sm:$0xf] %v2075
        %2140 = vst [vmem:[%s306 + $0x4] sm:$0xf] %v2076
        %2141 = vst [vmem:[%s306 + $0x8] sm:$0xf] %v2077
        %2142 = vst [vmem:[%s306 + $0xc] sm:$0xf] %v2078
        %2143 = vst [vmem:[%s306 + $0x10] sm:$0xf] %v2079
        %2144 = vst [vmem:[%s306 + $0x14] sm:$0xf] %v2080
        %2145 = vst [vmem:[%s306 + $0x18] sm:$0xf] %v2081
        %2146 = vst [vmem:[%s306 + $0x1c] sm:$0xf] %v2082
        %2147 = vst [vmem:[%s306 + $0x20] sm:$0xf] %v2083
        %2148 = vst [vmem:[%s306 + $0x24] sm:$0xf] %v2084
        %2149 = vst [vmem:[%s306 + $0x28] sm:$0xf] %v2085
        %2150 = vst [vmem:[%s306 + $0x2c] sm:$0xf] %v2086
        %2151 = vst [vmem:[%s306 + $0x30] sm:$0xf] %v2087
        %2152 = vst [vmem:[%s306 + $0x34] sm:$0xf] %v2088
        %2153 = vst [vmem:[%s306 + $0x38] sm:$0xf] %v2089
        %2154 = vst [vmem:[%s306 + $0x3c] sm:$0xf] %v2090
        %2155 = vst [vmem:[%s306 + $0x40] sm:$0xf] %v2091
        %2156 = vst [vmem:[%s306 + $0x44] sm:$0xf] %v2092
        %2157 = vst [vmem:[%s306 + $0x48] sm:$0xf] %v2093
        %2158 = vst [vmem:[%s306 + $0x4c] sm:$0xf] %v2094
        %2159 = vst [vmem:[%s306 + $0x50] sm:$0xf] %v2095
        %2160 = vst [vmem:[%s306 + $0x54] sm:$0xf] %v2096
        %2161 = vst [vmem:[%s306 + $0x58] sm:$0xf] %v2097
        %2162 = vst [vmem:[%s306 + $0x5c] sm:$0xf] %v2098
        %2163 = vst [vmem:[%s306 + $0x60] sm:$0xf] %v2099
        %2164 = vst [vmem:[%s306 + $0x64] sm:$0xf] %v2100
        %2165 = vst [vmem:[%s306 + $0x68] sm:$0xf] %v2101
        %2166 = vst [vmem:[%s306 + $0x6c] sm:$0xf] %v2102
        %2167 = vst [vmem:[%s306 + $0x70] sm:$0xf] %v2103
        %2168 = vst [vmem:[%s306 + $0x74] sm:$0xf] %v2104
        %2169 = vst [vmem:[%s306 + $0x78] sm:$0xf] %v2105
        %2170 = vst [vmem:[%s306 + $0x7c] sm:$0xf] %v2106
      $region52: #{elliptic_gnn_forward.4} parent=43 // pred_fallthru
        _
      %s2171 = smul.u32 32, %s21
      %p2172 = scmp.lt.s32.totalorder %s2171, 63
      %s2173 = scalar_select %p2172, %s2171, 63
      %s2174 = smul.addr %s2173, 4
      %s2175 = scalar_lea.vmem %s6, %s2174
      // Predicated region
      $region53: #{elliptic_gnn_forward.4} parent=43 // pred_check
        %p2176 = pneg %p185
      $region54: #{elliptic_gnn_forward.4} parent=43 // pred_check_branch
        %2178 = sbr.rel (%p2176) target = $region56
      $region55: #{elliptic_gnn_forward.4} parent=43 // pred_region
        %s2179 = smul.u32 32, %s21
      $region56: #{elliptic_gnn_forward.4} parent=43 // pred_fallthru
        _
    $region44: #{elliptic_gnn_forward.4} parent=5 // pred_fallthru
      _
    %p2180 = scmp.le.s32.totalorder 2, %s12
    // Predicated region
    $region57: #{elliptic_gnn_forward.4} parent=5 // pred_check
      %p2181 = pneg %p2180
    $region58: #{elliptic_gnn_forward.4} parent=5 // pred_check_branch
      %2183 = sbr.rel (%p2181) target = $region60
    $region59: #{elliptic_gnn_forward.4} parent=5 // pred_region
      %s2184 = ssub.s32 %s12, 2
      // Predicated region
      $region61: #{elliptic_gnn_forward.4} parent=59 // pred_check
        %p2185 = pneg %p191
      $region62: #{elliptic_gnn_forward.4} parent=59 // pred_check_branch
        %2187 = sbr.rel (%p2185) target = $region64
      $region63: #{elliptic_gnn_forward.4} parent=59 // pred_region
        %s2188 = smul.u32 32, %s23
        %p2189 = scmp.lt.s32.totalorder %s2188, 63
        %s2190 = scalar_select %p2189, %s2188, 63
        %s2191 = smul.addr %s2190, 4
        %s2192 = scalar_lea.vmem %s6, %s2191
      $region64: #{elliptic_gnn_forward.4} parent=59 // pred_fallthru
        _
    $region60: #{elliptic_gnn_forward.4} parent=5 // pred_fallthru
      _
  $region6: #{elliptic_gnn_forward.4} parent=0 // loop_footer
    %s16 = sadd.s32 1, %s12
  $region7: #{elliptic_gnn_forward.4} parent=0 // loop_footer_branch
    %11 = sbr.rel target = $region3
  $region8: #{elliptic_gnn_forward.4} parent=0 // loop_exit
    _

// kernel: elliptic_gnn_forward.5
$region0: #{elliptic_gnn_forward.5}
  #allocation0 [shape = 'u32[]', space=smem, size = 0x4, offset = 0x4, fixed_abs, tag = 'smem constant byte address 0x4 - core index']
  #allocation1 [shape = 'u32[144,128]{1,0:T(1,128)}', space=vmem, size = 0x12000, scoped, tag = 'internal scratch']
  #allocation2 [shape = 'f32[256,128]{1,0:T(8,128)}', space=vmem, size = 0x20000, scoped, tag = 'scratch operand']
  %s0 = inlined_call_operand.vmem [shape: bf16[512,512], index: 0, kind: input, shape index: {}]
  %s1 = inlined_call_operand.vmem [shape: bf16[512,128], index: 1, kind: input, shape index: {}]
  %s2 = inlined_call_operand.vmem [shape: f32[512,1], index: 2, kind: input, shape index: {}]
  %s3 = inlined_call_operand.vmem [shape: f32[1,128], index: 3, kind: input, shape index: {}]
  %s4 = inlined_call_operand.vmem [shape: bf16[128,128], index: 4, kind: input, shape index: {}]
  %s5 = inlined_call_operand.vmem [shape: f32[1,128], index: 5, kind: input, shape index: {}]
  %s6 = inlined_call_operand.vmem [shape: bf16[512,128], index: 6, kind: output, shape index: {}]
  %s7 = sld [smem:[#allocation0]]
  $region65: #{elliptic_gnn_forward.5} parent=0
    _
  %s9 = ssub.s32 1, %s7
  %s10 = scalar_select 0, %s9, %s7
  loop: start=0, step=1, limit=4
  $region2: #{elliptic_gnn_forward.5} parent=0 // loop_pre_header
    _
  $region3: #{elliptic_gnn_forward.5} parent=0 // loop_header
    %s12 = sphi 0, %s16
    %p13 = scmp.ge.s32.totalorder %s12, 4
    %s19 = sphi 0, %s31
    %s20 = sphi 0, %s27
    %s21 = sphi 0, %s19
    %s22 = sphi 0, %s20
    %s23 = sphi 0, %s21
    %s24 = sphi 0, %s22
    %s36 = sphi 0, %s38
    %s39 = sphi 0, %s36
    %s40 = sphi 0, %s39
    %s56 = sphi 0, %s40
    %s60 = sphi 0, %s60
    %s62 = sphi 0, %s60
    %s63 = sphi 0, %s62
    %s77 = sphi 0, %s63
    %s83 = sphi 0, %s85
    %s86 = sphi 0, %s83
    %s87 = sphi 0, %s86
    %s103 = sphi 0, %s87
    %s107 = sphi 0, %s107
    %s109 = sphi 0, %s107
    %s110 = sphi 0, %s109
    %s124 = sphi 0, %s110
    %s128 = sphi 0, %s128
    %s130 = sphi 0, %s128
    %s131 = sphi 0, %s130
    %s145 = sphi 0, %s131
    %s149 = sphi 0, %s149
    %s151 = sphi 0, %s149
    %s152 = sphi 0, %s151
    %s166 = sphi 0, %s152
    %s172 = sphi 0, %s174
    %s175 = sphi 0, %s172
    %s176 = sphi 0, %s175
    %s192 = sphi 0, %s176
  $region4: #{elliptic_gnn_forward.5} parent=0 // loop_header_branch
    %15 = sbr.rel (%p13) target = $region8
  $region5: #{elliptic_gnn_forward.5} parent=0 // loop_body
    %s17 = ssub.s32 %s12, 1
    %s18 = ssub.s32 %s12, 2
    %s25 = sadd.s32 1, %s20
    %p26 = scmp.ge.s32.totalorder %s25, 1
    %s27 = scalar_select %p26, 0, %s25
    %s28 = sadd.s32 1, %s19
    %s29 = scalar_select %p26, %s28, %s19
    %p30 = scmp.ge.s32.totalorder %s29, 2
    %s31 = scalar_select %p30, 0, %s29
    %s32 = ssub.s32 %s19, %s31
    %s33 = ssub.s32 %s20, %s27
    %s34 = sor.u32 %s32, %s33
    %p35 = scmp.eq.s32.totalorder %s34, 0
    %s37 = sadd.s32 %s36, 1
    %s38 = scalar_select %p35, %s36, %s37
    %p41 = pneg %p35
    %p42 = scmp.eq.s32.totalorder %s12, 1
    %p43 = por %p41, %p42
    %p44 = scmp.ne.s32.totalorder %s36, %s39
    %p45 = scmp.eq.s32.totalorder %s12, 0
    %p46 = por %p44, %p45
    %p47 = scmp.ne.s32.totalorder %s36, %s39
    %p48 = scmp.eq.s32.totalorder %s17, 1
    %p49 = por %p47, %p48
    %p50 = scmp.ne.s32.totalorder %s39, %s40
    %p51 = scmp.eq.s32.totalorder %s17, 0
    %p52 = por %p50, %p51
    %p53 = scmp.ne.s32.totalorder %s39, %s40
    %p54 = scmp.eq.s32.totalorder %s18, 1
    %p55 = por %p53, %p54
    %p57 = scmp.ne.s32.totalorder %s40, %s56
    %p58 = scmp.eq.s32.totalorder %s18, 0
    %p59 = por %p57, %p58
    %s61 = sadd.s32 %s60, 1
    %p64 = scmp.eq.s32.totalorder %s12, 1
    %p65 = scmp.ne.s32.totalorder %s60, %s62
    %p66 = scmp.eq.s32.totalorder %s12, 0
    %p67 = por %p65, %p66
    %p68 = scmp.ne.s32.totalorder %s60, %s62
    %p69 = scmp.eq.s32.totalorder %s17, 1
    %p70 = por %p68, %p69
    %p71 = scmp.ne.s32.totalorder %s62, %s63
    %p72 = scmp.eq.s32.totalorder %s17, 0
    %p73 = por %p71, %p72
    %p74 = scmp.ne.s32.totalorder %s62, %s63
    %p75 = scmp.eq.s32.totalorder %s18, 1
    %p76 = por %p74, %p75
    %p78 = scmp.ne.s32.totalorder %s63, %s77
    %p79 = scmp.eq.s32.totalorder %s18, 0
    %p80 = por %p78, %p79
    %s81 = ssub.s32 %s19, %s31
    %p82 = scmp.eq.s32.totalorder %s81, 0
    %s84 = sadd.s32 %s83, 1
    %s85 = scalar_select %p82, %s83, %s84
    %p88 = pneg %p82
    %p89 = scmp.eq.s32.totalorder %s12, 1
    %p90 = por %p88, %p89
    %p91 = scmp.ne.s32.totalorder %s83, %s86
    %p92 = scmp.eq.s32.totalorder %s12, 0
    %p93 = por %p91, %p92
    %p94 = scmp.ne.s32.totalorder %s83, %s86
    %p95 = scmp.eq.s32.totalorder %s17, 1
    %p96 = por %p94, %p95
    %p97 = scmp.ne.s32.totalorder %s86, %s87
    %p98 = scmp.eq.s32.totalorder %s17, 0
    %p99 = por %p97, %p98
    %p100 = scmp.ne.s32.totalorder %s86, %s87
    %p101 = scmp.eq.s32.totalorder %s18, 1
    %p102 = por %p100, %p101
    %p104 = scmp.ne.s32.totalorder %s87, %s103
    %p105 = scmp.eq.s32.totalorder %s18, 0
    %p106 = por %p104, %p105
    %s108 = sadd.s32 %s107, 1
    %p111 = scmp.eq.s32.totalorder %s12, 1
    %p112 = scmp.ne.s32.totalorder %s107, %s109
    %p113 = scmp.eq.s32.totalorder %s12, 0
    %p114 = por %p112, %p113
    %p115 = scmp.ne.s32.totalorder %s107, %s109
    %p116 = scmp.eq.s32.totalorder %s17, 1
    %p117 = por %p115, %p116
    %p118 = scmp.ne.s32.totalorder %s109, %s110
    %p119 = scmp.eq.s32.totalorder %s17, 0
    %p120 = por %p118, %p119
    %p121 = scmp.ne.s32.totalorder %s109, %s110
    %p122 = scmp.eq.s32.totalorder %s18, 1
    %p123 = por %p121, %p122
    %p125 = scmp.ne.s32.totalorder %s110, %s124
    %p126 = scmp.eq.s32.totalorder %s18, 0
    %p127 = por %p125, %p126
    %s129 = sadd.s32 %s128, 1
    %p132 = scmp.eq.s32.totalorder %s12, 1
    %p133 = scmp.ne.s32.totalorder %s128, %s130
    %p134 = scmp.eq.s32.totalorder %s12, 0
    %p135 = por %p133, %p134
    %p136 = scmp.ne.s32.totalorder %s128, %s130
    %p137 = scmp.eq.s32.totalorder %s17, 1
    %p138 = por %p136, %p137
    %p139 = scmp.ne.s32.totalorder %s130, %s131
    %p140 = scmp.eq.s32.totalorder %s17, 0
    %p141 = por %p139, %p140
    %p142 = scmp.ne.s32.totalorder %s130, %s131
    %p143 = scmp.eq.s32.totalorder %s18, 1
    %p144 = por %p142, %p143
    %p146 = scmp.ne.s32.totalorder %s131, %s145
    %p147 = scmp.eq.s32.totalorder %s18, 0
    %p148 = por %p146, %p147
    %s150 = sadd.s32 %s149, 1
    %p153 = scmp.eq.s32.totalorder %s12, 1
    %p154 = scmp.ne.s32.totalorder %s149, %s151
    %p155 = scmp.eq.s32.totalorder %s12, 0
    %p156 = por %p154, %p155
    %p157 = scmp.ne.s32.totalorder %s149, %s151
    %p158 = scmp.eq.s32.totalorder %s17, 1
    %p159 = por %p157, %p158
    %p160 = scmp.ne.s32.totalorder %s151, %s152
    %p161 = scmp.eq.s32.totalorder %s17, 0
    %p162 = por %p160, %p161
    %p163 = scmp.ne.s32.totalorder %s151, %s152
    %p164 = scmp.eq.s32.totalorder %s18, 1
    %p165 = por %p163, %p164
    %p167 = scmp.ne.s32.totalorder %s152, %s166
    %p168 = scmp.eq.s32.totalorder %s18, 0
    %p169 = por %p167, %p168
    %s170 = ssub.s32 %s19, %s31
    %p171 = scmp.eq.s32.totalorder %s170, 0
    %s173 = sadd.s32 %s172, 1
    %s174 = scalar_select %p171, %s172, %s173
    %p177 = pneg %p171
    %p178 = scmp.eq.s32.totalorder %s12, 1
    %p179 = por %p177, %p178
    %p180 = scmp.ne.s32.totalorder %s172, %s175
    %p181 = scmp.eq.s32.totalorder %s12, 0
    %p182 = por %p180, %p181
    %p183 = scmp.ne.s32.totalorder %s172, %s175
    %p184 = scmp.eq.s32.totalorder %s17, 1
    %p185 = por %p183, %p184
    %p186 = scmp.ne.s32.totalorder %s175, %s176
    %p187 = scmp.eq.s32.totalorder %s17, 0
    %p188 = por %p186, %p187
    %p189 = scmp.ne.s32.totalorder %s175, %s176
    %p190 = scmp.eq.s32.totalorder %s18, 1
    %p191 = por %p189, %p190
    %p193 = scmp.ne.s32.totalorder %s176, %s192
    %p194 = scmp.eq.s32.totalorder %s18, 0
    %p195 = por %p193, %p194
    %p196 = scmp.le.s32.totalorder 1, %s12
    %p197 = scmp.lt.s32.totalorder %s12, 3
    %p198 = pnand %p196, %p197
    %p199 = pneg %p198
    // Predicated region
    $region9: #{elliptic_gnn_forward.5} parent=5 // pred_check
      _
    $region10: #{elliptic_gnn_forward.5} parent=5 // pred_check_branch
      %201 = sbr.rel (%p198) target = $region12
    $region11: #{elliptic_gnn_forward.5} parent=5 // pred_region
      %s202 = ssub.s32 %s12, 1
      // Predicated region
      $region13: #{elliptic_gnn_forward.5} parent=11 // pred_check
        %p203 = pneg %p73
      $region14: #{elliptic_gnn_forward.5} parent=11 // pred_check_branch
        %205 = sbr.rel (%p203) target = $region16
      $region15: #{elliptic_gnn_forward.5} parent=11 // pred_region
        _
      $region16: #{elliptic_gnn_forward.5} parent=11 // pred_fallthru
        _
      // Predicated region
      $region17: #{elliptic_gnn_forward.5} parent=11 // pred_check
        %p206 = pneg %p120
      $region18: #{elliptic_gnn_forward.5} parent=11 // pred_check_branch
        %208 = sbr.rel (%p206) target = $region20
      $region19: #{elliptic_gnn_forward.5} parent=11 // pred_region
        _
      $region20: #{elliptic_gnn_forward.5} parent=11 // pred_fallthru
        _
      // Predicated region
      $region21: #{elliptic_gnn_forward.5} parent=11 // pred_check
        %p209 = pneg %p141
      $region22: #{elliptic_gnn_forward.5} parent=11 // pred_check_branch
        %211 = sbr.rel (%p209) target = $region24
      $region23: #{elliptic_gnn_forward.5} parent=11 // pred_region
        _
      $region24: #{elliptic_gnn_forward.5} parent=11 // pred_fallthru
        _
      // Predicated region
      $region25: #{elliptic_gnn_forward.5} parent=11 // pred_check
        %p212 = pneg %p162
      $region26: #{elliptic_gnn_forward.5} parent=11 // pred_check_branch
        %214 = sbr.rel (%p212) target = $region28
      $region27: #{elliptic_gnn_forward.5} parent=11 // pred_region
        _
      $region28: #{elliptic_gnn_forward.5} parent=11 // pred_fallthru
        _
    $region12: #{elliptic_gnn_forward.5} parent=5 // pred_fallthru
      _
    %p215 = scmp.lt.s32.totalorder %s12, 2
    // Predicated region
    $region29: #{elliptic_gnn_forward.5} parent=5 // pred_check
      %p216 = pneg %p215
    $region30: #{elliptic_gnn_forward.5} parent=5 // pred_check_branch
      %218 = sbr.rel (%p216) target = $region32
    $region31: #{elliptic_gnn_forward.5} parent=5 // pred_region
      // Predicated region
      $region33: #{elliptic_gnn_forward.5} parent=31 // pred_check
        %p219 = pneg %p46
      $region34: #{elliptic_gnn_forward.5} parent=31 // pred_check_branch
        %221 = sbr.rel (%p219) target = $region36
      $region35: #{elliptic_gnn_forward.5} parent=31 // pred_region
        %s222 = smul.u32 32, %s19
        %s223 = smul.u32 4, %s20
        %p224 = scmp.lt.s32.totalorder %s222, 63
        %s225 = scalar_select %p224, %s222, 63
        %p226 = scmp.lt.s32.totalorder %s223, 3
        %s227 = scalar_select %p226, %s223, 3
        %s228 = smul.addr %s225, 4
        %s229 = sadd.s32 %s227, %s228
        %s230 = smul.addr %s229, 4
        %s231 = scalar_lea.vmem %s0, %s230
        %s232 = smul.u32 32, %s19
        %s233 = smul.u32 4, %s20
      $region36: #{elliptic_gnn_forward.5} parent=31 // pred_fallthru
        _
      // Predicated region
      $region37: #{elliptic_gnn_forward.5} parent=31 // pred_check
        %p234 = pneg %p93
      $region38: #{elliptic_gnn_forward.5} parent=31 // pred_check_branch
        %236 = sbr.rel (%p234) target = $region40
      $region39: #{elliptic_gnn_forward.5} parent=31 // pred_region
        %s237 = smul.u32 32, %s19
        %p238 = scmp.lt.s32.totalorder %s237, 63
        %s239 = scalar_select %p238, %s237, 63
        %s240 = smul.addr %s239, 8
        %s241 = scalar_lea.vmem %s2, %s240
        %s242 = smul.u32 32, %s19
      $region40: #{elliptic_gnn_forward.5} parent=31 // pred_fallthru
        _
    $region32: #{elliptic_gnn_forward.5} parent=5 // pred_fallthru
      _
    %p243 = scmp.le.s32.totalorder 1, %s12
    %p244 = scmp.lt.s32.totalorder %s12, 3
    %p245 = pnand %p243, %p244
    %p246 = pneg %p245
    // Predicated region
    $region41: #{elliptic_gnn_forward.5} parent=5 // pred_check
      _
    $region42: #{elliptic_gnn_forward.5} parent=5 // pred_check_branch
      %248 = sbr.rel (%p245) target = $region44
    $region43: #{elliptic_gnn_forward.5} parent=5 // pred_region
      %s249 = ssub.s32 %s12, 1
      %s250 = smul.u32 32, %s21
      %s251 = smul.u32 4, %s22
      %p252 = scmp.lt.s32.totalorder %s250, 63
      %s253 = scalar_select %p252, %s250, 63
      %p254 = scmp.lt.s32.totalorder %s251, 3
      %s255 = scalar_select %p254, %s251, 3
      %s256 = smul.addr %s253, 4
      %s257 = sadd.s32 %s255, %s256
      %s258 = smul.addr %s257, 4
      %s259 = scalar_lea.vmem %s0, %s258
      %p260 = pneg %p52
      %p261 = pneg %p49
      %p262 = pneg %p73
      %p263 = pneg %p70
      %s264 = smul.u32 32, %s21
      %p265 = scmp.lt.s32.totalorder %s264, 63
      %s266 = scalar_select %p265, %s264, 63
      %s267 = smul.addr %s266, 8
      %s268 = scalar_lea.vmem %s2, %s267
      %p269 = pneg %p99
      %p270 = pneg %p96
      %p271 = pneg %p120
      %p272 = pneg %p117
      %p273 = pneg %p141
      %p274 = pneg %p138
      %p275 = pneg %p162
      %p276 = pneg %p159
      %p277 = pneg %p188
      %p278 = pneg %p185
      %s279 = smul.u32 32, %s21
      %p280 = scmp.lt.s32.totalorder %s279, 63
      %s281 = scalar_select %p280, %s279, 63
      %s282 = smul.addr %s281, 4
      %s283 = scalar_lea.vmem %s6, %s282
      %s284 = smul.u32 32, %s21
      %s285 = smul.u32 4, %s22
      %p286 = scmp.lt.s32.totalorder %s284, 63
      %s287 = scalar_select %p286, %s284, 63
      %p288 = scmp.lt.s32.totalorder %s285, 3
      %s289 = scalar_select %p288, %s285, 3
      %s290 = smul.addr %s287, 4
      %s291 = sadd.s32 %s289, %s290
      %s292 = smul.addr %s291, 4
      %s293 = scalar_lea.vmem %s0, %s292
      %s294 = smul.u32 32, %s21
      %s295 = smul.u32 4, %s22
      %s296 = smul.u32 32, %s21
      %p297 = scmp.lt.s32.totalorder %s296, 63
      %s298 = scalar_select %p297, %s296, 63
      %s299 = smul.addr %s298, 8
      %s300 = scalar_lea.vmem %s2, %s299
      %s301 = smul.u32 32, %s21
      %s302 = smul.u32 32, %s21
      %p303 = scmp.lt.s32.totalorder %s302, 63
      %s304 = scalar_select %p303, %s302, 63
      %s305 = smul.addr %s304, 4
      %s306 = scalar_lea.vmem %s6, %s305
      %s307 = smul.u32 32, %s21
      %p309 = scmp.eq.s32.totalorder %s22, 0
      // Predicated region
      $region45: #{elliptic_gnn_forward.5} parent=43 // pred_check
        %p310 = pneg %p309
      $region46: #{elliptic_gnn_forward.5} parent=43 // pred_check_branch
        %312 = sbr.rel (%p310) target = $region48
      $region47: #{elliptic_gnn_forward.5} parent=43 // pred_region
        %313 = vst [vmem:[#allocation2] sm:$0xff] 0.0
        %314 = vst [vmem:[#allocation2 + $0x8] sm:$0xff] 0.0
        %315 = vst [vmem:[#allocation2 + $0x10] sm:$0xff] 0.0
        %316 = vst [vmem:[#allocation2 + $0x18] sm:$0xff] 0.0
        %317 = vst [vmem:[#allocation2 + $0x20] sm:$0xff] 0.0
        %318 = vst [vmem:[#allocation2 + $0x28] sm:$0xff] 0.0
        %319 = vst [vmem:[#allocation2 + $0x30] sm:$0xff] 0.0
        %320 = vst [vmem:[#allocation2 + $0x38] sm:$0xff] 0.0
        %321 = vst [vmem:[#allocation2 + $0x40] sm:$0xff] 0.0
        %322 = vst [vmem:[#allocation2 + $0x48] sm:$0xff] 0.0
        %323 = vst [vmem:[#allocation2 + $0x50] sm:$0xff] 0.0
        %324 = vst [vmem:[#allocation2 + $0x58] sm:$0xff] 0.0
        %325 = vst [vmem:[#allocation2 + $0x60] sm:$0xff] 0.0
        %326 = vst [vmem:[#allocation2 + $0x68] sm:$0xff] 0.0
        %327 = vst [vmem:[#allocation2 + $0x70] sm:$0xff] 0.0
        %328 = vst [vmem:[#allocation2 + $0x78] sm:$0xff] 0.0
        %329 = vst [vmem:[#allocation2 + $0x80] sm:$0xff] 0.0
        %330 = vst [vmem:[#allocation2 + $0x88] sm:$0xff] 0.0
        %331 = vst [vmem:[#allocation2 + $0x90] sm:$0xff] 0.0
        %332 = vst [vmem:[#allocation2 + $0x98] sm:$0xff] 0.0
        %333 = vst [vmem:[#allocation2 + $0xa0] sm:$0xff] 0.0
        %334 = vst [vmem:[#allocation2 + $0xa8] sm:$0xff] 0.0
        %335 = vst [vmem:[#allocation2 + $0xb0] sm:$0xff] 0.0
        %336 = vst [vmem:[#allocation2 + $0xb8] sm:$0xff] 0.0
        %337 = vst [vmem:[#allocation2 + $0xc0] sm:$0xff] 0.0
        %338 = vst [vmem:[#allocation2 + $0xc8] sm:$0xff] 0.0
        %339 = vst [vmem:[#allocation2 + $0xd0] sm:$0xff] 0.0
        %340 = vst [vmem:[#allocation2 + $0xd8] sm:$0xff] 0.0
        %341 = vst [vmem:[#allocation2 + $0xe0] sm:$0xff] 0.0
        %342 = vst [vmem:[#allocation2 + $0xe8] sm:$0xff] 0.0
        %343 = vst [vmem:[#allocation2 + $0xf0] sm:$0xff] 0.0
        %344 = vst [vmem:[#allocation2 + $0xf8] sm:$0xff] 0.0
      $region48: #{elliptic_gnn_forward.5} parent=43 // pred_fallthru
        _
      %s345 = smul.u32 %s22, 512
      %v346 = vld [vmem:[#allocation2] sm:$0xff]
      %v347 = vld [vmem:[#allocation2 + $0x8] sm:$0xff]
      %v348 = vld [vmem:[#allocation2 + $0x10] sm:$0xff]
      %v349 = vld [vmem:[#allocation2 + $0x18] sm:$0xff]
      %v350 = vld [vmem:[#allocation2 + $0x20] sm:$0xff]
      %v351 = vld [vmem:[#allocation2 + $0x28] sm:$0xff]
      %v352 = vld [vmem:[#allocation2 + $0x30] sm:$0xff]
      %v353 = vld [vmem:[#allocation2 + $0x38] sm:$0xff]
      %v354 = vld [vmem:[#allocation2 + $0x40] sm:$0xff]
      %v355 = vld [vmem:[#allocation2 + $0x48] sm:$0xff]
      %v356 = vld [vmem:[#allocation2 + $0x50] sm:$0xff]
      %v357 = vld [vmem:[#allocation2 + $0x58] sm:$0xff]
      %v358 = vld [vmem:[#allocation2 + $0x60] sm:$0xff]
      %v359 = vld [vmem:[#allocation2 + $0x68] sm:$0xff]
      %v360 = vld [vmem:[#allocation2 + $0x70] sm:$0xff]
      %v361 = vld [vmem:[#allocation2 + $0x78] sm:$0xff]
      %v362 = vld [vmem:[#allocation2 + $0x80] sm:$0xff]
      %v363 = vld [vmem:[#allocation2 + $0x88] sm:$0xff]
      %v364 = vld [vmem:[#allocation2 + $0x90] sm:$0xff]
      %v365 = vld [vmem:[#allocation2 + $0x98] sm:$0xff]
      %v366 = vld [vmem:[#allocation2 + $0xa0] sm:$0xff]
      %v367 = vld [vmem:[#allocation2 + $0xa8] sm:$0xff]
      %v368 = vld [vmem:[#allocation2 + $0xb0] sm:$0xff]
      %v369 = vld [vmem:[#allocation2 + $0xb8] sm:$0xff]
      %v370 = vld [vmem:[#allocation2 + $0xc0] sm:$0xff]
      %v371 = vld [vmem:[#allocation2 + $0xc8] sm:$0xff]
      %v372 = vld [vmem:[#allocation2 + $0xd0] sm:$0xff]
      %v373 = vld [vmem:[#allocation2 + $0xd8] sm:$0xff]
      %v374 = vld [vmem:[#allocation2 + $0xe0] sm:$0xff]
      %v375 = vld [vmem:[#allocation2 + $0xe8] sm:$0xff]
      %v376 = vld [vmem:[#allocation2 + $0xf0] sm:$0xff]
      %v377 = vld [vmem:[#allocation2 + $0xf8] sm:$0xff]
      %v378 = vld [vmem:[%s293] sm:$0xff]
      %v379 = vld [vmem:[%s293 + $0x8] sm:$0xff]
      %v380 = vld [vmem:[%s293 + $0x10] sm:$0xff]
      %v381 = vld [vmem:[%s293 + $0x18] sm:$0xff]
      %v382 = vld [vmem:[%s293 + $0x20] sm:$0xff]
      %v383 = vld [vmem:[%s293 + $0x28] sm:$0xff]
      %v384 = vld [vmem:[%s293 + $0x30] sm:$0xff]
      %v385 = vld [vmem:[%s293 + $0x38] sm:$0xff]
      %v386 = vld [vmem:[%s293 + $0x40] sm:$0xff]
      %v387 = vld [vmem:[%s293 + $0x48] sm:$0xff]
      %v388 = vld [vmem:[%s293 + $0x50] sm:$0xff]
      %v389 = vld [vmem:[%s293 + $0x58] sm:$0xff]
      %v390 = vld [vmem:[%s293 + $0x60] sm:$0xff]
      %v391 = vld [vmem:[%s293 + $0x68] sm:$0xff]
      %v392 = vld [vmem:[%s293 + $0x70] sm:$0xff]
      %v393 = vld [vmem:[%s293 + $0x78] sm:$0xff]
      %v394 = vld [vmem:[%s293 + $0x80] sm:$0xff]
      %v395 = vld [vmem:[%s293 + $0x88] sm:$0xff]
      %v396 = vld [vmem:[%s293 + $0x90] sm:$0xff]
      %v397 = vld [vmem:[%s293 + $0x98] sm:$0xff]
      %v398 = vld [vmem:[%s293 + $0xa0] sm:$0xff]
      %v399 = vld [vmem:[%s293 + $0xa8] sm:$0xff]
      %v400 = vld [vmem:[%s293 + $0xb0] sm:$0xff]
      %v401 = vld [vmem:[%s293 + $0xb8] sm:$0xff]
      %v402 = vld [vmem:[%s293 + $0xc0] sm:$0xff]
      %v403 = vld [vmem:[%s293 + $0xc8] sm:$0xff]
      %v404 = vld [vmem:[%s293 + $0xd0] sm:$0xff]
      %v405 = vld [vmem:[%s293 + $0xd8] sm:$0xff]
      %v406 = vld [vmem:[%s293 + $0xe0] sm:$0xff]
      %v407 = vld [vmem:[%s293 + $0xe8] sm:$0xff]
      %v408 = vld [vmem:[%s293 + $0xf0] sm:$0xff]
      %v409 = vld [vmem:[%s293 + $0xf8] sm:$0xff]
      %v410 = vld [vmem:[%s293 + $0x100] sm:$0xff]
      %v411 = vld [vmem:[%s293 + $0x108] sm:$0xff]
      %v412 = vld [vmem:[%s293 + $0x110] sm:$0xff]
      %v413 = vld [vmem:[%s293 + $0x118] sm:$0xff]
      %v414 = vld [vmem:[%s293 + $0x120] sm:$0xff]
      %v415 = vld [vmem:[%s293 + $0x128] sm:$0xff]
      %v416 = vld [vmem:[%s293 + $0x130] sm:$0xff]
      %v417 = vld [vmem:[%s293 + $0x138] sm:$0xff]
      %v418 = vld [vmem:[%s293 + $0x140] sm:$0xff]
      %v419 = vld [vmem:[%s293 + $0x148] sm:$0xff]
      %v420 = vld [vmem:[%s293 + $0x150] sm:$0xff]
      %v421 = vld [vmem:[%s293 + $0x158] sm:$0xff]
      %v422 = vld [vmem:[%s293 + $0x160] sm:$0xff]
      %v423 = vld [vmem:[%s293 + $0x168] sm:$0xff]
      %v424 = vld [vmem:[%s293 + $0x170] sm:$0xff]
      %v425 = vld [vmem:[%s293 + $0x178] sm:$0xff]
      %v426 = vld [vmem:[%s293 + $0x180] sm:$0xff]
      %v427 = vld [vmem:[%s293 + $0x188] sm:$0xff]
      %v428 = vld [vmem:[%s293 + $0x190] sm:$0xff]
      %v429 = vld [vmem:[%s293 + $0x198] sm:$0xff]
      %v430 = vld [vmem:[%s293 + $0x1a0] sm:$0xff]
      %v431 = vld [vmem:[%s293 + $0x1a8] sm:$0xff]
      %v432 = vld [vmem:[%s293 + $0x1b0] sm:$0xff]
      %v433 = vld [vmem:[%s293 + $0x1b8] sm:$0xff]
      %v434 = vld [vmem:[%s293 + $0x1c0] sm:$0xff]
      %v435 = vld [vmem:[%s293 + $0x1c8] sm:$0xff]
      %v436 = vld [vmem:[%s293 + $0x1d0] sm:$0xff]
      %v437 = vld [vmem:[%s293 + $0x1d8] sm:$0xff]
      %v438 = vld [vmem:[%s293 + $0x1e0] sm:$0xff]
      %v439 = vld [vmem:[%s293 + $0x1e8] sm:$0xff]
      %v440 = vld [vmem:[%s293 + $0x1f0] sm:$0xff]
      %v441 = vld [vmem:[%s293 + $0x1f8] sm:$0xff]
      %s442 = sshra.s32 %s345, 3
      %s443 = sand.u32 %s345, 7
      %s444 = smul.addr %s442, 4
      %s445 = scalar_lea.vmem %s1, %s444
      %v446 = vld [vmem:[%s445] sm:$0xf]
      %v447 = vld [vmem:[%s445 + $0x4] sm:$0xf]
      %v448 = vld [vmem:[%s445 + $0x8] sm:$0xf]
      %v449 = vld [vmem:[%s445 + $0xc] sm:$0xf]
      %v450 = vld [vmem:[%s445 + $0x10] sm:$0xf]
      %v451 = vld [vmem:[%s445 + $0x14] sm:$0xf]
      %v452 = vld [vmem:[%s445 + $0x18] sm:$0xf]
      %v453 = vld [vmem:[%s445 + $0x1c] sm:$0xf]
      %v454 = vld [vmem:[%s445 + $0x20] sm:$0xf]
      %v455 = vld [vmem:[%s445 + $0x24] sm:$0xf]
      %v456 = vld [vmem:[%s445 + $0x28] sm:$0xf]
      %v457 = vld [vmem:[%s445 + $0x2c] sm:$0xf]
      %v458 = vld [vmem:[%s445 + $0x30] sm:$0xf]
      %v459 = vld [vmem:[%s445 + $0x34] sm:$0xf]
      %v460 = vld [vmem:[%s445 + $0x38] sm:$0xf]
      %v461 = vld [vmem:[%s445 + $0x3c] sm:$0xf]
      %v462 = vld [vmem:[%s445 + $0x40] sm:$0xf]
      %v463 = vld [vmem:[%s445 + $0x44] sm:$0xf]
      %v464 = vld [vmem:[%s445 + $0x48] sm:$0xf]
      %v465 = vld [vmem:[%s445 + $0x4c] sm:$0xf]
      %v466 = vld [vmem:[%s445 + $0x50] sm:$0xf]
      %v467 = vld [vmem:[%s445 + $0x54] sm:$0xf]
      %v468 = vld [vmem:[%s445 + $0x58] sm:$0xf]
      %v469 = vld [vmem:[%s445 + $0x5c] sm:$0xf]
      %v470 = vld [vmem:[%s445 + $0x60] sm:$0xf]
      %v471 = vld [vmem:[%s445 + $0x64] sm:$0xf]
      %v472 = vld [vmem:[%s445 + $0x68] sm:$0xf]
      %v473 = vld [vmem:[%s445 + $0x6c] sm:$0xf]
      %v474 = vld [vmem:[%s445 + $0x70] sm:$0xf]
      %v475 = vld [vmem:[%s445 + $0x74] sm:$0xf]
      %v476 = vld [vmem:[%s445 + $0x78] sm:$0xf]
      %v477 = vld [vmem:[%s445 + $0x7c] sm:$0xf]
      %v478 = vld [vmem:[%s445 + $0x80] sm:$0xf]
      %v479 = vld [vmem:[%s445 + $0x84] sm:$0xf]
      %v480 = vld [vmem:[%s445 + $0x88] sm:$0xf]
      %v481 = vld [vmem:[%s445 + $0x8c] sm:$0xf]
      %v482 = vld [vmem:[%s445 + $0x90] sm:$0xf]
      %v483 = vld [vmem:[%s445 + $0x94] sm:$0xf]
      %v484 = vld [vmem:[%s445 + $0x98] sm:$0xf]
      %v485 = vld [vmem:[%s445 + $0x9c] sm:$0xf]
      %v486 = vld [vmem:[%s445 + $0xa0] sm:$0xf]
      %v487 = vld [vmem:[%s445 + $0xa4] sm:$0xf]
      %v488 = vld [vmem:[%s445 + $0xa8] sm:$0xf]
      %v489 = vld [vmem:[%s445 + $0xac] sm:$0xf]
      %v490 = vld [vmem:[%s445 + $0xb0] sm:$0xf]
      %v491 = vld [vmem:[%s445 + $0xb4] sm:$0xf]
      %v492 = vld [vmem:[%s445 + $0xb8] sm:$0xf]
      %v493 = vld [vmem:[%s445 + $0xbc] sm:$0xf]
      %v494 = vld [vmem:[%s445 + $0xc0] sm:$0xf]
      %v495 = vld [vmem:[%s445 + $0xc4] sm:$0xf]
      %v496 = vld [vmem:[%s445 + $0xc8] sm:$0xf]
      %v497 = vld [vmem:[%s445 + $0xcc] sm:$0xf]
      %v498 = vld [vmem:[%s445 + $0xd0] sm:$0xf]
      %v499 = vld [vmem:[%s445 + $0xd4] sm:$0xf]
      %v500 = vld [vmem:[%s445 + $0xd8] sm:$0xf]
      %v501 = vld [vmem:[%s445 + $0xdc] sm:$0xf]
      %v502 = vld [vmem:[%s445 + $0xe0] sm:$0xf]
      %v503 = vld [vmem:[%s445 + $0xe4] sm:$0xf]
      %v504 = vld [vmem:[%s445 + $0xe8] sm:$0xf]
      %v505 = vld [vmem:[%s445 + $0xec] sm:$0xf]
      %v506 = vld [vmem:[%s445 + $0xf0] sm:$0xf]
      %v507 = vld [vmem:[%s445 + $0xf4] sm:$0xf]
      %v508 = vld [vmem:[%s445 + $0xf8] sm:$0xf]
      %v509 = vld [vmem:[%s445 + $0xfc] sm:$0xf]
      %v574 = vunpack.c.l.b16 %v378
      %v575 = vunpack.c.h.b16 %v378
      %v576 = vunpack.c.l.b16 %v379
      %v577 = vunpack.c.h.b16 %v379
      %v578 = vunpack.c.l.b16 %v380
      %v579 = vunpack.c.h.b16 %v380
      %v580 = vunpack.c.l.b16 %v381
      %v581 = vunpack.c.h.b16 %v381
      %v582 = vunpack.c.l.b16 %v382
      %v583 = vunpack.c.h.b16 %v382
      %v584 = vunpack.c.l.b16 %v383
      %v585 = vunpack.c.h.b16 %v383
      %v586 = vunpack.c.l.b16 %v384
      %v587 = vunpack.c.h.b16 %v384
      %v588 = vunpack.c.l.b16 %v385
      %v589 = vunpack.c.h.b16 %v385
      %v590 = vunpack.c.l.b16 %v386
      %v591 = vunpack.c.h.b16 %v386
      %v592 = vunpack.c.l.b16 %v387
      %v593 = vunpack.c.h.b16 %v387
      %v594 = vunpack.c.l.b16 %v388
      %v595 = vunpack.c.h.b16 %v388
      %v596 = vunpack.c.l.b16 %v389
      %v597 = vunpack.c.h.b16 %v389
      %v598 = vunpack.c.l.b16 %v390
      %v599 = vunpack.c.h.b16 %v390
      %v600 = vunpack.c.l.b16 %v391
      %v601 = vunpack.c.h.b16 %v391
      %v602 = vunpack.c.l.b16 %v392
      %v603 = vunpack.c.h.b16 %v392
      %v604 = vunpack.c.l.b16 %v393
      %v605 = vunpack.c.h.b16 %v393
      %v606 = vunpack.c.l.b16 %v394
      %v607 = vunpack.c.h.b16 %v394
      %v608 = vunpack.c.l.b16 %v395
      %v609 = vunpack.c.h.b16 %v395
      %v610 = vunpack.c.l.b16 %v396
      %v611 = vunpack.c.h.b16 %v396
      %v612 = vunpack.c.l.b16 %v397
      %v613 = vunpack.c.h.b16 %v397
      %v614 = vunpack.c.l.b16 %v398
      %v615 = vunpack.c.h.b16 %v398
      %v616 = vunpack.c.l.b16 %v399
      %v617 = vunpack.c.h.b16 %v399
      %v618 = vunpack.c.l.b16 %v400
      %v619 = vunpack.c.h.b16 %v400
      %v620 = vunpack.c.l.b16 %v401
      %v621 = vunpack.c.h.b16 %v401
      %v622 = vunpack.c.l.b16 %v402
      %v623 = vunpack.c.h.b16 %v402
      %v624 = vunpack.c.l.b16 %v403
      %v625 = vunpack.c.h.b16 %v403
      %v626 = vunpack.c.l.b16 %v404
      %v627 = vunpack.c.h.b16 %v404
      %v628 = vunpack.c.l.b16 %v405
      %v629 = vunpack.c.h.b16 %v405
      %v630 = vunpack.c.l.b16 %v406
      %v631 = vunpack.c.h.b16 %v406
      %v632 = vunpack.c.l.b16 %v407
      %v633 = vunpack.c.h.b16 %v407
      %v634 = vunpack.c.l.b16 %v408
      %v635 = vunpack.c.h.b16 %v408
      %v636 = vunpack.c.l.b16 %v409
      %v637 = vunpack.c.h.b16 %v409
      %v638 = vunpack.c.l.b16 %v410
      %v639 = vunpack.c.h.b16 %v410
      %v640 = vunpack.c.l.b16 %v411
      %v641 = vunpack.c.h.b16 %v411
      %v642 = vunpack.c.l.b16 %v412
      %v643 = vunpack.c.h.b16 %v412
      %v644 = vunpack.c.l.b16 %v413
      %v645 = vunpack.c.h.b16 %v413
      %v646 = vunpack.c.l.b16 %v414
      %v647 = vunpack.c.h.b16 %v414
      %v648 = vunpack.c.l.b16 %v415
      %v649 = vunpack.c.h.b16 %v415
      %v650 = vunpack.c.l.b16 %v416
      %v651 = vunpack.c.h.b16 %v416
      %v652 = vunpack.c.l.b16 %v417
      %v653 = vunpack.c.h.b16 %v417
      %v654 = vunpack.c.l.b16 %v418
      %v655 = vunpack.c.h.b16 %v418
      %v656 = vunpack.c.l.b16 %v419
      %v657 = vunpack.c.h.b16 %v419
      %v658 = vunpack.c.l.b16 %v420
      %v659 = vunpack.c.h.b16 %v420
      %v660 = vunpack.c.l.b16 %v421
      %v661 = vunpack.c.h.b16 %v421
      %v662 = vunpack.c.l.b16 %v422
      %v663 = vunpack.c.h.b16 %v422
      %v664 = vunpack.c.l.b16 %v423
      %v665 = vunpack.c.h.b16 %v423
      %v666 = vunpack.c.l.b16 %v424
      %v667 = vunpack.c.h.b16 %v424
      %v668 = vunpack.c.l.b16 %v425
      %v669 = vunpack.c.h.b16 %v425
      %v670 = vunpack.c.l.b16 %v426
      %v671 = vunpack.c.h.b16 %v426
      %v672 = vunpack.c.l.b16 %v427
      %v673 = vunpack.c.h.b16 %v427
      %v674 = vunpack.c.l.b16 %v428
      %v675 = vunpack.c.h.b16 %v428
      %v676 = vunpack.c.l.b16 %v429
      %v677 = vunpack.c.h.b16 %v429
      %v678 = vunpack.c.l.b16 %v430
      %v679 = vunpack.c.h.b16 %v430
      %v680 = vunpack.c.l.b16 %v431
      %v681 = vunpack.c.h.b16 %v431
      %v682 = vunpack.c.l.b16 %v432
      %v683 = vunpack.c.h.b16 %v432
      %v684 = vunpack.c.l.b16 %v433
      %v685 = vunpack.c.h.b16 %v433
      %v686 = vunpack.c.l.b16 %v434
      %v687 = vunpack.c.h.b16 %v434
      %v688 = vunpack.c.l.b16 %v435
      %v689 = vunpack.c.h.b16 %v435
      %v690 = vunpack.c.l.b16 %v436
      %v691 = vunpack.c.h.b16 %v436
      %v692 = vunpack.c.l.b16 %v437
      %v693 = vunpack.c.h.b16 %v437
      %v694 = vunpack.c.l.b16 %v438
      %v695 = vunpack.c.h.b16 %v438
      %v696 = vunpack.c.l.b16 %v439
      %v697 = vunpack.c.h.b16 %v439
      %v698 = vunpack.c.l.b16 %v440
      %v699 = vunpack.c.h.b16 %v440
      %v700 = vunpack.c.l.b16 %v441
      %v701 = vunpack.c.h.b16 %v441
      %v702 = vpack.c.b16 %v578, %v574
      %v703 = vpack.c.b16 %v579, %v575
      %v704 = vpack.c.b16 %v580, %v576
      %v705 = vpack.c.b16 %v581, %v577
      %v706 = vpack.c.b16 %v586, %v582
      %v707 = vpack.c.b16 %v587, %v583
      %v708 = vpack.c.b16 %v588, %v584
      %v709 = vpack.c.b16 %v589, %v585
      %v710 = vpack.c.b16 %v594, %v590
      %v711 = vpack.c.b16 %v595, %v591
      %v712 = vpack.c.b16 %v596, %v592
      %v713 = vpack.c.b16 %v597, %v593
      %v714 = vpack.c.b16 %v602, %v598
      %v715 = vpack.c.b16 %v603, %v599
      %v716 = vpack.c.b16 %v604, %v600
      %v717 = vpack.c.b16 %v605, %v601
      %v718 = vpack.c.b16 %v610, %v606
      %v719 = vpack.c.b16 %v611, %v607
      %v720 = vpack.c.b16 %v612, %v608
      %v721 = vpack.c.b16 %v613, %v609
      %v722 = vpack.c.b16 %v618, %v614
      %v723 = vpack.c.b16 %v619, %v615
      %v724 = vpack.c.b16 %v620, %v616
      %v725 = vpack.c.b16 %v621, %v617
      %v726 = vpack.c.b16 %v626, %v622
      %v727 = vpack.c.b16 %v627, %v623
      %v728 = vpack.c.b16 %v628, %v624
      %v729 = vpack.c.b16 %v629, %v625
      %v730 = vpack.c.b16 %v634, %v630
      %v731 = vpack.c.b16 %v635, %v631
      %v732 = vpack.c.b16 %v636, %v632
      %v733 = vpack.c.b16 %v637, %v633
      %v734 = vpack.c.b16 %v642, %v638
      %v735 = vpack.c.b16 %v643, %v639
      %v736 = vpack.c.b16 %v644, %v640
      %v737 = vpack.c.b16 %v645, %v641
      %v738 = vpack.c.b16 %v650, %v646
      %v739 = vpack.c.b16 %v651, %v647
      %v740 = vpack.c.b16 %v652, %v648
      %v741 = vpack.c.b16 %v653, %v649
      %v742 = vpack.c.b16 %v658, %v654
      %v743 = vpack.c.b16 %v659, %v655
      %v744 = vpack.c.b16 %v660, %v656
      %v745 = vpack.c.b16 %v661, %v657
      %v746 = vpack.c.b16 %v666, %v662
      %v747 = vpack.c.b16 %v667, %v663
      %v748 = vpack.c.b16 %v668, %v664
      %v749 = vpack.c.b16 %v669, %v665
      %v750 = vpack.c.b16 %v674, %v670
      %v751 = vpack.c.b16 %v675, %v671
      %v752 = vpack.c.b16 %v676, %v672
      %v753 = vpack.c.b16 %v677, %v673
      %v754 = vpack.c.b16 %v682, %v678
      %v755 = vpack.c.b16 %v683, %v679
      %v756 = vpack.c.b16 %v684, %v680
      %v757 = vpack.c.b16 %v685, %v681
      %v758 = vpack.c.b16 %v690, %v686
      %v759 = vpack.c.b16 %v691, %v687
      %v760 = vpack.c.b16 %v692, %v688
      %v761 = vpack.c.b16 %v693, %v689
      %v762 = vpack.c.b16 %v698, %v694
      %v763 = vpack.c.b16 %v699, %v695
      %v764 = vpack.c.b16 %v700, %v696
      %v765 = vpack.c.b16 %v701, %v697
      %v894 = vunpack.c.l.b16 %v446
      %v895 = vunpack.c.l.b16 %v447
      %v896 = vunpack.c.l.b16 %v448
      %v897 = vunpack.c.l.b16 %v449
      %v898 = vunpack.c.l.b16 %v450
      %v899 = vunpack.c.l.b16 %v451
      %v900 = vunpack.c.l.b16 %v452
      %v901 = vunpack.c.l.b16 %v453
      %v902 = vunpack.c.l.b16 %v454
      %v903 = vunpack.c.l.b16 %v455
      %v904 = vunpack.c.l.b16 %v456
      %v905 = vunpack.c.l.b16 %v457
      %v906 = vunpack.c.l.b16 %v458
      %v907 = vunpack.c.l.b16 %v459
      %v908 = vunpack.c.l.b16 %v460
      %v909 = vunpack.c.l.b16 %v461
      %v910 = vunpack.c.l.b16 %v462
      %v911 = vunpack.c.l.b16 %v463
      %v912 = vunpack.c.l.b16 %v464
      %v913 = vunpack.c.l.b16 %v465
      %v914 = vunpack.c.l.b16 %v466
      %v915 = vunpack.c.l.b16 %v467
      %v916 = vunpack.c.l.b16 %v468
      %v917 = vunpack.c.l.b16 %v469
      %v918 = vunpack.c.l.b16 %v470
      %v919 = vunpack.c.l.b16 %v471
      %v920 = vunpack.c.l.b16 %v472
      %v921 = vunpack.c.l.b16 %v473
      %v922 = vunpack.c.l.b16 %v474
      %v923 = vunpack.c.l.b16 %v475
      %v924 = vunpack.c.l.b16 %v476
      %v925 = vunpack.c.l.b16 %v477
      %v926 = vunpack.c.l.b16 %v478
      %v927 = vunpack.c.l.b16 %v479
      %v928 = vunpack.c.l.b16 %v480
      %v929 = vunpack.c.l.b16 %v481
      %v930 = vunpack.c.l.b16 %v482
      %v931 = vunpack.c.l.b16 %v483
      %v932 = vunpack.c.l.b16 %v484
      %v933 = vunpack.c.l.b16 %v485
      %v934 = vunpack.c.l.b16 %v486
      %v935 = vunpack.c.l.b16 %v487
      %v936 = vunpack.c.l.b16 %v488
      %v937 = vunpack.c.l.b16 %v489
      %v938 = vunpack.c.l.b16 %v490
      %v939 = vunpack.c.l.b16 %v491
      %v940 = vunpack.c.l.b16 %v492
      %v941 = vunpack.c.l.b16 %v493
      %v942 = vunpack.c.l.b16 %v494
      %v943 = vunpack.c.l.b16 %v495
      %v944 = vunpack.c.l.b16 %v496
      %v945 = vunpack.c.l.b16 %v497
      %v946 = vunpack.c.l.b16 %v498
      %v947 = vunpack.c.l.b16 %v499
      %v948 = vunpack.c.l.b16 %v500
      %v949 = vunpack.c.l.b16 %v501
      %v950 = vunpack.c.l.b16 %v502
      %v951 = vunpack.c.l.b16 %v503
      %v952 = vunpack.c.l.b16 %v504
      %v953 = vunpack.c.l.b16 %v505
      %v954 = vunpack.c.l.b16 %v506
      %v955 = vunpack.c.l.b16 %v507
      %v956 = vunpack.c.l.b16 %v508
      %v957 = vunpack.c.l.b16 %v509
      %v958 = vpack.c.b16 %v895, %v894
      %v959 = vpack.c.b16 %v897, %v896
      %v960 = vpack.c.b16 %v899, %v898
      %v961 = vpack.c.b16 %v901, %v900
      %v962 = vpack.c.b16 %v903, %v902
      %v963 = vpack.c.b16 %v905, %v904
      %v964 = vpack.c.b16 %v907, %v906
      %v965 = vpack.c.b16 %v909, %v908
      %v966 = vpack.c.b16 %v911, %v910
      %v967 = vpack.c.b16 %v913, %v912
      %v968 = vpack.c.b16 %v915, %v914
      %v969 = vpack.c.b16 %v917, %v916
      %v970 = vpack.c.b16 %v919, %v918
      %v971 = vpack.c.b16 %v921, %v920
      %v972 = vpack.c.b16 %v923, %v922
      %v973 = vpack.c.b16 %v925, %v924
      %v974 = vpack.c.b16 %v927, %v926
      %v975 = vpack.c.b16 %v929, %v928
      %v976 = vpack.c.b16 %v931, %v930
      %v977 = vpack.c.b16 %v933, %v932
      %v978 = vpack.c.b16 %v935, %v934
      %v979 = vpack.c.b16 %v937, %v936
      %v980 = vpack.c.b16 %v939, %v938
      %v981 = vpack.c.b16 %v941, %v940
      %v982 = vpack.c.b16 %v943, %v942
      %v983 = vpack.c.b16 %v945, %v944
      %v984 = vpack.c.b16 %v947, %v946
      %v985 = vpack.c.b16 %v949, %v948
      %v986 = vpack.c.b16 %v951, %v950
      %v987 = vpack.c.b16 %v953, %v952
      %v988 = vpack.c.b16 %v955, %v954
      %v989 = vpack.c.b16 %v957, %v956
      %1022 = vmatprep.subr.bf16.mxu0 0
      %1023 = vmatpush1.bf16.msra.mxu0 %v958
      %1024 = vmatprep.subr.bf16.mxu0 0
      %1025 = vmatpush1.bf16.msra.mxu0 %v959
      %1026 = vmatprep.subr.bf16.mxu0 0
      %1027 = vmatpush1.bf16.msra.mxu0 %v960
      %1028 = vmatprep.subr.bf16.mxu0 0
      %1029 = vmatpush1.bf16.msra.mxu0 %v961
      %1030 = vmatprep.subr.bf16.mxu0 0
      %1031 = vmatpush1.bf16.msra.mxu0 %v962
      %1032 = vmatprep.subr.bf16.mxu0 0
      %1033 = vmatpush1.bf16.msra.mxu0 %v963
      %1034 = vmatprep.subr.bf16.mxu0 0
      %1035 = vmatpush1.bf16.msra.mxu0 %v964
      %1036 = vmatprep.subr.bf16.mxu0 0
      %1037 = vmatpush1.bf16.msra.mxu0 %v965
      %1038 = vmatprep.subr.bf16.mxu0 0
      %1039 = vmatpush1.bf16.msra.mxu0 %v966
      %1040 = vmatprep.subr.bf16.mxu0 0
      %1041 = vmatpush1.bf16.msra.mxu0 %v967
      %1042 = vmatprep.subr.bf16.mxu0 0
      %1043 = vmatpush1.bf16.msra.mxu0 %v968
      %1044 = vmatprep.subr.bf16.mxu0 0
      %1045 = vmatpush1.bf16.msra.mxu0 %v969
      %1046 = vmatprep.subr.bf16.mxu0 0
      %1047 = vmatpush1.bf16.msra.mxu0 %v970
      %1048 = vmatprep.subr.bf16.mxu0 0
      %1049 = vmatpush1.bf16.msra.mxu0 %v971
      %1050 = vmatprep.subr.bf16.mxu0 0
      %1051 = vmatpush1.bf16.msra.mxu0 %v972
      %1052 = vmatprep.subr.bf16.mxu0 0
      %1053 = vmatpush1.bf16.msra.mxu0 %v973
      %1054 = vmatprep.mubr.bf16.mxu0 %v703
      %1055 = vmatmul.mubr.bf16.gmra.mrb[0].mxu0 %v702
      %v1056 = vpop.f32.mrb[0].mxu0
      %v1057 = vadd.f32 0.0, %v1056
      %v1058 = vpop.f32.mrb[0].mxu0
      %v1059 = vpop.f32.mrb[0].mxu0
      %v1060 = vadd.f32 0.0, %v1059
      %v1061 = vpop.f32.mrb[0].mxu0
      %1062 = vmatprep.mubr.bf16.mxu0 %v707
      %1063 = vmatmul.mubr.bf16.gmra.mrb[0].mxu0 %v706
      %v1064 = vpop.f32.mrb[0].mxu0
      %v1065 = vadd.f32 0.0, %v1064
      %v1066 = vpop.f32.mrb[0].mxu0
      %v1067 = vpop.f32.mrb[0].mxu0
      %v1068 = vadd.f32 0.0, %v1067
      %v1069 = vpop.f32.mrb[0].mxu0
      %1070 = vmatprep.mubr.bf16.mxu0 %v711
      %1071 = vmatmul.mubr.bf16.gmra.mrb[0].mxu0 %v710
      %v1072 = vpop.f32.mrb[0].mxu0
      %v1073 = vadd.f32 0.0, %v1072
      %v1074 = vpop.f32.mrb[0].mxu0
      %v1075 = vpop.f32.mrb[0].mxu0
      %v1076 = vadd.f32 0.0, %v1075
      %v1077 = vpop.f32.mrb[0].mxu0
      %1078 = vmatprep.mubr.bf16.mxu0 %v715
      %1079 = vmatmul.mubr.bf16.gmra.mrb[0].mxu0 %v714
      %v1080 = vpop.f32.mrb[0].mxu0
      %v1081 = vadd.f32 0.0, %v1080
      %v1082 = vpop.f32.mrb[0].mxu0
      %v1083 = vpop.f32.mrb[0].mxu0
      %v1084 = vadd.f32 0.0, %v1083
      %v1085 = vpop.f32.mrb[0].mxu0
      %1086 = vmatprep.mubr.bf16.mxu0 %v719
      %1087 = vmatmul.mubr.bf16.gmra.mrb[0].mxu0 %v718
      %v1088 = vpop.f32.mrb[0].mxu0
      %v1089 = vadd.f32 0.0, %v1088
      %v1090 = vpop.f32.mrb[0].mxu0
      %v1091 = vpop.f32.mrb[0].mxu0
      %v1092 = vadd.f32 0.0, %v1091
      %v1093 = vpop.f32.mrb[0].mxu0
      %1094 = vmatprep.mubr.bf16.mxu0 %v723
      %1095 = vmatmul.mubr.bf16.gmra.mrb[0].mxu0 %v722
      %v1096 = vpop.f32.mrb[0].mxu0
      %v1097 = vadd.f32 0.0, %v1096
      %v1098 = vpop.f32.mrb[0].mxu0
      %v1099 = vpop.f32.mrb[0].mxu0
      %v1100 = vadd.f32 0.0, %v1099
      %v1101 = vpop.f32.mrb[0].mxu0
      %1102 = vmatprep.mubr.bf16.mxu0 %v727
      %1103 = vmatmul.mubr.bf16.gmra.mrb[0].mxu0 %v726
      %v1104 = vpop.f32.mrb[0].mxu0
      %v1105 = vadd.f32 0.0, %v1104
      %v1106 = vpop.f32.mrb[0].mxu0
      %v1107 = vpop.f32.mrb[0].mxu0
      %v1108 = vadd.f32 0.0, %v1107
      %v1109 = vpop.f32.mrb[0].mxu0
      %1110 = vmatprep.mubr.bf16.mxu0 %v731
      %1111 = vmatmul.mubr.bf16.gmra.mrb[0].mxu0 %v730
      %v1112 = vpop.f32.mrb[0].mxu0
      %v1113 = vadd.f32 0.0, %v1112
      %v1114 = vpop.f32.mrb[0].mxu0
      %v1115 = vpop.f32.mrb[0].mxu0
      %v1116 = vadd.f32 0.0, %v1115
      %v1117 = vpop.f32.mrb[0].mxu0
      %1118 = vmatprep.mubr.bf16.mxu0 %v735
      %1119 = vmatmul.mubr.bf16.gmra.mrb[0].mxu0 %v734
      %v1120 = vpop.f32.mrb[0].mxu0
      %v1121 = vadd.f32 0.0, %v1120
      %v1122 = vpop.f32.mrb[0].mxu0
      %v1123 = vpop.f32.mrb[0].mxu0
      %v1124 = vadd.f32 0.0, %v1123
      %v1125 = vpop.f32.mrb[0].mxu0
      %1126 = vmatprep.mubr.bf16.mxu0 %v739
      %1127 = vmatmul.mubr.bf16.gmra.mrb[0].mxu0 %v738
      %v1128 = vpop.f32.mrb[0].mxu0
      %v1129 = vadd.f32 0.0, %v1128
      %v1130 = vpop.f32.mrb[0].mxu0
      %v1131 = vpop.f32.mrb[0].mxu0
      %v1132 = vadd.f32 0.0, %v1131
      %v1133 = vpop.f32.mrb[0].mxu0
      %1134 = vmatprep.mubr.bf16.mxu0 %v743
      %1135 = vmatmul.mubr.bf16.gmra.mrb[0].mxu0 %v742
      %v1136 = vpop.f32.mrb[0].mxu0
      %v1137 = vadd.f32 0.0, %v1136
      %v1138 = vpop.f32.mrb[0].mxu0
      %v1139 = vpop.f32.mrb[0].mxu0
      %v1140 = vadd.f32 0.0, %v1139
      %v1141 = vpop.f32.mrb[0].mxu0
      %1142 = vmatprep.mubr.bf16.mxu0 %v747
      %1143 = vmatmul.mubr.bf16.gmra.mrb[0].mxu0 %v746
      %v1144 = vpop.f32.mrb[0].mxu0
      %v1145 = vadd.f32 0.0, %v1144
      %v1146 = vpop.f32.mrb[0].mxu0
      %v1147 = vpop.f32.mrb[0].mxu0
      %v1148 = vadd.f32 0.0, %v1147
      %v1149 = vpop.f32.mrb[0].mxu0
      %1150 = vmatprep.mubr.bf16.mxu0 %v751
      %1151 = vmatmul.mubr.bf16.gmra.mrb[0].mxu0 %v750
      %v1152 = vpop.f32.mrb[0].mxu0
      %v1153 = vadd.f32 0.0, %v1152
      %v1154 = vpop.f32.mrb[0].mxu0
      %v1155 = vpop.f32.mrb[0].mxu0
      %v1156 = vadd.f32 0.0, %v1155
      %v1157 = vpop.f32.mrb[0].mxu0
      %1158 = vmatprep.mubr.bf16.mxu0 %v755
      %1159 = vmatmul.mubr.bf16.gmra.mrb[0].mxu0 %v754
      %v1160 = vpop.f32.mrb[0].mxu0
      %v1161 = vadd.f32 0.0, %v1160
      %v1162 = vpop.f32.mrb[0].mxu0
      %v1163 = vpop.f32.mrb[0].mxu0
      %v1164 = vadd.f32 0.0, %v1163
      %v1165 = vpop.f32.mrb[0].mxu0
      %1166 = vmatprep.mubr.bf16.mxu0 %v759
      %1167 = vmatmul.mubr.bf16.gmra.mrb[0].mxu0 %v758
      %v1168 = vpop.f32.mrb[0].mxu0
      %v1169 = vadd.f32 0.0, %v1168
      %v1170 = vpop.f32.mrb[0].mxu0
      %v1171 = vpop.f32.mrb[0].mxu0
      %v1172 = vadd.f32 0.0, %v1171
      %v1173 = vpop.f32.mrb[0].mxu0
      %1174 = vmatprep.mubr.bf16.mxu0 %v763
      %1175 = vmatmul.mubr.bf16.gmra.mrb[0].mxu0 %v762
      %v1176 = vpop.f32.mrb[0].mxu0
      %v1177 = vadd.f32 0.0, %v1176
      %v1178 = vpop.f32.mrb[0].mxu0
      %v1179 = vpop.f32.mrb[0].mxu0
      %v1180 = vadd.f32 0.0, %v1179
      %v1181 = vpop.f32.mrb[0].mxu0
      %1182 = vdwg.mxu0
      %1183 = vmatprep.subr.bf16.mxu0 0
      %1184 = vmatpush1.bf16.msra.mxu0 %v974
      %1185 = vmatprep.subr.bf16.mxu0 0
      %1186 = vmatpush1.bf16.msra.mxu0 %v975
      %1187 = vmatprep.subr.bf16.mxu0 0
      %1188 = vmatpush1.bf16.msra.mxu0 %v976
      %1189 = vmatprep.subr.bf16.mxu0 0
      %1190 = vmatpush1.bf16.msra.mxu0 %v977
      %1191 = vmatprep.subr.bf16.mxu0 0
      %1192 = vmatpush1.bf16.msra.mxu0 %v978
      %1193 = vmatprep.subr.bf16.mxu0 0
      %1194 = vmatpush1.bf16.msra.mxu0 %v979
      %1195 = vmatprep.subr.bf16.mxu0 0
      %1196 = vmatpush1.bf16.msra.mxu0 %v980
      %1197 = vmatprep.subr.bf16.mxu0 0
      %1198 = vmatpush1.bf16.msra.mxu0 %v981
      %1199 = vmatprep.subr.bf16.mxu0 0
      %1200 = vmatpush1.bf16.msra.mxu0 %v982
      %1201 = vmatprep.subr.bf16.mxu0 0
      %1202 = vmatpush1.bf16.msra.mxu0 %v983
      %1203 = vmatprep.subr.bf16.mxu0 0
      %1204 = vmatpush1.bf16.msra.mxu0 %v984
      %1205 = vmatprep.subr.bf16.mxu0 0
      %1206 = vmatpush1.bf16.msra.mxu0 %v985
      %1207 = vmatprep.subr.bf16.mxu0 0
      %1208 = vmatpush1.bf16.msra.mxu0 %v986
      %1209 = vmatprep.subr.bf16.mxu0 0
      %1210 = vmatpush1.bf16.msra.mxu0 %v987
      %1211 = vmatprep.subr.bf16.mxu0 0
      %1212 = vmatpush1.bf16.msra.mxu0 %v988
      %1213 = vmatprep.subr.bf16.mxu0 0
      %1214 = vmatpush1.bf16.msra.mxu0 %v989
      %1215 = vmatprep.mubr.bf16.mxu0 %v705
      %1216 = vmatmul.mubr.bf16.gmra.mrb[0].mxu0 %v704
      %v1217 = vpop.f32.mrb[0].mxu0
      %v1218 = vadd.f32 %v1057, %v1217
      %v1219 = vpop.f32.mrb[0].mxu0
      %v1220 = vpop.f32.mrb[0].mxu0
      %v1221 = vadd.f32 %v1060, %v1220
      %v1222 = vpop.f32.mrb[0].mxu0
      %1223 = vmatprep.mubr.bf16.mxu0 %v709
      %1224 = vmatmul.mubr.bf16.gmra.mrb[0].mxu0 %v708
      %v1225 = vpop.f32.mrb[0].mxu0
      %v1226 = vadd.f32 %v1065, %v1225
      %v1227 = vpop.f32.mrb[0].mxu0
      %v1228 = vpop.f32.mrb[0].mxu0
      %v1229 = vadd.f32 %v1068, %v1228
      %v1230 = vpop.f32.mrb[0].mxu0
      %1231 = vmatprep.mubr.bf16.mxu0 %v713
      %1232 = vmatmul.mubr.bf16.gmra.mrb[0].mxu0 %v712
      %v1233 = vpop.f32.mrb[0].mxu0
      %v1234 = vadd.f32 %v1073, %v1233
      %v1235 = vpop.f32.mrb[0].mxu0
      %v1236 = vpop.f32.mrb[0].mxu0
      %v1237 = vadd.f32 %v1076, %v1236
      %v1238 = vpop.f32.mrb[0].mxu0
      %1239 = vmatprep.mubr.bf16.mxu0 %v717
      %1240 = vmatmul.mubr.bf16.gmra.mrb[0].mxu0 %v716
      %v1241 = vpop.f32.mrb[0].mxu0
      %v1242 = vadd.f32 %v1081, %v1241
      %v1243 = vpop.f32.mrb[0].mxu0
      %v1244 = vpop.f32.mrb[0].mxu0
      %v1245 = vadd.f32 %v1084, %v1244
      %v1246 = vpop.f32.mrb[0].mxu0
      %1247 = vmatprep.mubr.bf16.mxu0 %v721
      %1248 = vmatmul.mubr.bf16.gmra.mrb[0].mxu0 %v720
      %v1249 = vpop.f32.mrb[0].mxu0
      %v1250 = vadd.f32 %v1089, %v1249
      %v1251 = vpop.f32.mrb[0].mxu0
      %v1252 = vpop.f32.mrb[0].mxu0
      %v1253 = vadd.f32 %v1092, %v1252
      %v1254 = vpop.f32.mrb[0].mxu0
      %1255 = vmatprep.mubr.bf16.mxu0 %v725
      %1256 = vmatmul.mubr.bf16.gmra.mrb[0].mxu0 %v724
      %v1257 = vpop.f32.mrb[0].mxu0
      %v1258 = vadd.f32 %v1097, %v1257
      %v1259 = vpop.f32.mrb[0].mxu0
      %v1260 = vpop.f32.mrb[0].mxu0
      %v1261 = vadd.f32 %v1100, %v1260
      %v1262 = vpop.f32.mrb[0].mxu0
      %1263 = vmatprep.mubr.bf16.mxu0 %v729
      %1264 = vmatmul.mubr.bf16.gmra.mrb[0].mxu0 %v728
      %v1265 = vpop.f32.mrb[0].mxu0
      %v1266 = vadd.f32 %v1105, %v1265
      %v1267 = vpop.f32.mrb[0].mxu0
      %v1268 = vpop.f32.mrb[0].mxu0
      %v1269 = vadd.f32 %v1108, %v1268
      %v1270 = vpop.f32.mrb[0].mxu0
      %1271 = vmatprep.mubr.bf16.mxu0 %v733
      %1272 = vmatmul.mubr.bf16.gmra.mrb[0].mxu0 %v732
      %v1273 = vpop.f32.mrb[0].mxu0
      %v1274 = vadd.f32 %v1113, %v1273
      %v1275 = vpop.f32.mrb[0].mxu0
      %v1276 = vpop.f32.mrb[0].mxu0
      %v1277 = vadd.f32 %v1116, %v1276
      %v1278 = vpop.f32.mrb[0].mxu0
      %1279 = vmatprep.mubr.bf16.mxu0 %v737
      %1280 = vmatmul.mubr.bf16.gmra.mrb[0].mxu0 %v736
      %v1281 = vpop.f32.mrb[0].mxu0
      %v1282 = vadd.f32 %v1121, %v1281
      %v1283 = vpop.f32.mrb[0].mxu0
      %v1284 = vpop.f32.mrb[0].mxu0
      %v1285 = vadd.f32 %v1124, %v1284
      %v1286 = vpop.f32.mrb[0].mxu0
      %1287 = vmatprep.mubr.bf16.mxu0 %v741
      %1288 = vmatmul.mubr.bf16.gmra.mrb[0].mxu0 %v740
      %v1289 = vpop.f32.mrb[0].mxu0
      %v1290 = vadd.f32 %v1129, %v1289
      %v1291 = vpop.f32.mrb[0].mxu0
      %v1292 = vpop.f32.mrb[0].mxu0
      %v1293 = vadd.f32 %v1132, %v1292
      %v1294 = vpop.f32.mrb[0].mxu0
      %1295 = vmatprep.mubr.bf16.mxu0 %v745
      %1296 = vmatmul.mubr.bf16.gmra.mrb[0].mxu0 %v744
      %v1297 = vpop.f32.mrb[0].mxu0
      %v1298 = vadd.f32 %v1137, %v1297
      %v1299 = vpop.f32.mrb[0].mxu0
      %v1300 = vpop.f32.mrb[0].mxu0
      %v1301 = vadd.f32 %v1140, %v1300
      %v1302 = vpop.f32.mrb[0].mxu0
      %1303 = vmatprep.mubr.bf16.mxu0 %v749
      %1304 = vmatmul.mubr.bf16.gmra.mrb[0].mxu0 %v748
      %v1305 = vpop.f32.mrb[0].mxu0
      %v1306 = vadd.f32 %v1145, %v1305
      %v1307 = vpop.f32.mrb[0].mxu0
      %v1308 = vpop.f32.mrb[0].mxu0
      %v1309 = vadd.f32 %v1148, %v1308
      %v1310 = vpop.f32.mrb[0].mxu0
      %1311 = vmatprep.mubr.bf16.mxu0 %v753
      %1312 = vmatmul.mubr.bf16.gmra.mrb[0].mxu0 %v752
      %v1313 = vpop.f32.mrb[0].mxu0
      %v1314 = vadd.f32 %v1153, %v1313
      %v1315 = vpop.f32.mrb[0].mxu0
      %v1316 = vpop.f32.mrb[0].mxu0
      %v1317 = vadd.f32 %v1156, %v1316
      %v1318 = vpop.f32.mrb[0].mxu0
      %1319 = vmatprep.mubr.bf16.mxu0 %v757
      %1320 = vmatmul.mubr.bf16.gmra.mrb[0].mxu0 %v756
      %v1321 = vpop.f32.mrb[0].mxu0
      %v1322 = vadd.f32 %v1161, %v1321
      %v1323 = vpop.f32.mrb[0].mxu0
      %v1324 = vpop.f32.mrb[0].mxu0
      %v1325 = vadd.f32 %v1164, %v1324
      %v1326 = vpop.f32.mrb[0].mxu0
      %1327 = vmatprep.mubr.bf16.mxu0 %v761
      %1328 = vmatmul.mubr.bf16.gmra.mrb[0].mxu0 %v760
      %v1329 = vpop.f32.mrb[0].mxu0
      %v1330 = vadd.f32 %v1169, %v1329
      %v1331 = vpop.f32.mrb[0].mxu0
      %v1332 = vpop.f32.mrb[0].mxu0
      %v1333 = vadd.f32 %v1172, %v1332
      %v1334 = vpop.f32.mrb[0].mxu0
      %1335 = vmatprep.mubr.bf16.mxu0 %v765
      %1336 = vmatmul.mubr.bf16.gmra.mrb[0].mxu0 %v764
      %v1337 = vpop.f32.mrb[0].mxu0
      %v1338 = vadd.f32 %v1177, %v1337
      %v1339 = vpop.f32.mrb[0].mxu0
      %v1340 = vpop.f32.mrb[0].mxu0
      %v1341 = vadd.f32 %v1180, %v1340
      %v1342 = vpop.f32.mrb[0].mxu0
      %1343 = vdwg.mxu0
      %v1344 = vadd.f32 %v346, %v1218
      %v1345 = vadd.f32 %v347, %v1221
      %v1346 = vadd.f32 %v348, %v1226
      %v1347 = vadd.f32 %v349, %v1229
      %v1348 = vadd.f32 %v350, %v1234
      %v1349 = vadd.f32 %v351, %v1237
      %v1350 = vadd.f32 %v352, %v1242
      %v1351 = vadd.f32 %v353, %v1245
      %v1352 = vadd.f32 %v354, %v1250
      %v1353 = vadd.f32 %v355, %v1253
      %v1354 = vadd.f32 %v356, %v1258
      %v1355 = vadd.f32 %v357, %v1261
      %v1356 = vadd.f32 %v358, %v1266
      %v1357 = vadd.f32 %v359, %v1269
      %v1358 = vadd.f32 %v360, %v1274
      %v1359 = vadd.f32 %v361, %v1277
      %v1360 = vadd.f32 %v362, %v1282
      %v1361 = vadd.f32 %v363, %v1285
      %v1362 = vadd.f32 %v364, %v1290
      %v1363 = vadd.f32 %v365, %v1293
      %v1364 = vadd.f32 %v366, %v1298
      %v1365 = vadd.f32 %v367, %v1301
      %v1366 = vadd.f32 %v368, %v1306
      %v1367 = vadd.f32 %v369, %v1309
      %v1368 = vadd.f32 %v370, %v1314
      %v1369 = vadd.f32 %v371, %v1317
      %v1370 = vadd.f32 %v372, %v1322
      %v1371 = vadd.f32 %v373, %v1325
      %v1372 = vadd.f32 %v374, %v1330
      %v1373 = vadd.f32 %v375, %v1333
      %v1374 = vadd.f32 %v376, %v1338
      %v1375 = vadd.f32 %v377, %v1341
      %1376 = vst [vmem:[#allocation2] sm:$0xff] %v1344
      %1377 = vst [vmem:[#allocation2 + $0x8] sm:$0xff] %v1345
      %1378 = vst [vmem:[#allocation2 + $0x10] sm:$0xff] %v1346
      %1379 = vst [vmem:[#allocation2 + $0x18] sm:$0xff] %v1347
      %1380 = vst [vmem:[#allocation2 + $0x20] sm:$0xff] %v1348
      %1381 = vst [vmem:[#allocation2 + $0x28] sm:$0xff] %v1349
      %1382 = vst [vmem:[#allocation2 + $0x30] sm:$0xff] %v1350
      %1383 = vst [vmem:[#allocation2 + $0x38] sm:$0xff] %v1351
      %1384 = vst [vmem:[#allocation2 + $0x40] sm:$0xff] %v1352
      %1385 = vst [vmem:[#allocation2 + $0x48] sm:$0xff] %v1353
      %1386 = vst [vmem:[#allocation2 + $0x50] sm:$0xff] %v1354
      %1387 = vst [vmem:[#allocation2 + $0x58] sm:$0xff] %v1355
      %1388 = vst [vmem:[#allocation2 + $0x60] sm:$0xff] %v1356
      %1389 = vst [vmem:[#allocation2 + $0x68] sm:$0xff] %v1357
      %1390 = vst [vmem:[#allocation2 + $0x70] sm:$0xff] %v1358
      %1391 = vst [vmem:[#allocation2 + $0x78] sm:$0xff] %v1359
      %1392 = vst [vmem:[#allocation2 + $0x80] sm:$0xff] %v1360
      %1393 = vst [vmem:[#allocation2 + $0x88] sm:$0xff] %v1361
      %1394 = vst [vmem:[#allocation2 + $0x90] sm:$0xff] %v1362
      %1395 = vst [vmem:[#allocation2 + $0x98] sm:$0xff] %v1363
      %1396 = vst [vmem:[#allocation2 + $0xa0] sm:$0xff] %v1364
      %1397 = vst [vmem:[#allocation2 + $0xa8] sm:$0xff] %v1365
      %1398 = vst [vmem:[#allocation2 + $0xb0] sm:$0xff] %v1366
      %1399 = vst [vmem:[#allocation2 + $0xb8] sm:$0xff] %v1367
      %1400 = vst [vmem:[#allocation2 + $0xc0] sm:$0xff] %v1368
      %1401 = vst [vmem:[#allocation2 + $0xc8] sm:$0xff] %v1369
      %1402 = vst [vmem:[#allocation2 + $0xd0] sm:$0xff] %v1370
      %1403 = vst [vmem:[#allocation2 + $0xd8] sm:$0xff] %v1371
      %1404 = vst [vmem:[#allocation2 + $0xe0] sm:$0xff] %v1372
      %1405 = vst [vmem:[#allocation2 + $0xe8] sm:$0xff] %v1373
      %1406 = vst [vmem:[#allocation2 + $0xf0] sm:$0xff] %v1374
      %1407 = vst [vmem:[#allocation2 + $0xf8] sm:$0xff] %v1375
      // Predicated region
      $region49: #{elliptic_gnn_forward.5} parent=43 // pred_check
        %p1408 = pneg %p309
      $region50: #{elliptic_gnn_forward.5} parent=43 // pred_check_branch
        %1410 = sbr.rel (%p1408) target = $region52
      $region51: #{elliptic_gnn_forward.5} parent=43 // pred_region
        %v1411 = vld [vmem:[%s300] sm:$0xff]
        %v1412 = vld [vmem:[%s300 + $0x8] sm:$0xff]
        %v1413 = vld [vmem:[%s300 + $0x10] sm:$0xff]
        %v1414 = vld [vmem:[%s300 + $0x18] sm:$0xff]
        %v1415 = vld [vmem:[%s300 + $0x20] sm:$0xff]
        %v1416 = vld [vmem:[%s300 + $0x28] sm:$0xff]
        %v1417 = vld [vmem:[%s300 + $0x30] sm:$0xff]
        %v1418 = vld [vmem:[%s300 + $0x38] sm:$0xff]
        %v1419 = vld [vmem:[%s300 + $0x40] sm:$0xff]
        %v1420 = vld [vmem:[%s300 + $0x48] sm:$0xff]
        %v1421 = vld [vmem:[%s300 + $0x50] sm:$0xff]
        %v1422 = vld [vmem:[%s300 + $0x58] sm:$0xff]
        %v1423 = vld [vmem:[%s300 + $0x60] sm:$0xff]
        %v1424 = vld [vmem:[%s300 + $0x68] sm:$0xff]
        %v1425 = vld [vmem:[%s300 + $0x70] sm:$0xff]
        %v1426 = vld [vmem:[%s300 + $0x78] sm:$0xff]
        %v1427 = vld [vmem:[%s300 + $0x80] sm:$0xff]
        %v1428 = vld [vmem:[%s300 + $0x88] sm:$0xff]
        %v1429 = vld [vmem:[%s300 + $0x90] sm:$0xff]
        %v1430 = vld [vmem:[%s300 + $0x98] sm:$0xff]
        %v1431 = vld [vmem:[%s300 + $0xa0] sm:$0xff]
        %v1432 = vld [vmem:[%s300 + $0xa8] sm:$0xff]
        %v1433 = vld [vmem:[%s300 + $0xb0] sm:$0xff]
        %v1434 = vld [vmem:[%s300 + $0xb8] sm:$0xff]
        %v1435 = vld [vmem:[%s300 + $0xc0] sm:$0xff]
        %v1436 = vld [vmem:[%s300 + $0xc8] sm:$0xff]
        %v1437 = vld [vmem:[%s300 + $0xd0] sm:$0xff]
        %v1438 = vld [vmem:[%s300 + $0xd8] sm:$0xff]
        %v1439 = vld [vmem:[%s300 + $0xe0] sm:$0xff]
        %v1440 = vld [vmem:[%s300 + $0xe8] sm:$0xff]
        %v1441 = vld [vmem:[%s300 + $0xf0] sm:$0xff]
        %v1442 = vld [vmem:[%s300 + $0xf8] sm:$0xff]
        %v1443 = vld [vmem:[#allocation2] sm:$0xff]
        %v1444 = vld [vmem:[#allocation2 + $0x8] sm:$0xff]
        %v1445 = vld [vmem:[#allocation2 + $0x10] sm:$0xff]
        %v1446 = vld [vmem:[#allocation2 + $0x18] sm:$0xff]
        %v1447 = vld [vmem:[#allocation2 + $0x20] sm:$0xff]
        %v1448 = vld [vmem:[#allocation2 + $0x28] sm:$0xff]
        %v1449 = vld [vmem:[#allocation2 + $0x30] sm:$0xff]
        %v1450 = vld [vmem:[#allocation2 + $0x38] sm:$0xff]
        %v1451 = vld [vmem:[#allocation2 + $0x40] sm:$0xff]
        %v1452 = vld [vmem:[#allocation2 + $0x48] sm:$0xff]
        %v1453 = vld [vmem:[#allocation2 + $0x50] sm:$0xff]
        %v1454 = vld [vmem:[#allocation2 + $0x58] sm:$0xff]
        %v1455 = vld [vmem:[#allocation2 + $0x60] sm:$0xff]
        %v1456 = vld [vmem:[#allocation2 + $0x68] sm:$0xff]
        %v1457 = vld [vmem:[#allocation2 + $0x70] sm:$0xff]
        %v1458 = vld [vmem:[#allocation2 + $0x78] sm:$0xff]
        %v1459 = vld [vmem:[#allocation2 + $0x80] sm:$0xff]
        %v1460 = vld [vmem:[#allocation2 + $0x88] sm:$0xff]
        %v1461 = vld [vmem:[#allocation2 + $0x90] sm:$0xff]
        %v1462 = vld [vmem:[#allocation2 + $0x98] sm:$0xff]
        %v1463 = vld [vmem:[#allocation2 + $0xa0] sm:$0xff]
        %v1464 = vld [vmem:[#allocation2 + $0xa8] sm:$0xff]
        %v1465 = vld [vmem:[#allocation2 + $0xb0] sm:$0xff]
        %v1466 = vld [vmem:[#allocation2 + $0xb8] sm:$0xff]
        %v1467 = vld [vmem:[#allocation2 + $0xc0] sm:$0xff]
        %v1468 = vld [vmem:[#allocation2 + $0xc8] sm:$0xff]
        %v1469 = vld [vmem:[#allocation2 + $0xd0] sm:$0xff]
        %v1470 = vld [vmem:[#allocation2 + $0xd8] sm:$0xff]
        %v1471 = vld [vmem:[#allocation2 + $0xe0] sm:$0xff]
        %v1472 = vld [vmem:[#allocation2 + $0xe8] sm:$0xff]
        %v1473 = vld [vmem:[#allocation2 + $0xf0] sm:$0xff]
        %v1474 = vld [vmem:[#allocation2 + $0xf8] sm:$0xff]
        %1476 = vset.pattern.permute.xlu0 0
        %1477 = vperm.xlu0 %1476, %v1411
        %v1478 = vpop.permute.xlu0 %1477
        %1481 = vset.pattern.permute.xlu0 0
        %1482 = vperm.xlu0 %1481, %v1412
        %v1483 = vpop.permute.xlu0 %1482
        %1486 = vset.pattern.permute.xlu0 0
        %1487 = vperm.xlu0 %1486, %v1413
        %v1488 = vpop.permute.xlu0 %1487
        %1491 = vset.pattern.permute.xlu0 0
        %1492 = vperm.xlu0 %1491, %v1414
        %v1493 = vpop.permute.xlu0 %1492
        %1496 = vset.pattern.permute.xlu0 0
        %1497 = vperm.xlu0 %1496, %v1415
        %v1498 = vpop.permute.xlu0 %1497
        %1501 = vset.pattern.permute.xlu0 0
        %1502 = vperm.xlu0 %1501, %v1416
        %v1503 = vpop.permute.xlu0 %1502
        %1506 = vset.pattern.permute.xlu0 0
        %1507 = vperm.xlu0 %1506, %v1417
        %v1508 = vpop.permute.xlu0 %1507
        %1511 = vset.pattern.permute.xlu0 0
        %1512 = vperm.xlu0 %1511, %v1418
        %v1513 = vpop.permute.xlu0 %1512
        %1516 = vset.pattern.permute.xlu0 0
        %1517 = vperm.xlu0 %1516, %v1419
        %v1518 = vpop.permute.xlu0 %1517
        %1521 = vset.pattern.permute.xlu0 0
        %1522 = vperm.xlu0 %1521, %v1420
        %v1523 = vpop.permute.xlu0 %1522
        %1526 = vset.pattern.permute.xlu0 0
        %1527 = vperm.xlu0 %1526, %v1421
        %v1528 = vpop.permute.xlu0 %1527
        %1531 = vset.pattern.permute.xlu0 0
        %1532 = vperm.xlu0 %1531, %v1422
        %v1533 = vpop.permute.xlu0 %1532
        %1536 = vset.pattern.permute.xlu0 0
        %1537 = vperm.xlu0 %1536, %v1423
        %v1538 = vpop.permute.xlu0 %1537
        %1541 = vset.pattern.permute.xlu0 0
        %1542 = vperm.xlu0 %1541, %v1424
        %v1543 = vpop.permute.xlu0 %1542
        %1546 = vset.pattern.permute.xlu0 0
        %1547 = vperm.xlu0 %1546, %v1425
        %v1548 = vpop.permute.xlu0 %1547
        %1551 = vset.pattern.permute.xlu0 0
        %1552 = vperm.xlu0 %1551, %v1426
        %v1553 = vpop.permute.xlu0 %1552
        %1556 = vset.pattern.permute.xlu0 0
        %1557 = vperm.xlu0 %1556, %v1427
        %v1558 = vpop.permute.xlu0 %1557
        %1561 = vset.pattern.permute.xlu0 0
        %1562 = vperm.xlu0 %1561, %v1428
        %v1563 = vpop.permute.xlu0 %1562
        %1566 = vset.pattern.permute.xlu0 0
        %1567 = vperm.xlu0 %1566, %v1429
        %v1568 = vpop.permute.xlu0 %1567
        %1571 = vset.pattern.permute.xlu0 0
        %1572 = vperm.xlu0 %1571, %v1430
        %v1573 = vpop.permute.xlu0 %1572
        %1576 = vset.pattern.permute.xlu0 0
        %1577 = vperm.xlu0 %1576, %v1431
        %v1578 = vpop.permute.xlu0 %1577
        %1581 = vset.pattern.permute.xlu0 0
        %1582 = vperm.xlu0 %1581, %v1432
        %v1583 = vpop.permute.xlu0 %1582
        %1586 = vset.pattern.permute.xlu0 0
        %1587 = vperm.xlu0 %1586, %v1433
        %v1588 = vpop.permute.xlu0 %1587
        %1591 = vset.pattern.permute.xlu0 0
        %1592 = vperm.xlu0 %1591, %v1434
        %v1593 = vpop.permute.xlu0 %1592
        %1596 = vset.pattern.permute.xlu0 0
        %1597 = vperm.xlu0 %1596, %v1435
        %v1598 = vpop.permute.xlu0 %1597
        %1601 = vset.pattern.permute.xlu0 0
        %1602 = vperm.xlu0 %1601, %v1436
        %v1603 = vpop.permute.xlu0 %1602
        %1606 = vset.pattern.permute.xlu0 0
        %1607 = vperm.xlu0 %1606, %v1437
        %v1608 = vpop.permute.xlu0 %1607
        %1611 = vset.pattern.permute.xlu0 0
        %1612 = vperm.xlu0 %1611, %v1438
        %v1613 = vpop.permute.xlu0 %1612
        %1616 = vset.pattern.permute.xlu0 0
        %1617 = vperm.xlu0 %1616, %v1439
        %v1618 = vpop.permute.xlu0 %1617
        %1621 = vset.pattern.permute.xlu0 0
        %1622 = vperm.xlu0 %1621, %v1440
        %v1623 = vpop.permute.xlu0 %1622
        %1626 = vset.pattern.permute.xlu0 0
        %1627 = vperm.xlu0 %1626, %v1441
        %v1628 = vpop.permute.xlu0 %1627
        %1631 = vset.pattern.permute.xlu0 0
        %1632 = vperm.xlu0 %1631, %v1442
        %v1633 = vpop.permute.xlu0 %1632
        %v1635 = vmul.f32 %v1478, %v1443
        %v1636 = vmul.f32 %v1483, %v1444
        %v1637 = vmul.f32 %v1488, %v1445
        %v1638 = vmul.f32 %v1493, %v1446
        %v1639 = vmul.f32 %v1498, %v1447
        %v1640 = vmul.f32 %v1503, %v1448
        %v1641 = vmul.f32 %v1508, %v1449
        %v1642 = vmul.f32 %v1513, %v1450
        %v1643 = vmul.f32 %v1518, %v1451
        %v1644 = vmul.f32 %v1523, %v1452
        %v1645 = vmul.f32 %v1528, %v1453
        %v1646 = vmul.f32 %v1533, %v1454
        %v1647 = vmul.f32 %v1538, %v1455
        %v1648 = vmul.f32 %v1543, %v1456
        %v1649 = vmul.f32 %v1548, %v1457
        %v1650 = vmul.f32 %v1553, %v1458
        %v1651 = vmul.f32 %v1558, %v1459
        %v1652 = vmul.f32 %v1563, %v1460
        %v1653 = vmul.f32 %v1568, %v1461
        %v1654 = vmul.f32 %v1573, %v1462
        %v1655 = vmul.f32 %v1578, %v1463
        %v1656 = vmul.f32 %v1583, %v1464
        %v1657 = vmul.f32 %v1588, %v1465
        %v1658 = vmul.f32 %v1593, %v1466
        %v1659 = vmul.f32 %v1598, %v1467
        %v1660 = vmul.f32 %v1603, %v1468
        %v1661 = vmul.f32 %v1608, %v1469
        %v1662 = vmul.f32 %v1613, %v1470
        %v1663 = vmul.f32 %v1618, %v1471
        %v1664 = vmul.f32 %v1623, %v1472
        %v1665 = vmul.f32 %v1628, %v1473
        %v1666 = vmul.f32 %v1633, %v1474
        %v1667 = vld [vmem:[%s3] sm:$0x1]
        %v1669 = vlaneseq
        %v1670 = vshrl.u32 %v1669, 7
        %v1671 = vsub.s32 0, %v1670
        %v1672 = vrot.slane %v1667, %v1671
        %v1674 = vadd.f32 %v1635, %v1672
        %v1675 = vadd.f32 %v1636, %v1672
        %v1676 = vadd.f32 %v1637, %v1672
        %v1677 = vadd.f32 %v1638, %v1672
        %v1678 = vadd.f32 %v1639, %v1672
        %v1679 = vadd.f32 %v1640, %v1672
        %v1680 = vadd.f32 %v1641, %v1672
        %v1681 = vadd.f32 %v1642, %v1672
        %v1682 = vadd.f32 %v1643, %v1672
        %v1683 = vadd.f32 %v1644, %v1672
        %v1684 = vadd.f32 %v1645, %v1672
        %v1685 = vadd.f32 %v1646, %v1672
        %v1686 = vadd.f32 %v1647, %v1672
        %v1687 = vadd.f32 %v1648, %v1672
        %v1688 = vadd.f32 %v1649, %v1672
        %v1689 = vadd.f32 %v1650, %v1672
        %v1690 = vadd.f32 %v1651, %v1672
        %v1691 = vadd.f32 %v1652, %v1672
        %v1692 = vadd.f32 %v1653, %v1672
        %v1693 = vadd.f32 %v1654, %v1672
        %v1694 = vadd.f32 %v1655, %v1672
        %v1695 = vadd.f32 %v1656, %v1672
        %v1696 = vadd.f32 %v1657, %v1672
        %v1697 = vadd.f32 %v1658, %v1672
        %v1698 = vadd.f32 %v1659, %v1672
        %v1699 = vadd.f32 %v1660, %v1672
        %v1700 = vadd.f32 %v1661, %v1672
        %v1701 = vadd.f32 %v1662, %v1672
        %v1702 = vadd.f32 %v1663, %v1672
        %v1703 = vadd.f32 %v1664, %v1672
        %v1704 = vadd.f32 %v1665, %v1672
        %v1705 = vadd.f32 %v1666, %v1672
        %v1706 = vmax.f32 %v1674, 0.0
        %v1707 = vmax.f32 %v1675, 0.0
        %v1708 = vmax.f32 %v1676, 0.0
        %v1709 = vmax.f32 %v1677, 0.0
        %v1710 = vmax.f32 %v1678, 0.0
        %v1711 = vmax.f32 %v1679, 0.0
        %v1712 = vmax.f32 %v1680, 0.0
        %v1713 = vmax.f32 %v1681, 0.0
        %v1714 = vmax.f32 %v1682, 0.0
        %v1715 = vmax.f32 %v1683, 0.0
        %v1716 = vmax.f32 %v1684, 0.0
        %v1717 = vmax.f32 %v1685, 0.0
        %v1718 = vmax.f32 %v1686, 0.0
        %v1719 = vmax.f32 %v1687, 0.0
        %v1720 = vmax.f32 %v1688, 0.0
        %v1721 = vmax.f32 %v1689, 0.0
        %v1722 = vmax.f32 %v1690, 0.0
        %v1723 = vmax.f32 %v1691, 0.0
        %v1724 = vmax.f32 %v1692, 0.0
        %v1725 = vmax.f32 %v1693, 0.0
        %v1726 = vmax.f32 %v1694, 0.0
        %v1727 = vmax.f32 %v1695, 0.0
        %v1728 = vmax.f32 %v1696, 0.0
        %v1729 = vmax.f32 %v1697, 0.0
        %v1730 = vmax.f32 %v1698, 0.0
        %v1731 = vmax.f32 %v1699, 0.0
        %v1732 = vmax.f32 %v1700, 0.0
        %v1733 = vmax.f32 %v1701, 0.0
        %v1734 = vmax.f32 %v1702, 0.0
        %v1735 = vmax.f32 %v1703, 0.0
        %v1736 = vmax.f32 %v1704, 0.0
        %v1737 = vmax.f32 %v1705, 0.0
        %v1738 = vpack.c.bf16 %v1707, %v1706
        %v1739 = vpack.c.bf16 %v1709, %v1708
        %v1740 = vpack.c.bf16 %v1711, %v1710
        %v1741 = vpack.c.bf16 %v1713, %v1712
        %v1742 = vpack.c.bf16 %v1715, %v1714
        %v1743 = vpack.c.bf16 %v1717, %v1716
        %v1744 = vpack.c.bf16 %v1719, %v1718
        %v1745 = vpack.c.bf16 %v1721, %v1720
        %v1746 = vpack.c.bf16 %v1723, %v1722
        %v1747 = vpack.c.bf16 %v1725, %v1724
        %v1748 = vpack.c.bf16 %v1727, %v1726
        %v1749 = vpack.c.bf16 %v1729, %v1728
        %v1750 = vpack.c.bf16 %v1731, %v1730
        %v1751 = vpack.c.bf16 %v1733, %v1732
        %v1752 = vpack.c.bf16 %v1735, %v1734
        %v1753 = vpack.c.bf16 %v1737, %v1736
        %v1754 = vld [vmem:[%s4] sm:$0xf]
        %v1755 = vld [vmem:[%s4 + $0x4] sm:$0xf]
        %v1756 = vld [vmem:[%s4 + $0x8] sm:$0xf]
        %v1757 = vld [vmem:[%s4 + $0xc] sm:$0xf]
        %v1758 = vld [vmem:[%s4 + $0x10] sm:$0xf]
        %v1759 = vld [vmem:[%s4 + $0x14] sm:$0xf]
        %v1760 = vld [vmem:[%s4 + $0x18] sm:$0xf]
        %v1761 = vld [vmem:[%s4 + $0x1c] sm:$0xf]
        %v1762 = vld [vmem:[%s4 + $0x20] sm:$0xf]
        %v1763 = vld [vmem:[%s4 + $0x24] sm:$0xf]
        %v1764 = vld [vmem:[%s4 + $0x28] sm:$0xf]
        %v1765 = vld [vmem:[%s4 + $0x2c] sm:$0xf]
        %v1766 = vld [vmem:[%s4 + $0x30] sm:$0xf]
        %v1767 = vld [vmem:[%s4 + $0x34] sm:$0xf]
        %v1768 = vld [vmem:[%s4 + $0x38] sm:$0xf]
        %v1769 = vld [vmem:[%s4 + $0x3c] sm:$0xf]
        %v1770 = vld [vmem:[%s5] sm:$0x1]
        %v1772 = vlaneseq
        %v1773 = vshrl.u32 %v1772, 7
        %v1774 = vsub.s32 0, %v1773
        %v1775 = vrot.slane %v1770, %v1774
        %v1793 = vunpack.c.l.b16 %v1754
        %v1794 = vunpack.c.l.b16 %v1755
        %v1795 = vunpack.c.l.b16 %v1756
        %v1796 = vunpack.c.l.b16 %v1757
        %v1797 = vunpack.c.l.b16 %v1758
        %v1798 = vunpack.c.l.b16 %v1759
        %v1799 = vunpack.c.l.b16 %v1760
        %v1800 = vunpack.c.l.b16 %v1761
        %v1801 = vunpack.c.l.b16 %v1762
        %v1802 = vunpack.c.l.b16 %v1763
        %v1803 = vunpack.c.l.b16 %v1764
        %v1804 = vunpack.c.l.b16 %v1765
        %v1805 = vunpack.c.l.b16 %v1766
        %v1806 = vunpack.c.l.b16 %v1767
        %v1807 = vunpack.c.l.b16 %v1768
        %v1808 = vunpack.c.l.b16 %v1769
        %v1809 = vpack.c.b16 %v1794, %v1793
        %v1810 = vpack.c.b16 %v1796, %v1795
        %v1811 = vpack.c.b16 %v1798, %v1797
        %v1812 = vpack.c.b16 %v1800, %v1799
        %v1813 = vpack.c.b16 %v1802, %v1801
        %v1814 = vpack.c.b16 %v1804, %v1803
        %v1815 = vpack.c.b16 %v1806, %v1805
        %v1816 = vpack.c.b16 %v1808, %v1807
        %1825 = vmatprep.subr.bf16.mxu0 0
        %1826 = vmatpush1.bf16.msra.mxu0 %v1809
        %1827 = vmatprep.subr.bf16.mxu0 0
        %1828 = vmatpush1.bf16.msra.mxu0 %v1810
        %1829 = vmatprep.subr.bf16.mxu0 0
        %1830 = vmatpush1.bf16.msra.mxu0 %v1811
        %1831 = vmatprep.subr.bf16.mxu0 0
        %1832 = vmatpush1.bf16.msra.mxu0 %v1812
        %1833 = vmatprep.subr.bf16.mxu0 0
        %1834 = vmatpush1.bf16.msra.mxu0 %v1813
        %1835 = vmatprep.subr.bf16.mxu0 0
        %1836 = vmatpush1.bf16.msra.mxu0 %v1814
        %1837 = vmatprep.subr.bf16.mxu0 0
        %1838 = vmatpush1.bf16.msra.mxu0 %v1815
        %1839 = vmatprep.subr.bf16.mxu0 0
        %1840 = vmatpush1.bf16.msra.mxu0 %v1816
        %1841 = vmatprep.subr.bf16.mxu0 0
        %1842 = vmatpush1.bf16.msra.mxu0 0
        %1843 = vmatprep.subr.bf16.mxu0 0
        %1844 = vmatpush1.bf16.msra.mxu0 0
        %1845 = vmatprep.subr.bf16.mxu0 0
        %1846 = vmatpush1.bf16.msra.mxu0 0
        %1847 = vmatprep.subr.bf16.mxu0 0
        %1848 = vmatpush1.bf16.msra.mxu0 0
        %1849 = vmatprep.subr.bf16.mxu0 0
        %1850 = vmatpush1.bf16.msra.mxu0 0
        %1851 = vmatprep.subr.bf16.mxu0 0
        %1852 = vmatpush1.bf16.msra.mxu0 0
        %1853 = vmatprep.subr.bf16.mxu0 0
        %1854 = vmatpush1.bf16.msra.mxu0 0
        %1855 = vmatprep.subr.bf16.mxu0 0
        %1856 = vmatpush1.bf16.msra.mxu0 0
        %1857 = vmatprep.mubr.bf16.mxu0 0
        %1858 = vmatmul.mubr.bf16.gmra.mrb[0].mxu0 %v1738
        %v1859 = vpop.f32.mrb[0].mxu0
        %v1860 = vadd.f32 %v1775, %v1859
        %v1861 = vpop.f32.mrb[0].mxu0
        %v1862 = vpop.f32.mrb[0].mxu0
        %v1863 = vadd.f32 %v1775, %v1862
        %v1864 = vpop.f32.mrb[0].mxu0
        %1865 = vmatprep.mubr.bf16.mxu0 0
        %1866 = vmatmul.mubr.bf16.gmra.mrb[0].mxu0 %v1739
        %v1867 = vpop.f32.mrb[0].mxu0
        %v1868 = vadd.f32 %v1775, %v1867
        %v1869 = vpop.f32.mrb[0].mxu0
        %v1870 = vpop.f32.mrb[0].mxu0
        %v1871 = vadd.f32 %v1775, %v1870
        %v1872 = vpop.f32.mrb[0].mxu0
        %1873 = vmatprep.mubr.bf16.mxu0 0
        %1874 = vmatmul.mubr.bf16.gmra.mrb[0].mxu0 %v1740
        %v1875 = vpop.f32.mrb[0].mxu0
        %v1876 = vadd.f32 %v1775, %v1875
        %v1877 = vpop.f32.mrb[0].mxu0
        %v1878 = vpop.f32.mrb[0].mxu0
        %v1879 = vadd.f32 %v1775, %v1878
        %v1880 = vpop.f32.mrb[0].mxu0
        %1881 = vmatprep.mubr.bf16.mxu0 0
        %1882 = vmatmul.mubr.bf16.gmra.mrb[0].mxu0 %v1741
        %v1883 = vpop.f32.mrb[0].mxu0
        %v1884 = vadd.f32 %v1775, %v1883
        %v1885 = vpop.f32.mrb[0].mxu0
        %v1886 = vpop.f32.mrb[0].mxu0
        %v1887 = vadd.f32 %v1775, %v1886
        %v1888 = vpop.f32.mrb[0].mxu0
        %1889 = vmatprep.mubr.bf16.mxu0 0
        %1890 = vmatmul.mubr.bf16.gmra.mrb[0].mxu0 %v1742
        %v1891 = vpop.f32.mrb[0].mxu0
        %v1892 = vadd.f32 %v1775, %v1891
        %v1893 = vpop.f32.mrb[0].mxu0
        %v1894 = vpop.f32.mrb[0].mxu0
        %v1895 = vadd.f32 %v1775, %v1894
        %v1896 = vpop.f32.mrb[0].mxu0
        %1897 = vmatprep.mubr.bf16.mxu0 0
        %1898 = vmatmul.mubr.bf16.gmra.mrb[0].mxu0 %v1743
        %v1899 = vpop.f32.mrb[0].mxu0
        %v1900 = vadd.f32 %v1775, %v1899
        %v1901 = vpop.f32.mrb[0].mxu0
        %v1902 = vpop.f32.mrb[0].mxu0
        %v1903 = vadd.f32 %v1775, %v1902
        %v1904 = vpop.f32.mrb[0].mxu0
        %1905 = vmatprep.mubr.bf16.mxu0 0
        %1906 = vmatmul.mubr.bf16.gmra.mrb[0].mxu0 %v1744
        %v1907 = vpop.f32.mrb[0].mxu0
        %v1908 = vadd.f32 %v1775, %v1907
        %v1909 = vpop.f32.mrb[0].mxu0
        %v1910 = vpop.f32.mrb[0].mxu0
        %v1911 = vadd.f32 %v1775, %v1910
        %v1912 = vpop.f32.mrb[0].mxu0
        %1913 = vmatprep.mubr.bf16.mxu0 0
        %1914 = vmatmul.mubr.bf16.gmra.mrb[0].mxu0 %v1745
        %v1915 = vpop.f32.mrb[0].mxu0
        %v1916 = vadd.f32 %v1775, %v1915
        %v1917 = vpop.f32.mrb[0].mxu0
        %v1918 = vpop.f32.mrb[0].mxu0
        %v1919 = vadd.f32 %v1775, %v1918
        %v1920 = vpop.f32.mrb[0].mxu0
        %1921 = vmatprep.mubr.bf16.mxu0 0
        %1922 = vmatmul.mubr.bf16.gmra.mrb[0].mxu0 %v1746
        %v1923 = vpop.f32.mrb[0].mxu0
        %v1924 = vadd.f32 %v1775, %v1923
        %v1925 = vpop.f32.mrb[0].mxu0
        %v1926 = vpop.f32.mrb[0].mxu0
        %v1927 = vadd.f32 %v1775, %v1926
        %v1928 = vpop.f32.mrb[0].mxu0
        %1929 = vmatprep.mubr.bf16.mxu0 0
        %1930 = vmatmul.mubr.bf16.gmra.mrb[0].mxu0 %v1747
        %v1931 = vpop.f32.mrb[0].mxu0
        %v1932 = vadd.f32 %v1775, %v1931
        %v1933 = vpop.f32.mrb[0].mxu0
        %v1934 = vpop.f32.mrb[0].mxu0
        %v1935 = vadd.f32 %v1775, %v1934
        %v1936 = vpop.f32.mrb[0].mxu0
        %1937 = vmatprep.mubr.bf16.mxu0 0
        %1938 = vmatmul.mubr.bf16.gmra.mrb[0].mxu0 %v1748
        %v1939 = vpop.f32.mrb[0].mxu0
        %v1940 = vadd.f32 %v1775, %v1939
        %v1941 = vpop.f32.mrb[0].mxu0
        %v1942 = vpop.f32.mrb[0].mxu0
        %v1943 = vadd.f32 %v1775, %v1942
        %v1944 = vpop.f32.mrb[0].mxu0
        %1945 = vmatprep.mubr.bf16.mxu0 0
        %1946 = vmatmul.mubr.bf16.gmra.mrb[0].mxu0 %v1749
        %v1947 = vpop.f32.mrb[0].mxu0
        %v1948 = vadd.f32 %v1775, %v1947
        %v1949 = vpop.f32.mrb[0].mxu0
        %v1950 = vpop.f32.mrb[0].mxu0
        %v1951 = vadd.f32 %v1775, %v1950
        %v1952 = vpop.f32.mrb[0].mxu0
        %1953 = vmatprep.mubr.bf16.mxu0 0
        %1954 = vmatmul.mubr.bf16.gmra.mrb[0].mxu0 %v1750
        %v1955 = vpop.f32.mrb[0].mxu0
        %v1956 = vadd.f32 %v1775, %v1955
        %v1957 = vpop.f32.mrb[0].mxu0
        %v1958 = vpop.f32.mrb[0].mxu0
        %v1959 = vadd.f32 %v1775, %v1958
        %v1960 = vpop.f32.mrb[0].mxu0
        %1961 = vmatprep.mubr.bf16.mxu0 0
        %1962 = vmatmul.mubr.bf16.gmra.mrb[0].mxu0 %v1751
        %v1963 = vpop.f32.mrb[0].mxu0
        %v1964 = vadd.f32 %v1775, %v1963
        %v1965 = vpop.f32.mrb[0].mxu0
        %v1966 = vpop.f32.mrb[0].mxu0
        %v1967 = vadd.f32 %v1775, %v1966
        %v1968 = vpop.f32.mrb[0].mxu0
        %1969 = vmatprep.mubr.bf16.mxu0 0
        %1970 = vmatmul.mubr.bf16.gmra.mrb[0].mxu0 %v1752
        %v1971 = vpop.f32.mrb[0].mxu0
        %v1972 = vadd.f32 %v1775, %v1971
        %v1973 = vpop.f32.mrb[0].mxu0
        %v1974 = vpop.f32.mrb[0].mxu0
        %v1975 = vadd.f32 %v1775, %v1974
        %v1976 = vpop.f32.mrb[0].mxu0
        %1977 = vmatprep.mubr.bf16.mxu0 0
        %1978 = vmatmul.mubr.bf16.gmra.mrb[0].mxu0 %v1753
        %v1979 = vpop.f32.mrb[0].mxu0
        %v1980 = vadd.f32 %v1775, %v1979
        %v1981 = vpop.f32.mrb[0].mxu0
        %v1982 = vpop.f32.mrb[0].mxu0
        %v1983 = vadd.f32 %v1775, %v1982
        %v1984 = vpop.f32.mrb[0].mxu0
        %1985 = vdwg.mxu0
        %v1986 = vpack.c.bf16 %v1863, %v1860
        %v1987 = vpack.c.bf16 %v1871, %v1868
        %v1988 = vpack.c.bf16 %v1879, %v1876
        %v1989 = vpack.c.bf16 %v1887, %v1884
        %v1990 = vpack.c.bf16 %v1895, %v1892
        %v1991 = vpack.c.bf16 %v1903, %v1900
        %v1992 = vpack.c.bf16 %v1911, %v1908
        %v1993 = vpack.c.bf16 %v1919, %v1916
        %v1994 = vpack.c.bf16 %v1927, %v1924
        %v1995 = vpack.c.bf16 %v1935, %v1932
        %v1996 = vpack.c.bf16 %v1943, %v1940
        %v1997 = vpack.c.bf16 %v1951, %v1948
        %v1998 = vpack.c.bf16 %v1959, %v1956
        %v1999 = vpack.c.bf16 %v1967, %v1964
        %v2000 = vpack.c.bf16 %v1975, %v1972
        %v2001 = vpack.c.bf16 %v1983, %v1980
        %v2018 = vunpack.c.l.b16 %v1986
        %v2019 = vunpack.c.h.b16 %v1986
        %v2020 = vunpack.c.l.b16 %v1987
        %v2021 = vunpack.c.h.b16 %v1987
        %v2022 = vunpack.c.l.b16 %v1988
        %v2023 = vunpack.c.h.b16 %v1988
        %v2024 = vunpack.c.l.b16 %v1989
        %v2025 = vunpack.c.h.b16 %v1989
        %v2026 = vunpack.c.l.b16 %v1990
        %v2027 = vunpack.c.h.b16 %v1990
        %v2028 = vunpack.c.l.b16 %v1991
        %v2029 = vunpack.c.h.b16 %v1991
        %v2030 = vunpack.c.l.b16 %v1992
        %v2031 = vunpack.c.h.b16 %v1992
        %v2032 = vunpack.c.l.b16 %v1993
        %v2033 = vunpack.c.h.b16 %v1993
        %v2034 = vunpack.c.l.b16 %v1994
        %v2035 = vunpack.c.h.b16 %v1994
        %v2036 = vunpack.c.l.b16 %v1995
        %v2037 = vunpack.c.h.b16 %v1995
        %v2038 = vunpack.c.l.b16 %v1996
        %v2039 = vunpack.c.h.b16 %v1996
        %v2040 = vunpack.c.l.b16 %v1997
        %v2041 = vunpack.c.h.b16 %v1997
        %v2042 = vunpack.c.l.b16 %v1998
        %v2043 = vunpack.c.h.b16 %v1998
        %v2044 = vunpack.c.l.b16 %v1999
        %v2045 = vunpack.c.h.b16 %v1999
        %v2046 = vunpack.c.l.b16 %v2000
        %v2047 = vunpack.c.h.b16 %v2000
        %v2048 = vunpack.c.l.b16 %v2001
        %v2049 = vunpack.c.h.b16 %v2001
        %v2050 = vpack.c.b16 %v2018, %v2018
        %v2051 = vpack.c.b16 %v2019, %v2019
        %v2052 = vpack.c.b16 %v2020, %v2020
        %v2053 = vpack.c.b16 %v2021, %v2021
        %v2054 = vpack.c.b16 %v2022, %v2022
        %v2055 = vpack.c.b16 %v2023, %v2023
        %v2056 = vpack.c.b16 %v2024, %v2024
        %v2057 = vpack.c.b16 %v2025, %v2025
        %v2058 = vpack.c.b16 %v2026, %v2026
        %v2059 = vpack.c.b16 %v2027, %v2027
        %v2060 = vpack.c.b16 %v2028, %v2028
        %v2061 = vpack.c.b16 %v2029, %v2029
        %v2062 = vpack.c.b16 %v2030, %v2030
        %v2063 = vpack.c.b16 %v2031, %v2031
        %v2064 = vpack.c.b16 %v2032, %v2032
        %v2065 = vpack.c.b16 %v2033, %v2033
        %v2066 = vpack.c.b16 %v2034, %v2034
        %v2067 = vpack.c.b16 %v2035, %v2035
        %v2068 = vpack.c.b16 %v2036, %v2036
        %v2069 = vpack.c.b16 %v2037, %v2037
        %v2070 = vpack.c.b16 %v2038, %v2038
        %v2071 = vpack.c.b16 %v2039, %v2039
        %v2072 = vpack.c.b16 %v2040, %v2040
        %v2073 = vpack.c.b16 %v2041, %v2041
        %v2074 = vpack.c.b16 %v2042, %v2042
        %v2075 = vpack.c.b16 %v2043, %v2043
        %v2076 = vpack.c.b16 %v2044, %v2044
        %v2077 = vpack.c.b16 %v2045, %v2045
        %v2078 = vpack.c.b16 %v2046, %v2046
        %v2079 = vpack.c.b16 %v2047, %v2047
        %v2080 = vpack.c.b16 %v2048, %v2048
        %v2081 = vpack.c.b16 %v2049, %v2049
        %2114 = vst [vmem:[%s306] sm:$0xf] %v2050
        %2115 = vst [vmem:[%s306 + $0x4] sm:$0xf] %v2051
        %2116 = vst [vmem:[%s306 + $0x8] sm:$0xf] %v2052
        %2117 = vst [vmem:[%s306 + $0xc] sm:$0xf] %v2053
        %2118 = vst [vmem:[%s306 + $0x10] sm:$0xf] %v2054
        %2119 = vst [vmem:[%s306 + $0x14] sm:$0xf] %v2055
        %2120 = vst [vmem:[%s306 + $0x18] sm:$0xf] %v2056
        %2121 = vst [vmem:[%s306 + $0x1c] sm:$0xf] %v2057
        %2122 = vst [vmem:[%s306 + $0x20] sm:$0xf] %v2058
        %2123 = vst [vmem:[%s306 + $0x24] sm:$0xf] %v2059
        %2124 = vst [vmem:[%s306 + $0x28] sm:$0xf] %v2060
        %2125 = vst [vmem:[%s306 + $0x2c] sm:$0xf] %v2061
        %2126 = vst [vmem:[%s306 + $0x30] sm:$0xf] %v2062
        %2127 = vst [vmem:[%s306 + $0x34] sm:$0xf] %v2063
        %2128 = vst [vmem:[%s306 + $0x38] sm:$0xf] %v2064
        %2129 = vst [vmem:[%s306 + $0x3c] sm:$0xf] %v2065
        %2130 = vst [vmem:[%s306 + $0x40] sm:$0xf] %v2066
        %2131 = vst [vmem:[%s306 + $0x44] sm:$0xf] %v2067
        %2132 = vst [vmem:[%s306 + $0x48] sm:$0xf] %v2068
        %2133 = vst [vmem:[%s306 + $0x4c] sm:$0xf] %v2069
        %2134 = vst [vmem:[%s306 + $0x50] sm:$0xf] %v2070
        %2135 = vst [vmem:[%s306 + $0x54] sm:$0xf] %v2071
        %2136 = vst [vmem:[%s306 + $0x58] sm:$0xf] %v2072
        %2137 = vst [vmem:[%s306 + $0x5c] sm:$0xf] %v2073
        %2138 = vst [vmem:[%s306 + $0x60] sm:$0xf] %v2074
        %2139 = vst [vmem:[%s306 + $0x64] sm:$0xf] %v2075
        %2140 = vst [vmem:[%s306 + $0x68] sm:$0xf] %v2076
        %2141 = vst [vmem:[%s306 + $0x6c] sm:$0xf] %v2077
        %2142 = vst [vmem:[%s306 + $0x70] sm:$0xf] %v2078
        %2143 = vst [vmem:[%s306 + $0x74] sm:$0xf] %v2079
        %2144 = vst [vmem:[%s306 + $0x78] sm:$0xf] %v2080
        %2145 = vst [vmem:[%s306 + $0x7c] sm:$0xf] %v2081
      $region52: #{elliptic_gnn_forward.5} parent=43 // pred_fallthru
        _
      %s2146 = smul.u32 32, %s21
      %p2147 = scmp.lt.s32.totalorder %s2146, 63
      %s2148 = scalar_select %p2147, %s2146, 63
      %s2149 = smul.addr %s2148, 4
      %s2150 = scalar_lea.vmem %s6, %s2149
      // Predicated region
      $region53: #{elliptic_gnn_forward.5} parent=43 // pred_check
        %p2151 = pneg %p185
      $region54: #{elliptic_gnn_forward.5} parent=43 // pred_check_branch
        %2153 = sbr.rel (%p2151) target = $region56
      $region55: #{elliptic_gnn_forward.5} parent=43 // pred_region
        %s2154 = smul.u32 32, %s21
      $region56: #{elliptic_gnn_forward.5} parent=43 // pred_fallthru
        _
    $region44: #{elliptic_gnn_forward.5} parent=5 // pred_fallthru
      _
    %p2155 = scmp.le.s32.totalorder 2, %s12
    // Predicated region
    $region57: #{elliptic_gnn_forward.5} parent=5 // pred_check
      %p2156 = pneg %p2155
    $region58: #{elliptic_gnn_forward.5} parent=5 // pred_check_branch
      %2158 = sbr.rel (%p2156) target = $region60
    $region59: #{elliptic_gnn_forward.5} parent=5 // pred_region
      %s2159 = ssub.s32 %s12, 2
      // Predicated region
      $region61: #{elliptic_gnn_forward.5} parent=59 // pred_check
        %p2160 = pneg %p191
      $region62: #{elliptic_gnn_forward.5} parent=59 // pred_check_branch
        %2162 = sbr.rel (%p2160) target = $region64
      $region63: #{elliptic_gnn_forward.5} parent=59 // pred_region
        %s2163 = smul.u32 32, %s23
        %p2164 = scmp.lt.s32.totalorder %s2163, 63
        %s2165 = scalar_select %p2164, %s2163, 63
        %s2166 = smul.addr %s2165, 4
        %s2167 = scalar_lea.vmem %s6, %s2166
      $region64: #{elliptic_gnn_forward.5} parent=59 // pred_fallthru
        _
    $region60: #{elliptic_gnn_forward.5} parent=5 // pred_fallthru
      _
  $region6: #{elliptic_gnn_forward.5} parent=0 // loop_footer
    %s16 = sadd.s32 1, %s12
  $region7: #{elliptic_gnn_forward.5} parent=0 // loop_footer_branch
    %11 = sbr.rel target = $region3
  $region8: #{elliptic_gnn_forward.5} parent=0 // loop_exit
    _

</llo_original>
